<compile_context>
chip_gen: v5e
topology: v5e:2x2
jax: 0.10.0
libtpu: 0.0.40
codegen_flags: <defaults>
</compile_context>

<pallas_src>
import jax
import jax.numpy as jnp
from jax.experimental import pallas as pl
from jax.experimental.pallas import tpu as pltpu

EPS = 1e-3


def _fused_add_conv_bn_kernel(a_ref, b_ref, w_ref, gamma_ref, beta_ref, o_ref):
    # a_ref, b_ref : (Cin, M)      f32  -- NCHW inputs viewed as (C, H*W); resident block
    # w_ref        : (BLK_CO, Cin) bf16 -- 1x1-conv weight tile (PyTorch layout, no transpose)
    # gamma_ref    : (BLK_CO, 1)   f32
    # beta_ref     : (BLK_CO, 1)   f32
    # o_ref        : (BLK_CO, M)   f32
    x = a_ref[...] + b_ref[...]                     # elementwise add in f32 (VPU)
    xb = x.astype(jnp.bfloat16)                     # bf16 operands, f32 accumulation (MXU)
    y = jnp.dot(w_ref[...], xb, preferred_element_type=jnp.float32)   # (BLK_CO, M)

    # One-pass batch statistics over the spatial axis (per output channel = per row).
    inv_m = 1.0 / y.shape[1]
    s1 = jnp.sum(y, axis=1, keepdims=True)          # (BLK_CO, 1)
    s2 = jnp.sum(y * y, axis=1, keepdims=True)      # (BLK_CO, 1)
    mean = s1 * inv_m
    var = s2 * inv_m - mean * mean                  # biased variance (PyTorch training BN)
    inv_std = jax.lax.rsqrt(var + EPS)

    # Fold BN affine into per-channel scale/shift -> single FMA pass over y.
    scale = gamma_ref[...] * inv_std
    shift = beta_ref[...] - mean * scale
    o_ref[...] = (y * scale + shift).astype(o_ref.dtype)


def fused_add_conv1x1_bn(x685, x670, w, gamma, beta, *, blk_co=608):
    """x685, x670: NCHW (N, Cin, H, W); w: (Cout, Cin) [or (Cout, Cin, 1, 1)];
    gamma/beta: (Cout,)."""
    N, Cin, H, W = x685.shape
    Cout = w.shape[0]
    M = N * H * W

    # NCHW -> (Cin, M): free bitcast when N == 1 (the module's shape).
    if N == 1:
        a = x685.reshape(Cin, M)
        b = x670.reshape(Cin, M)
    else:
        a = jnp.transpose(x685, (1, 0, 2, 3)).reshape(Cin, M)
        b = jnp.transpose(x670, (1, 0, 2, 3)).reshape(Cin, M)

    # Weight stays in PyTorch (Cout, Cin) orientation.  bf16 cast is a no-op when the
    # deployed weights are already stored in bf16.
    w2 = w.reshape(Cout, Cin).astype(jnp.bfloat16)
    gamma2 = gamma.reshape(Cout, 1).astype(jnp.float32)
    beta2 = beta.reshape(Cout, 1).astype(jnp.float32)

    # Cout tile: multiple of 16 (bf16 sublane packing) that divides Cout; else no tiling.
    if Cout % blk_co != 0 or blk_co % 16 != 0:
        blk_co = Cout
    grid = (Cout // blk_co,)

    out_flat = pl.pallas_call(
        _fused_add_conv_bn_kernel,
        out_shape=jax.ShapeDtypeStruct((Cout, M), jnp.float32),
        grid=grid,
        in_specs=[
            pl.BlockSpec((Cin, M), lambda i: (0, 0)),        # resident across grid steps
            pl.BlockSpec((Cin, M), lambda i: (0, 0)),        # resident across grid steps
            pl.BlockSpec((blk_co, Cin), lambda i: (i, 0)),   # weight tile (per-step DMA)
            pl.BlockSpec((blk_co, 1), lambda i: (i, 0)),
            pl.BlockSpec((blk_co, 1), lambda i: (i, 0)),
        ],
        out_specs=pl.BlockSpec((blk_co, M), lambda i: (i, 0)),
        compiler_params=pltpu.CompilerParams(
            dimension_semantics=("parallel",),
        ),
    )(a, b, w2, gamma2, beta2)

    # (Cout, M) -> NCHW: free bitcast when N == 1.
    if N == 1:
        return out_flat.reshape(1, Cout, H, W)
    return jnp.transpose(out_flat.reshape(Cout, N, H, W), (1, 0, 2, 3))


def _reference(x685, x670, w, gamma, beta, *, quantize_bf16):
    """Plain-JAX reference (training-mode BatchNorm with batch statistics), N == 1.

    quantize_bf16=True applies the same bf16 operand quantization (f32 accumulation)
    as the kernel, for a tight correctness check of the kernel logic itself.
    """
    N, Cin, H, W = x685.shape
    Cout = w.shape[0]
    x = (x685 + x670).reshape(Cin, N * H * W)
    wq = w.reshape(Cout, Cin)
    xq = x
    if quantize_bf16:
        wq = wq.astype(jnp.bfloat16)
        xq = xq.astype(jnp.bfloat16)
    y = jnp.dot(wq, xq, preferred_element_type=jnp.float32)
    mean = y.mean(axis=1, keepdims=True)
    var = ((y - mean) ** 2).mean(axis=1, keepdims=True)
    yn = (y - mean) / jnp.sqrt(var + EPS) * gamma.reshape(-1, 1) + beta.reshape(-1, 1)
    return yn.reshape(1, Cout, H, W)


if __name__ == "__main__":
    key = jax.random.PRNGKey(0)
    k1, k2, k3, k4, k5 = jax.random.split(key, 5)

    N, Cin, H, W = 1, 304, 7, 7
    Cout = 1824

    x685 = jax.random.normal(k1, (N, Cin, H, W), dtype=jnp.float32)
    x670 = jax.random.normal(k2, (N, Cin, H, W), dtype=jnp.float32)

    # Conv2d(304, 1824, 1x1, bias=False) weight, viewed (Cout, Cin, 1, 1) -> (Cout, Cin)
    w = jax.random.normal(k3, (Cout, Cin), dtype=jnp.float32) * 0.05
    # BatchNorm2d affine parameters
    gamma = 1.0 + 0.1 * jax.random.normal(k4, (Cout,), dtype=jnp.float32)
    beta = 0.1 * jax.random.normal(k5, (Cout,), dtype=jnp.float32)

    fn = jax.jit(fused_add_conv1x1_bn)
    out = jax.block_until_ready(fn(x685, x670, w, gamma, beta))
    assert out.shape == (N, Cout, H, W), out.shape

    # (1) Tight check of kernel logic vs a plain-JAX reference using the same bf16
    #     operand quantization (f32 accumulation).
    ref_q = _reference(x685, x670, w, gamma, beta, quantize_bf16=True)
    err_q = float(jnp.max(jnp.abs(out - ref_q)))
    assert jnp.allclose(out, ref_q, atol=1e-3, rtol=1e-3), err_q

    # (2) Fidelity check vs the full-f32 reference; bf16 matmul operands introduce
    #     ~1e-2 max abs error at these shapes/magnitudes.
    ref_f = _reference(x685, x670, w, gamma, beta, quantize_bf16=False)
    err_f = float(jnp.max(jnp.abs(out - ref_f)))
    assert jnp.allclose(out, ref_f, atol=2.5e-2, rtol=2.5e-2), err_f

    print("KERNEL_OK")
</pallas_src>

<mosaic_0001>
module attributes {stable_mosaic.version = 11 : i64} {
  func.func @_fused_add_conv_bn_kernel(%arg0: i32, %arg1: memref<304x49xf32, #tpu.memory_space<vmem>>, %arg2: memref<304x49xf32, #tpu.memory_space<vmem>>, %arg3: memref<608x304xbf16, #tpu.memory_space<vmem>>, %arg4: memref<608x1xf32, #tpu.memory_space<vmem>>, %arg5: memref<608x1xf32, #tpu.memory_space<vmem>>, %arg6: memref<608x49xf32, #tpu.memory_space<vmem>>) attributes {dimension_semantics = [#tpu.dimension_semantics<parallel>], iteration_bounds = array<i64: 3>, scalar_prefetch = 0 : i64, scratch_operands = 0 : i64, tpu.core_type = #tpu.core_type<tc>, window_params = [{pipeline_mode = #tpu.pipeline_mode<synchronous>, transform_indices = @transform_0, window_bounds = array<i64: 304, 49>}, {pipeline_mode = #tpu.pipeline_mode<synchronous>, transform_indices = @transform_1, window_bounds = array<i64: 304, 49>}, {transform_indices = @transform_2, window_bounds = array<i64: 608, 304>}, {transform_indices = @transform_3, window_bounds = array<i64: 608, 1>}, {transform_indices = @transform_4, window_bounds = array<i64: 608, 1>}, {transform_indices = @transform_5, window_bounds = array<i64: 608, 49>}]} {
    %c0 = arith.constant 0 : index
    %c0_0 = arith.constant 0 : index
    %0 = vector.load %arg1[%c0, %c0_0] : memref<304x49xf32, #tpu.memory_space<vmem>>, vector<304x49xf32>
    %c0_1 = arith.constant 0 : index
    %c0_2 = arith.constant 0 : index
    %1 = vector.load %arg2[%c0_1, %c0_2] : memref<304x49xf32, #tpu.memory_space<vmem>>, vector<304x49xf32>
    %2 = arith.addf %0, %1 : vector<304x49xf32>
    %3 = arith.truncf %2 : vector<304x49xf32> to vector<304x49xbf16>
    %c0_3 = arith.constant 0 : index
    %c0_4 = arith.constant 0 : index
    %4 = vector.load %arg3[%c0_3, %c0_4] : memref<608x304xbf16, #tpu.memory_space<vmem>>, vector<608x304xbf16>
    %cst = arith.constant dense<0.000000e+00> : vector<608x49xf32>
    %5 = tpu.matmul %4, %3, %cst {dimension_numbers = #tpu.dot_dimension_numbers<[1], [0], [0], [1], [0, 0, 1, 1], [], []>} : vector<608x304xbf16>, vector<304x49xbf16>, vector<608x49xf32> -> vector<608x49xf32>
    %cst_5 = arith.constant dense<0.000000e+00> : vector<608xf32>
    %6 = vector.multi_reduction <add>, %5, %cst_5 [1] : vector<608x49xf32> to vector<608xf32>
    %7 = vector.shape_cast %6 : vector<608xf32> to vector<608x1xf32>
    %8 = arith.mulf %5, %5 : vector<608x49xf32>
    %cst_6 = arith.constant dense<0.000000e+00> : vector<608xf32>
    %9 = vector.multi_reduction <add>, %8, %cst_6 [1] : vector<608x49xf32> to vector<608xf32>
    %10 = vector.shape_cast %9 : vector<608xf32> to vector<608x1xf32>
    %cst_7 = arith.constant 0.0204081628 : f32
    %11 = vector.broadcast %cst_7 : f32 to vector<608x1xf32>
    %12 = arith.mulf %7, %11 : vector<608x1xf32>
    %cst_8 = arith.constant 0.0204081628 : f32
    %13 = vector.broadcast %cst_8 : f32 to vector<608x1xf32>
    %14 = arith.mulf %10, %13 : vector<608x1xf32>
    %15 = arith.mulf %12, %12 : vector<608x1xf32>
    %16 = arith.subf %14, %15 : vector<608x1xf32>
    %cst_9 = arith.constant 1.000000e-03 : f32
    %17 = vector.broadcast %cst_9 : f32 to vector<608x1xf32>
    %18 = arith.addf %16, %17 : vector<608x1xf32>
    %19 = math.rsqrt %18 : vector<608x1xf32>
    %c0_10 = arith.constant 0 : index
    %c0_11 = arith.constant 0 : index
    %20 = vector.load %arg4[%c0_10, %c0_11] : memref<608x1xf32, #tpu.memory_space<vmem>>, vector<608x1xf32>
    %21 = arith.mulf %20, %19 : vector<608x1xf32>
    %c0_12 = arith.constant 0 : index
    %c0_13 = arith.constant 0 : index
    %22 = vector.load %arg5[%c0_12, %c0_13] : memref<608x1xf32, #tpu.memory_space<vmem>>, vector<608x1xf32>
    %23 = arith.mulf %12, %21 : vector<608x1xf32>
    %24 = arith.subf %22, %23 : vector<608x1xf32>
    %25 = vector.broadcast %21 : vector<608x1xf32> to vector<608x49xf32>
    %26 = arith.mulf %5, %25 : vector<608x49xf32>
    %27 = vector.broadcast %24 : vector<608x1xf32> to vector<608x49xf32>
    %28 = arith.addf %26, %27 : vector<608x49xf32>
    %c0_14 = arith.constant 0 : index
    %c0_15 = arith.constant 0 : index
    %29 = vector.load %arg6[%c0_14, %c0_15] : memref<608x49xf32, #tpu.memory_space<vmem>>, vector<608x49xf32>
    tpu.vector_store %arg6[%c0_14, %c0_15], %28 {strides = array<i32>} : memref<608x49xf32, #tpu.memory_space<vmem>>, vector<608x49xf32>,
    return
  }
  func.func @transform_0(%arg0: i32) -> (i32, i32) {
    %c0_i32 = arith.constant 0 : i32
    %c0_i32_0 = arith.constant 0 : i32
    %c0_i32_1 = arith.constant 0 : i32
    return %c0_i32, %c0_i32_0 : i32, i32
  }
  func.func @transform_1(%arg0: i32) -> (i32, i32) {
    %c0_i32 = arith.constant 0 : i32
    %c0_i32_0 = arith.constant 0 : i32
    %c0_i32_1 = arith.constant 0 : i32
    return %c0_i32, %c0_i32_0 : i32, i32
  }
  func.func @transform_2(%arg0: i32) -> (i32, i32) {
    %c0_i32 = arith.constant 0 : i32
    %c0_i32_0 = arith.constant 0 : i32
    return %arg0, %c0_i32 : i32, i32
  }
  func.func @transform_3(%arg0: i32) -> (i32, i32) {
    %c0_i32 = arith.constant 0 : i32
    %c0_i32_0 = arith.constant 0 : i32
    return %arg0, %c0_i32 : i32, i32
  }
  func.func @transform_4(%arg0: i32) -> (i32, i32) {
    %c0_i32 = arith.constant 0 : i32
    %c0_i32_0 = arith.constant 0 : i32
    return %arg0, %c0_i32 : i32, i32
  }
  func.func @transform_5(%arg0: i32) -> (i32, i32) {
    %c0_i32 = arith.constant 0 : i32
    %c0_i32_0 = arith.constant 0 : i32
    return %arg0, %c0_i32 : i32, i32
  }
}

</mosaic_0001>

<llo_original>
// kernel: fused_add_conv1x1_bn.1
$region0: #{fused_add_conv1x1_bn.1}
  #allocation0 [shape = 'u32[]', space=smem, size = 0x4, offset = 0x4, fixed_abs, tag = 'smem constant byte address 0x4 - core index']
  #allocation1 [shape = 'u32[72,128]{1,0:T(1,128)}', space=vmem, size = 0x9000, scoped, tag = 'internal scratch']
  %s0 = inlined_call_operand.vmem [shape: f32[304,49], index: 0, kind: input, shape index: {}]
  %s1 = inlined_call_operand.vmem [shape: f32[304,49], index: 1, kind: input, shape index: {}]
  %s2 = inlined_call_operand.vmem [shape: bf16[1824,304], index: 2, kind: input, shape index: {}]
  %s3 = inlined_call_operand.vmem [shape: f32[1824,1], index: 3, kind: input, shape index: {}]
  %s4 = inlined_call_operand.vmem [shape: f32[1824,1], index: 4, kind: input, shape index: {}]
  %s5 = inlined_call_operand.vmem [shape: f32[1824,49], index: 5, kind: output, shape index: {}]
  %s6 = sld [smem:[#allocation0]]
  $region53: #{fused_add_conv1x1_bn.1} parent=0
    _
  %s8 = ssub.s32 1, %s6
  %s9 = scalar_select 0, %s8, %s6
  loop: start=0, step=1, limit=5
  $region2: #{fused_add_conv1x1_bn.1} parent=0 // loop_pre_header
    _
  $region3: #{fused_add_conv1x1_bn.1} parent=0 // loop_header
    %s11 = sphi 0, %s15
    %p12 = scmp.ge.s32.totalorder %s11, 5
    %s19 = sphi 0, %s19
    %s21 = sphi 0, %s19
    %s22 = sphi 0, %s21
    %s36 = sphi 0, %s22
    %s40 = sphi 0, %s40
    %s42 = sphi 0, %s40
    %s43 = sphi 0, %s42
    %s57 = sphi 0, %s43
    %s63 = sphi 0, %s65
    %s66 = sphi 0, %s63
    %s67 = sphi 0, %s66
    %s83 = sphi 0, %s67
    %s89 = sphi 0, %s91
    %s92 = sphi 0, %s89
    %s93 = sphi 0, %s92
    %s109 = sphi 0, %s93
    %s115 = sphi 0, %s117
    %s118 = sphi 0, %s115
    %s119 = sphi 0, %s118
    %s135 = sphi 0, %s119
    %s141 = sphi 0, %s143
    %s144 = sphi 0, %s141
    %s145 = sphi 0, %s144
    %s161 = sphi 0, %s145
  $region4: #{fused_add_conv1x1_bn.1} parent=0 // loop_header_branch
    %14 = sbr.rel (%p12) target = $region8
  $region5: #{fused_add_conv1x1_bn.1} parent=0 // loop_body
    %s16 = ssub.s32 %s11, 1
    %s17 = ssub.s32 %s11, 2
    %s18 = sadd.s32 %s11, 1
    %s20 = sadd.s32 %s19, 1
    %p23 = scmp.eq.s32.totalorder %s11, 2
    %p24 = scmp.ne.s32.totalorder %s19, %s21
    %p25 = scmp.eq.s32.totalorder %s11, 0
    %p26 = por %p24, %p25
    %p27 = scmp.ne.s32.totalorder %s19, %s21
    %p28 = scmp.eq.s32.totalorder %s16, 2
    %p29 = por %p27, %p28
    %p30 = scmp.ne.s32.totalorder %s21, %s22
    %p31 = scmp.eq.s32.totalorder %s16, 0
    %p32 = por %p30, %p31
    %p33 = scmp.ne.s32.totalorder %s21, %s22
    %p34 = scmp.eq.s32.totalorder %s17, 2
    %p35 = por %p33, %p34
    %p37 = scmp.ne.s32.totalorder %s22, %s36
    %p38 = scmp.eq.s32.totalorder %s17, 0
    %p39 = por %p37, %p38
    %s41 = sadd.s32 %s40, 1
    %p44 = scmp.eq.s32.totalorder %s11, 2
    %p45 = scmp.ne.s32.totalorder %s40, %s42
    %p46 = scmp.eq.s32.totalorder %s11, 0
    %p47 = por %p45, %p46
    %p48 = scmp.ne.s32.totalorder %s40, %s42
    %p49 = scmp.eq.s32.totalorder %s16, 2
    %p50 = por %p48, %p49
    %p51 = scmp.ne.s32.totalorder %s42, %s43
    %p52 = scmp.eq.s32.totalorder %s16, 0
    %p53 = por %p51, %p52
    %p54 = scmp.ne.s32.totalorder %s42, %s43
    %p55 = scmp.eq.s32.totalorder %s17, 2
    %p56 = por %p54, %p55
    %p58 = scmp.ne.s32.totalorder %s43, %s57
    %p59 = scmp.eq.s32.totalorder %s17, 0
    %p60 = por %p58, %p59
    %s61 = ssub.s32 %s11, %s18
    %p62 = scmp.eq.s32.totalorder %s61, 0
    %s64 = sadd.s32 %s63, 1
    %s65 = scalar_select %p62, %s63, %s64
    %p68 = pneg %p62
    %p69 = scmp.eq.s32.totalorder %s11, 2
    %p70 = por %p68, %p69
    %p71 = scmp.ne.s32.totalorder %s63, %s66
    %p72 = scmp.eq.s32.totalorder %s11, 0
    %p73 = por %p71, %p72
    %p74 = scmp.ne.s32.totalorder %s63, %s66
    %p75 = scmp.eq.s32.totalorder %s16, 2
    %p76 = por %p74, %p75
    %p77 = scmp.ne.s32.totalorder %s66, %s67
    %p78 = scmp.eq.s32.totalorder %s16, 0
    %p79 = por %p77, %p78
    %p80 = scmp.ne.s32.totalorder %s66, %s67
    %p81 = scmp.eq.s32.totalorder %s17, 2
    %p82 = por %p80, %p81
    %p84 = scmp.ne.s32.totalorder %s67, %s83
    %p85 = scmp.eq.s32.totalorder %s17, 0
    %p86 = por %p84, %p85
    %s87 = ssub.s32 %s11, %s18
    %p88 = scmp.eq.s32.totalorder %s87, 0
    %s90 = sadd.s32 %s89, 1
    %s91 = scalar_select %p88, %s89, %s90
    %p94 = pneg %p88
    %p95 = scmp.eq.s32.totalorder %s11, 2
    %p96 = por %p94, %p95
    %p97 = scmp.ne.s32.totalorder %s89, %s92
    %p98 = scmp.eq.s32.totalorder %s11, 0
    %p99 = por %p97, %p98
    %p100 = scmp.ne.s32.totalorder %s89, %s92
    %p101 = scmp.eq.s32.totalorder %s16, 2
    %p102 = por %p100, %p101
    %p103 = scmp.ne.s32.totalorder %s92, %s93
    %p104 = scmp.eq.s32.totalorder %s16, 0
    %p105 = por %p103, %p104
    %p106 = scmp.ne.s32.totalorder %s92, %s93
    %p107 = scmp.eq.s32.totalorder %s17, 2
    %p108 = por %p106, %p107
    %p110 = scmp.ne.s32.totalorder %s93, %s109
    %p111 = scmp.eq.s32.totalorder %s17, 0
    %p112 = por %p110, %p111
    %s113 = ssub.s32 %s11, %s18
    %p114 = scmp.eq.s32.totalorder %s113, 0
    %s116 = sadd.s32 %s115, 1
    %s117 = scalar_select %p114, %s115, %s116
    %p120 = pneg %p114
    %p121 = scmp.eq.s32.totalorder %s11, 2
    %p122 = por %p120, %p121
    %p123 = scmp.ne.s32.totalorder %s115, %s118
    %p124 = scmp.eq.s32.totalorder %s11, 0
    %p125 = por %p123, %p124
    %p126 = scmp.ne.s32.totalorder %s115, %s118
    %p127 = scmp.eq.s32.totalorder %s16, 2
    %p128 = por %p126, %p127
    %p129 = scmp.ne.s32.totalorder %s118, %s119
    %p130 = scmp.eq.s32.totalorder %s16, 0
    %p131 = por %p129, %p130
    %p132 = scmp.ne.s32.totalorder %s118, %s119
    %p133 = scmp.eq.s32.totalorder %s17, 2
    %p134 = por %p132, %p133
    %p136 = scmp.ne.s32.totalorder %s119, %s135
    %p137 = scmp.eq.s32.totalorder %s17, 0
    %p138 = por %p136, %p137
    %s139 = ssub.s32 %s11, %s18
    %p140 = scmp.eq.s32.totalorder %s139, 0
    %s142 = sadd.s32 %s141, 1
    %s143 = scalar_select %p140, %s141, %s142
    %p146 = pneg %p140
    %p147 = scmp.eq.s32.totalorder %s11, 2
    %p148 = por %p146, %p147
    %p149 = scmp.ne.s32.totalorder %s141, %s144
    %p150 = scmp.eq.s32.totalorder %s11, 0
    %p151 = por %p149, %p150
    %p152 = scmp.ne.s32.totalorder %s141, %s144
    %p153 = scmp.eq.s32.totalorder %s16, 2
    %p154 = por %p152, %p153
    %p155 = scmp.ne.s32.totalorder %s144, %s145
    %p156 = scmp.eq.s32.totalorder %s16, 0
    %p157 = por %p155, %p156
    %p158 = scmp.ne.s32.totalorder %s144, %s145
    %p159 = scmp.eq.s32.totalorder %s17, 2
    %p160 = por %p158, %p159
    %p162 = scmp.ne.s32.totalorder %s145, %s161
    %p163 = scmp.eq.s32.totalorder %s17, 0
    %p164 = por %p162, %p163
    %p165 = scmp.le.s32.totalorder 1, %s11
    %p166 = scmp.lt.s32.totalorder %s11, 4
    %p167 = pnand %p165, %p166
    %p168 = pneg %p167
    // Predicated region
    $region9: #{fused_add_conv1x1_bn.1} parent=5 // pred_check
      _
    $region10: #{fused_add_conv1x1_bn.1} parent=5 // pred_check_branch
      %170 = sbr.rel (%p167) target = $region12
    $region11: #{fused_add_conv1x1_bn.1} parent=5 // pred_region
      %s171 = ssub.s32 %s11, 1
      // Predicated region
      $region13: #{fused_add_conv1x1_bn.1} parent=11 // pred_check
        %p172 = pneg %p32
      $region14: #{fused_add_conv1x1_bn.1} parent=11 // pred_check_branch
        %174 = sbr.rel (%p172) target = $region16
      $region15: #{fused_add_conv1x1_bn.1} parent=11 // pred_region
        _
      $region16: #{fused_add_conv1x1_bn.1} parent=11 // pred_fallthru
        _
      // Predicated region
      $region17: #{fused_add_conv1x1_bn.1} parent=11 // pred_check
        %p175 = pneg %p53
      $region18: #{fused_add_conv1x1_bn.1} parent=11 // pred_check_branch
        %177 = sbr.rel (%p175) target = $region20
      $region19: #{fused_add_conv1x1_bn.1} parent=11 // pred_region
        _
      $region20: #{fused_add_conv1x1_bn.1} parent=11 // pred_fallthru
        _
    $region12: #{fused_add_conv1x1_bn.1} parent=5 // pred_fallthru
      _
    %p178 = scmp.lt.s32.totalorder %s11, 3
    // Predicated region
    $region21: #{fused_add_conv1x1_bn.1} parent=5 // pred_check
      %p179 = pneg %p178
    $region22: #{fused_add_conv1x1_bn.1} parent=5 // pred_check_branch
      %181 = sbr.rel (%p179) target = $region24
    $region23: #{fused_add_conv1x1_bn.1} parent=5 // pred_region
      // Predicated region
      $region25: #{fused_add_conv1x1_bn.1} parent=23 // pred_check
        %p182 = pneg %p73
      $region26: #{fused_add_conv1x1_bn.1} parent=23 // pred_check_branch
        %184 = sbr.rel (%p182) target = $region28
      $region27: #{fused_add_conv1x1_bn.1} parent=23 // pred_region
        %s185 = smul.u32 76, %s11
        %p186 = scmp.lt.s32.totalorder %s185, 227
        %s187 = scalar_select %p186, %s185, 227
        %s188 = smul.addr %s187, 3
        %s189 = smul.addr %s188, 4
        %s190 = scalar_lea.vmem %s2, %s189
        %s191 = smul.u32 76, %s11
      $region28: #{fused_add_conv1x1_bn.1} parent=23 // pred_fallthru
        _
      // Predicated region
      $region29: #{fused_add_conv1x1_bn.1} parent=23 // pred_check
        %p192 = pneg %p99
      $region30: #{fused_add_conv1x1_bn.1} parent=23 // pred_check_branch
        %194 = sbr.rel (%p192) target = $region32
      $region31: #{fused_add_conv1x1_bn.1} parent=23 // pred_region
        %s195 = smul.u32 76, %s11
        %p196 = scmp.lt.s32.totalorder %s195, 227
        %s197 = scalar_select %p196, %s195, 227
        %s198 = smul.addr %s197, 8
        %s199 = scalar_lea.vmem %s3, %s198
        %s200 = smul.u32 76, %s11
      $region32: #{fused_add_conv1x1_bn.1} parent=23 // pred_fallthru
        _
      // Predicated region
      $region33: #{fused_add_conv1x1_bn.1} parent=23 // pred_check
        %p201 = pneg %p125
      $region34: #{fused_add_conv1x1_bn.1} parent=23 // pred_check_branch
        %203 = sbr.rel (%p201) target = $region36
      $region35: #{fused_add_conv1x1_bn.1} parent=23 // pred_region
        %s204 = smul.u32 76, %s11
        %p205 = scmp.lt.s32.totalorder %s204, 227
        %s206 = scalar_select %p205, %s204, 227
        %s207 = smul.addr %s206, 8
        %s208 = scalar_lea.vmem %s4, %s207
        %s209 = smul.u32 76, %s11
      $region36: #{fused_add_conv1x1_bn.1} parent=23 // pred_fallthru
        _
    $region24: #{fused_add_conv1x1_bn.1} parent=5 // pred_fallthru
      _
    %p210 = scmp.le.s32.totalorder 1, %s11
    %p211 = scmp.lt.s32.totalorder %s11, 4
    %p212 = pnand %p210, %p211
    %p213 = pneg %p212
    // Predicated region
    $region37: #{fused_add_conv1x1_bn.1} parent=5 // pred_check
      _
    $region38: #{fused_add_conv1x1_bn.1} parent=5 // pred_check_branch
      %215 = sbr.rel (%p212) target = $region40
    $region39: #{fused_add_conv1x1_bn.1} parent=5 // pred_region
      %s216 = ssub.s32 %s11, 1
      %p217 = pneg %p32
      %p218 = pneg %p29
      %p219 = pneg %p53
      %p220 = pneg %p50
      %s221 = smul.u32 76, %s16
      %p222 = scmp.lt.s32.totalorder %s221, 227
      %s223 = scalar_select %p222, %s221, 227
      %s224 = smul.addr %s223, 3
      %s225 = smul.addr %s224, 4
      %s226 = scalar_lea.vmem %s2, %s225
      %p227 = pneg %p79
      %p228 = pneg %p76
      %s229 = smul.u32 76, %s16
      %p230 = scmp.lt.s32.totalorder %s229, 227
      %s231 = scalar_select %p230, %s229, 227
      %s232 = smul.addr %s231, 8
      %s233 = scalar_lea.vmem %s3, %s232
      %p234 = pneg %p105
      %p235 = pneg %p102
      %s236 = smul.u32 76, %s16
      %p237 = scmp.lt.s32.totalorder %s236, 227
      %s238 = scalar_select %p237, %s236, 227
      %s239 = smul.addr %s238, 8
      %s240 = scalar_lea.vmem %s4, %s239
      %p241 = pneg %p131
      %p242 = pneg %p128
      %p243 = pneg %p157
      %p244 = pneg %p154
      %s245 = smul.u32 76, %s16
      %p246 = scmp.lt.s32.totalorder %s245, 227
      %s247 = scalar_select %p246, %s245, 227
      %s248 = smul.addr %s247, 8
      %s249 = scalar_lea.vmem %s5, %s248
      %s250 = smul.u32 76, %s16
      %p251 = scmp.lt.s32.totalorder %s250, 227
      %s252 = scalar_select %p251, %s250, 227
      %s253 = smul.addr %s252, 3
      %s254 = smul.addr %s253, 4
      %s255 = scalar_lea.vmem %s2, %s254
      %s256 = smul.u32 76, %s16
      %s257 = smul.u32 76, %s16
      %p258 = scmp.lt.s32.totalorder %s257, 227
      %s259 = scalar_select %p258, %s257, 227
      %s260 = smul.addr %s259, 8
      %s261 = scalar_lea.vmem %s3, %s260
      %s262 = smul.u32 76, %s16
      %s263 = smul.u32 76, %s16
      %p264 = scmp.lt.s32.totalorder %s263, 227
      %s265 = scalar_select %p264, %s263, 227
      %s266 = smul.addr %s265, 8
      %s267 = scalar_lea.vmem %s4, %s266
      %s268 = smul.u32 76, %s16
      %s269 = smul.u32 76, %s16
      %p270 = scmp.lt.s32.totalorder %s269, 227
      %s271 = scalar_select %p270, %s269, 227
      %s272 = smul.addr %s271, 8
      %s273 = scalar_lea.vmem %s5, %s272
      %s274 = smul.u32 76, %s16
      %v276 = vld [vmem:[%s0] sm:$0xff]
      %v277 = vld [vmem:[%s0 + $0x8] sm:$0xff]
      %v278 = vld [vmem:[%s0 + $0x10] sm:$0xff]
      %v279 = vld [vmem:[%s0 + $0x18] sm:$0xff]
      %v280 = vld [vmem:[%s0 + $0x20] sm:$0xff]
      %v281 = vld [vmem:[%s0 + $0x28] sm:$0xff]
      %v282 = vld [vmem:[%s0 + $0x30] sm:$0xff]
      %v283 = vld [vmem:[%s0 + $0x38] sm:$0xff]
      %v284 = vld [vmem:[%s0 + $0x40] sm:$0xff]
      %v285 = vld [vmem:[%s0 + $0x48] sm:$0xff]
      %v286 = vld [vmem:[%s0 + $0x50] sm:$0xff]
      %v287 = vld [vmem:[%s0 + $0x58] sm:$0xff]
      %v288 = vld [vmem:[%s0 + $0x60] sm:$0xff]
      %v289 = vld [vmem:[%s0 + $0x68] sm:$0xff]
      %v290 = vld [vmem:[%s0 + $0x70] sm:$0xff]
      %v291 = vld [vmem:[%s0 + $0x78] sm:$0xff]
      %v292 = vld [vmem:[%s0 + $0x80] sm:$0xff]
      %v293 = vld [vmem:[%s0 + $0x88] sm:$0xff]
      %v294 = vld [vmem:[%s0 + $0x90] sm:$0xff]
      %v295 = vld [vmem:[%s0 + $0x98] sm:$0xff]
      %v296 = vld [vmem:[%s0 + $0xa0] sm:$0xff]
      %v297 = vld [vmem:[%s0 + $0xa8] sm:$0xff]
      %v298 = vld [vmem:[%s0 + $0xb0] sm:$0xff]
      %v299 = vld [vmem:[%s0 + $0xb8] sm:$0xff]
      %v300 = vld [vmem:[%s0 + $0xc0] sm:$0xff]
      %v301 = vld [vmem:[%s0 + $0xc8] sm:$0xff]
      %v302 = vld [vmem:[%s0 + $0xd0] sm:$0xff]
      %v303 = vld [vmem:[%s0 + $0xd8] sm:$0xff]
      %v304 = vld [vmem:[%s0 + $0xe0] sm:$0xff]
      %v305 = vld [vmem:[%s0 + $0xe8] sm:$0xff]
      %v306 = vld [vmem:[%s0 + $0xf0] sm:$0xff]
      %v307 = vld [vmem:[%s0 + $0xf8] sm:$0xff]
      %v308 = vld [vmem:[%s0 + $0x100] sm:$0xff]
      %v309 = vld [vmem:[%s0 + $0x108] sm:$0xff]
      %v310 = vld [vmem:[%s0 + $0x110] sm:$0xff]
      %v311 = vld [vmem:[%s0 + $0x118] sm:$0xff]
      %v312 = vld [vmem:[%s0 + $0x120] sm:$0xff]
      %v313 = vld [vmem:[%s0 + $0x128] sm:$0xff]
      %v314 = vld [vmem:[%s1] sm:$0xff]
      %v315 = vld [vmem:[%s1 + $0x8] sm:$0xff]
      %v316 = vld [vmem:[%s1 + $0x10] sm:$0xff]
      %v317 = vld [vmem:[%s1 + $0x18] sm:$0xff]
      %v318 = vld [vmem:[%s1 + $0x20] sm:$0xff]
      %v319 = vld [vmem:[%s1 + $0x28] sm:$0xff]
      %v320 = vld [vmem:[%s1 + $0x30] sm:$0xff]
      %v321 = vld [vmem:[%s1 + $0x38] sm:$0xff]
      %v322 = vld [vmem:[%s1 + $0x40] sm:$0xff]
      %v323 = vld [vmem:[%s1 + $0x48] sm:$0xff]
      %v324 = vld [vmem:[%s1 + $0x50] sm:$0xff]
      %v325 = vld [vmem:[%s1 + $0x58] sm:$0xff]
      %v326 = vld [vmem:[%s1 + $0x60] sm:$0xff]
      %v327 = vld [vmem:[%s1 + $0x68] sm:$0xff]
      %v328 = vld [vmem:[%s1 + $0x70] sm:$0xff]
      %v329 = vld [vmem:[%s1 + $0x78] sm:$0xff]
      %v330 = vld [vmem:[%s1 + $0x80] sm:$0xff]
      %v331 = vld [vmem:[%s1 + $0x88] sm:$0xff]
      %v332 = vld [vmem:[%s1 + $0x90] sm:$0xff]
      %v333 = vld [vmem:[%s1 + $0x98] sm:$0xff]
      %v334 = vld [vmem:[%s1 + $0xa0] sm:$0xff]
      %v335 = vld [vmem:[%s1 + $0xa8] sm:$0xff]
      %v336 = vld [vmem:[%s1 + $0xb0] sm:$0xff]
      %v337 = vld [vmem:[%s1 + $0xb8] sm:$0xff]
      %v338 = vld [vmem:[%s1 + $0xc0] sm:$0xff]
      %v339 = vld [vmem:[%s1 + $0xc8] sm:$0xff]
      %v340 = vld [vmem:[%s1 + $0xd0] sm:$0xff]
      %v341 = vld [vmem:[%s1 + $0xd8] sm:$0xff]
      %v342 = vld [vmem:[%s1 + $0xe0] sm:$0xff]
      %v343 = vld [vmem:[%s1 + $0xe8] sm:$0xff]
      %v344 = vld [vmem:[%s1 + $0xf0] sm:$0xff]
      %v345 = vld [vmem:[%s1 + $0xf8] sm:$0xff]
      %v346 = vld [vmem:[%s1 + $0x100] sm:$0xff]
      %v347 = vld [vmem:[%s1 + $0x108] sm:$0xff]
      %v348 = vld [vmem:[%s1 + $0x110] sm:$0xff]
      %v349 = vld [vmem:[%s1 + $0x118] sm:$0xff]
      %v350 = vld [vmem:[%s1 + $0x120] sm:$0xff]
      %v351 = vld [vmem:[%s1 + $0x128] sm:$0xff]
      %v352 = vadd.f32 %v276, %v314
      %v353 = vadd.f32 %v277, %v315
      %v354 = vadd.f32 %v278, %v316
      %v355 = vadd.f32 %v279, %v317
      %v356 = vadd.f32 %v280, %v318
      %v357 = vadd.f32 %v281, %v319
      %v358 = vadd.f32 %v282, %v320
      %v359 = vadd.f32 %v283, %v321
      %v360 = vadd.f32 %v284, %v322
      %v361 = vadd.f32 %v285, %v323
      %v362 = vadd.f32 %v286, %v324
      %v363 = vadd.f32 %v287, %v325
      %v364 = vadd.f32 %v288, %v326
      %v365 = vadd.f32 %v289, %v327
      %v366 = vadd.f32 %v290, %v328
      %v367 = vadd.f32 %v291, %v329
      %v368 = vadd.f32 %v292, %v330
      %v369 = vadd.f32 %v293, %v331
      %v370 = vadd.f32 %v294, %v332
      %v371 = vadd.f32 %v295, %v333
      %v372 = vadd.f32 %v296, %v334
      %v373 = vadd.f32 %v297, %v335
      %v374 = vadd.f32 %v298, %v336
      %v375 = vadd.f32 %v299, %v337
      %v376 = vadd.f32 %v300, %v338
      %v377 = vadd.f32 %v301, %v339
      %v378 = vadd.f32 %v302, %v340
      %v379 = vadd.f32 %v303, %v341
      %v380 = vadd.f32 %v304, %v342
      %v381 = vadd.f32 %v305, %v343
      %v382 = vadd.f32 %v306, %v344
      %v383 = vadd.f32 %v307, %v345
      %v384 = vadd.f32 %v308, %v346
      %v385 = vadd.f32 %v309, %v347
      %v386 = vadd.f32 %v310, %v348
      %v387 = vadd.f32 %v311, %v349
      %v388 = vadd.f32 %v312, %v350
      %v389 = vadd.f32 %v313, %v351
      %v390 = vpack.c.bf16 %v353, %v352
      %v391 = vpack.c.bf16 %v355, %v354
      %v392 = vpack.c.bf16 %v357, %v356
      %v393 = vpack.c.bf16 %v359, %v358
      %v394 = vpack.c.bf16 %v361, %v360
      %v395 = vpack.c.bf16 %v363, %v362
      %v396 = vpack.c.bf16 %v365, %v364
      %v397 = vpack.c.bf16 %v367, %v366
      %v398 = vpack.c.bf16 %v369, %v368
      %v399 = vpack.c.bf16 %v371, %v370
      %v400 = vpack.c.bf16 %v373, %v372
      %v401 = vpack.c.bf16 %v375, %v374
      %v402 = vpack.c.bf16 %v377, %v376
      %v403 = vpack.c.bf16 %v379, %v378
      %v404 = vpack.c.bf16 %v381, %v380
      %v405 = vpack.c.bf16 %v383, %v382
      %v406 = vpack.c.bf16 %v385, %v384
      %v407 = vpack.c.bf16 %v387, %v386
      %v408 = vpack.c.bf16 %v389, %v388
      %v409 = vld [vmem:[%s255] sm:$0xff]
      %v410 = vld [vmem:[%s255 + $0x8] sm:$0xf]
      %v411 = vld [vmem:[%s255 + $0xc] sm:$0xff]
      %v412 = vld [vmem:[%s255 + $0x14] sm:$0xf]
      %v413 = vld [vmem:[%s255 + $0x18] sm:$0xff]
      %v414 = vld [vmem:[%s255 + $0x20] sm:$0xf]
      %v415 = vld [vmem:[%s255 + $0x24] sm:$0xff]
      %v416 = vld [vmem:[%s255 + $0x2c] sm:$0xf]
      %v417 = vld [vmem:[%s255 + $0x30] sm:$0xff]
      %v418 = vld [vmem:[%s255 + $0x38] sm:$0xf]
      %v419 = vld [vmem:[%s255 + $0x3c] sm:$0xff]
      %v420 = vld [vmem:[%s255 + $0x44] sm:$0xf]
      %v421 = vld [vmem:[%s255 + $0x48] sm:$0xff]
      %v422 = vld [vmem:[%s255 + $0x50] sm:$0xf]
      %v423 = vld [vmem:[%s255 + $0x54] sm:$0xff]
      %v424 = vld [vmem:[%s255 + $0x5c] sm:$0xf]
      %v425 = vld [vmem:[%s255 + $0x60] sm:$0xff]
      %v426 = vld [vmem:[%s255 + $0x68] sm:$0xf]
      %v427 = vld [vmem:[%s255 + $0x6c] sm:$0xff]
      %v428 = vld [vmem:[%s255 + $0x74] sm:$0xf]
      %v429 = vld [vmem:[%s255 + $0x78] sm:$0xff]
      %v430 = vld [vmem:[%s255 + $0x80] sm:$0xf]
      %v431 = vld [vmem:[%s255 + $0x84] sm:$0xff]
      %v432 = vld [vmem:[%s255 + $0x8c] sm:$0xf]
      %v433 = vld [vmem:[%s255 + $0x90] sm:$0xff]
      %v434 = vld [vmem:[%s255 + $0x98] sm:$0xf]
      %v435 = vld [vmem:[%s255 + $0x9c] sm:$0xff]
      %v436 = vld [vmem:[%s255 + $0xa4] sm:$0xf]
      %v437 = vld [vmem:[%s255 + $0xa8] sm:$0xff]
      %v438 = vld [vmem:[%s255 + $0xb0] sm:$0xf]
      %v439 = vld [vmem:[%s255 + $0xb4] sm:$0xff]
      %v440 = vld [vmem:[%s255 + $0xbc] sm:$0xf]
      %v441 = vld [vmem:[%s255 + $0xc0] sm:$0xff]
      %v442 = vld [vmem:[%s255 + $0xc8] sm:$0xf]
      %v443 = vld [vmem:[%s255 + $0xcc] sm:$0xff]
      %v444 = vld [vmem:[%s255 + $0xd4] sm:$0xf]
      %v445 = vld [vmem:[%s255 + $0xd8] sm:$0xff]
      %v446 = vld [vmem:[%s255 + $0xe0] sm:$0xf]
      %v447 = vld [vmem:[%s255 + $0xe4] sm:$0xff]
      %v448 = vld [vmem:[%s255 + $0xec] sm:$0xf]
      %v449 = vld [vmem:[%s255 + $0xf0] sm:$0xff]
      %v450 = vld [vmem:[%s255 + $0xf8] sm:$0xf]
      %v451 = vld [vmem:[%s255 + $0xfc] sm:$0xff]
      %v452 = vld [vmem:[%s255 + $0x104] sm:$0xf]
      %v453 = vld [vmem:[%s255 + $0x108] sm:$0xff]
      %v454 = vld [vmem:[%s255 + $0x110] sm:$0xf]
      %v455 = vld [vmem:[%s255 + $0x114] sm:$0xff]
      %v456 = vld [vmem:[%s255 + $0x11c] sm:$0xf]
      %v457 = vld [vmem:[%s255 + $0x120] sm:$0xff]
      %v458 = vld [vmem:[%s255 + $0x128] sm:$0xf]
      %v459 = vld [vmem:[%s255 + $0x12c] sm:$0xff]
      %v460 = vld [vmem:[%s255 + $0x134] sm:$0xf]
      %v461 = vld [vmem:[%s255 + $0x138] sm:$0xff]
      %v462 = vld [vmem:[%s255 + $0x140] sm:$0xf]
      %v463 = vld [vmem:[%s255 + $0x144] sm:$0xff]
      %v464 = vld [vmem:[%s255 + $0x14c] sm:$0xf]
      %v465 = vld [vmem:[%s255 + $0x150] sm:$0xff]
      %v466 = vld [vmem:[%s255 + $0x158] sm:$0xf]
      %v467 = vld [vmem:[%s255 + $0x15c] sm:$0xff]
      %v468 = vld [vmem:[%s255 + $0x164] sm:$0xf]
      %v469 = vld [vmem:[%s255 + $0x168] sm:$0xff]
      %v470 = vld [vmem:[%s255 + $0x170] sm:$0xf]
      %v471 = vld [vmem:[%s255 + $0x174] sm:$0xff]
      %v472 = vld [vmem:[%s255 + $0x17c] sm:$0xf]
      %v473 = vld [vmem:[%s255 + $0x180] sm:$0xff]
      %v474 = vld [vmem:[%s255 + $0x188] sm:$0xf]
      %v475 = vld [vmem:[%s255 + $0x18c] sm:$0xff]
      %v476 = vld [vmem:[%s255 + $0x194] sm:$0xf]
      %v477 = vld [vmem:[%s255 + $0x198] sm:$0xff]
      %v478 = vld [vmem:[%s255 + $0x1a0] sm:$0xf]
      %v479 = vld [vmem:[%s255 + $0x1a4] sm:$0xff]
      %v480 = vld [vmem:[%s255 + $0x1ac] sm:$0xf]
      %v481 = vld [vmem:[%s255 + $0x1b0] sm:$0xff]
      %v482 = vld [vmem:[%s255 + $0x1b8] sm:$0xf]
      %v483 = vld [vmem:[%s255 + $0x1bc] sm:$0xff]
      %v484 = vld [vmem:[%s255 + $0x1c4] sm:$0xf]
      %v485 = vld [vmem:[%s255 + $0x1c8] sm:$0xff]
      %v486 = vld [vmem:[%s255 + $0x1d0] sm:$0xf]
      %v487 = vld [vmem:[%s255 + $0x1d4] sm:$0xff]
      %v488 = vld [vmem:[%s255 + $0x1dc] sm:$0xf]
      %v489 = vld [vmem:[%s255 + $0x1e0] sm:$0xff]
      %v490 = vld [vmem:[%s255 + $0x1e8] sm:$0xf]
      %v491 = vld [vmem:[%s255 + $0x1ec] sm:$0xff]
      %v492 = vld [vmem:[%s255 + $0x1f4] sm:$0xf]
      %v493 = vld [vmem:[%s255 + $0x1f8] sm:$0xff]
      %v494 = vld [vmem:[%s255 + $0x200] sm:$0xf]
      %v495 = vld [vmem:[%s255 + $0x204] sm:$0xff]
      %v496 = vld [vmem:[%s255 + $0x20c] sm:$0xf]
      %v497 = vld [vmem:[%s255 + $0x210] sm:$0xff]
      %v498 = vld [vmem:[%s255 + $0x218] sm:$0xf]
      %v499 = vld [vmem:[%s255 + $0x21c] sm:$0xff]
      %v500 = vld [vmem:[%s255 + $0x224] sm:$0xf]
      %v501 = vld [vmem:[%s255 + $0x228] sm:$0xff]
      %v502 = vld [vmem:[%s255 + $0x230] sm:$0xf]
      %v503 = vld [vmem:[%s255 + $0x234] sm:$0xff]
      %v504 = vld [vmem:[%s255 + $0x23c] sm:$0xf]
      %v505 = vld [vmem:[%s255 + $0x240] sm:$0xff]
      %v506 = vld [vmem:[%s255 + $0x248] sm:$0xf]
      %v507 = vld [vmem:[%s255 + $0x24c] sm:$0xff]
      %v508 = vld [vmem:[%s255 + $0x254] sm:$0xf]
      %v509 = vld [vmem:[%s255 + $0x258] sm:$0xff]
      %v510 = vld [vmem:[%s255 + $0x260] sm:$0xf]
      %v511 = vld [vmem:[%s255 + $0x264] sm:$0xff]
      %v512 = vld [vmem:[%s255 + $0x26c] sm:$0xf]
      %v513 = vld [vmem:[%s255 + $0x270] sm:$0xff]
      %v514 = vld [vmem:[%s255 + $0x278] sm:$0xf]
      %v515 = vld [vmem:[%s255 + $0x27c] sm:$0xff]
      %v516 = vld [vmem:[%s255 + $0x284] sm:$0xf]
      %v517 = vld [vmem:[%s255 + $0x288] sm:$0xff]
      %v518 = vld [vmem:[%s255 + $0x290] sm:$0xf]
      %v519 = vld [vmem:[%s255 + $0x294] sm:$0xff]
      %v520 = vld [vmem:[%s255 + $0x29c] sm:$0xf]
      %v521 = vld [vmem:[%s255 + $0x2a0] sm:$0xff]
      %v522 = vld [vmem:[%s255 + $0x2a8] sm:$0xf]
      %v523 = vld [vmem:[%s255 + $0x2ac] sm:$0xff]
      %v524 = vld [vmem:[%s255 + $0x2b4] sm:$0xf]
      %v525 = vld [vmem:[%s255 + $0x2b8] sm:$0xff]
      %v526 = vld [vmem:[%s255 + $0x2c0] sm:$0xf]
      %v527 = vld [vmem:[%s255 + $0x2c4] sm:$0xff]
      %v528 = vld [vmem:[%s255 + $0x2cc] sm:$0xf]
      %v529 = vld [vmem:[%s255 + $0x2d0] sm:$0xff]
      %v530 = vld [vmem:[%s255 + $0x2d8] sm:$0xf]
      %v531 = vld [vmem:[%s255 + $0x2dc] sm:$0xff]
      %v532 = vld [vmem:[%s255 + $0x2e4] sm:$0xf]
      %v533 = vld [vmem:[%s255 + $0x2e8] sm:$0xff]
      %v534 = vld [vmem:[%s255 + $0x2f0] sm:$0xf]
      %v535 = vld [vmem:[%s255 + $0x2f4] sm:$0xff]
      %v536 = vld [vmem:[%s255 + $0x2fc] sm:$0xf]
      %v537 = vld [vmem:[%s255 + $0x300] sm:$0xff]
      %v538 = vld [vmem:[%s255 + $0x308] sm:$0xf]
      %v539 = vld [vmem:[%s255 + $0x30c] sm:$0xff]
      %v540 = vld [vmem:[%s255 + $0x314] sm:$0xf]
      %v541 = vld [vmem:[%s255 + $0x318] sm:$0xff]
      %v542 = vld [vmem:[%s255 + $0x320] sm:$0xf]
      %v543 = vld [vmem:[%s255 + $0x324] sm:$0xff]
      %v544 = vld [vmem:[%s255 + $0x32c] sm:$0xf]
      %v545 = vld [vmem:[%s255 + $0x330] sm:$0xff]
      %v546 = vld [vmem:[%s255 + $0x338] sm:$0xf]
      %v547 = vld [vmem:[%s255 + $0x33c] sm:$0xff]
      %v548 = vld [vmem:[%s255 + $0x344] sm:$0xf]
      %v549 = vld [vmem:[%s255 + $0x348] sm:$0xff]
      %v550 = vld [vmem:[%s255 + $0x350] sm:$0xf]
      %v551 = vld [vmem:[%s255 + $0x354] sm:$0xff]
      %v552 = vld [vmem:[%s255 + $0x35c] sm:$0xf]
      %v553 = vld [vmem:[%s255 + $0x360] sm:$0xff]
      %v554 = vld [vmem:[%s255 + $0x368] sm:$0xf]
      %v555 = vld [vmem:[%s255 + $0x36c] sm:$0xff]
      %v556 = vld [vmem:[%s255 + $0x374] sm:$0xf]
      %v557 = vld [vmem:[%s255 + $0x378] sm:$0xff]
      %v558 = vld [vmem:[%s255 + $0x380] sm:$0xf]
      %v559 = vld [vmem:[%s255 + $0x384] sm:$0xff]
      %v560 = vld [vmem:[%s255 + $0x38c] sm:$0xf]
      %v713 = vunpack.c.l.b16 %v409
      %v714 = vunpack.c.h.b16 %v409
      %v715 = vunpack.c.l.b16 %v410
      %v716 = vunpack.c.l.b16 %v411
      %v717 = vunpack.c.h.b16 %v411
      %v718 = vunpack.c.l.b16 %v412
      %v719 = vunpack.c.l.b16 %v413
      %v720 = vunpack.c.h.b16 %v413
      %v721 = vunpack.c.l.b16 %v414
      %v722 = vunpack.c.l.b16 %v415
      %v723 = vunpack.c.h.b16 %v415
      %v724 = vunpack.c.l.b16 %v416
      %v725 = vunpack.c.l.b16 %v417
      %v726 = vunpack.c.h.b16 %v417
      %v727 = vunpack.c.l.b16 %v418
      %v728 = vunpack.c.l.b16 %v419
      %v729 = vunpack.c.h.b16 %v419
      %v730 = vunpack.c.l.b16 %v420
      %v731 = vunpack.c.l.b16 %v421
      %v732 = vunpack.c.h.b16 %v421
      %v733 = vunpack.c.l.b16 %v422
      %v734 = vunpack.c.l.b16 %v423
      %v735 = vunpack.c.h.b16 %v423
      %v736 = vunpack.c.l.b16 %v424
      %v737 = vunpack.c.l.b16 %v425
      %v738 = vunpack.c.h.b16 %v425
      %v739 = vunpack.c.l.b16 %v426
      %v740 = vunpack.c.l.b16 %v427
      %v741 = vunpack.c.h.b16 %v427
      %v742 = vunpack.c.l.b16 %v428
      %v743 = vunpack.c.l.b16 %v429
      %v744 = vunpack.c.h.b16 %v429
      %v745 = vunpack.c.l.b16 %v430
      %v746 = vunpack.c.l.b16 %v431
      %v747 = vunpack.c.h.b16 %v431
      %v748 = vunpack.c.l.b16 %v432
      %v749 = vunpack.c.l.b16 %v433
      %v750 = vunpack.c.h.b16 %v433
      %v751 = vunpack.c.l.b16 %v434
      %v752 = vunpack.c.l.b16 %v435
      %v753 = vunpack.c.h.b16 %v435
      %v754 = vunpack.c.l.b16 %v436
      %v755 = vunpack.c.l.b16 %v437
      %v756 = vunpack.c.h.b16 %v437
      %v757 = vunpack.c.l.b16 %v438
      %v758 = vunpack.c.l.b16 %v439
      %v759 = vunpack.c.h.b16 %v439
      %v760 = vunpack.c.l.b16 %v440
      %v761 = vunpack.c.l.b16 %v441
      %v762 = vunpack.c.h.b16 %v441
      %v763 = vunpack.c.l.b16 %v442
      %v764 = vunpack.c.l.b16 %v443
      %v765 = vunpack.c.h.b16 %v443
      %v766 = vunpack.c.l.b16 %v444
      %v767 = vunpack.c.l.b16 %v445
      %v768 = vunpack.c.h.b16 %v445
      %v769 = vunpack.c.l.b16 %v446
      %v770 = vunpack.c.l.b16 %v447
      %v771 = vunpack.c.h.b16 %v447
      %v772 = vunpack.c.l.b16 %v448
      %v773 = vunpack.c.l.b16 %v449
      %v774 = vunpack.c.h.b16 %v449
      %v775 = vunpack.c.l.b16 %v450
      %v776 = vunpack.c.l.b16 %v451
      %v777 = vunpack.c.h.b16 %v451
      %v778 = vunpack.c.l.b16 %v452
      %v779 = vunpack.c.l.b16 %v453
      %v780 = vunpack.c.h.b16 %v453
      %v781 = vunpack.c.l.b16 %v454
      %v782 = vunpack.c.l.b16 %v455
      %v783 = vunpack.c.h.b16 %v455
      %v784 = vunpack.c.l.b16 %v456
      %v785 = vunpack.c.l.b16 %v457
      %v786 = vunpack.c.h.b16 %v457
      %v787 = vunpack.c.l.b16 %v458
      %v788 = vunpack.c.l.b16 %v459
      %v789 = vunpack.c.h.b16 %v459
      %v790 = vunpack.c.l.b16 %v460
      %v791 = vunpack.c.l.b16 %v461
      %v792 = vunpack.c.h.b16 %v461
      %v793 = vunpack.c.l.b16 %v462
      %v794 = vunpack.c.l.b16 %v463
      %v795 = vunpack.c.h.b16 %v463
      %v796 = vunpack.c.l.b16 %v464
      %v797 = vunpack.c.l.b16 %v465
      %v798 = vunpack.c.h.b16 %v465
      %v799 = vunpack.c.l.b16 %v466
      %v800 = vunpack.c.l.b16 %v467
      %v801 = vunpack.c.h.b16 %v467
      %v802 = vunpack.c.l.b16 %v468
      %v803 = vunpack.c.l.b16 %v469
      %v804 = vunpack.c.h.b16 %v469
      %v805 = vunpack.c.l.b16 %v470
      %v806 = vunpack.c.l.b16 %v471
      %v807 = vunpack.c.h.b16 %v471
      %v808 = vunpack.c.l.b16 %v472
      %v809 = vunpack.c.l.b16 %v473
      %v810 = vunpack.c.h.b16 %v473
      %v811 = vunpack.c.l.b16 %v474
      %v812 = vunpack.c.l.b16 %v475
      %v813 = vunpack.c.h.b16 %v475
      %v814 = vunpack.c.l.b16 %v476
      %v815 = vunpack.c.l.b16 %v477
      %v816 = vunpack.c.h.b16 %v477
      %v817 = vunpack.c.l.b16 %v478
      %v818 = vunpack.c.l.b16 %v479
      %v819 = vunpack.c.h.b16 %v479
      %v820 = vunpack.c.l.b16 %v480
      %v821 = vunpack.c.l.b16 %v481
      %v822 = vunpack.c.h.b16 %v481
      %v823 = vunpack.c.l.b16 %v482
      %v824 = vunpack.c.l.b16 %v483
      %v825 = vunpack.c.h.b16 %v483
      %v826 = vunpack.c.l.b16 %v484
      %v827 = vunpack.c.l.b16 %v485
      %v828 = vunpack.c.h.b16 %v485
      %v829 = vunpack.c.l.b16 %v486
      %v830 = vunpack.c.l.b16 %v487
      %v831 = vunpack.c.h.b16 %v487
      %v832 = vunpack.c.l.b16 %v488
      %v833 = vunpack.c.l.b16 %v489
      %v834 = vunpack.c.h.b16 %v489
      %v835 = vunpack.c.l.b16 %v490
      %v836 = vunpack.c.l.b16 %v491
      %v837 = vunpack.c.h.b16 %v491
      %v838 = vunpack.c.l.b16 %v492
      %v839 = vunpack.c.l.b16 %v493
      %v840 = vunpack.c.h.b16 %v493
      %v841 = vunpack.c.l.b16 %v494
      %v842 = vunpack.c.l.b16 %v495
      %v843 = vunpack.c.h.b16 %v495
      %v844 = vunpack.c.l.b16 %v496
      %v845 = vunpack.c.l.b16 %v497
      %v846 = vunpack.c.h.b16 %v497
      %v847 = vunpack.c.l.b16 %v498
      %v848 = vunpack.c.l.b16 %v499
      %v849 = vunpack.c.h.b16 %v499
      %v850 = vunpack.c.l.b16 %v500
      %v851 = vunpack.c.l.b16 %v501
      %v852 = vunpack.c.h.b16 %v501
      %v853 = vunpack.c.l.b16 %v502
      %v854 = vunpack.c.l.b16 %v503
      %v855 = vunpack.c.h.b16 %v503
      %v856 = vunpack.c.l.b16 %v504
      %v857 = vunpack.c.l.b16 %v505
      %v858 = vunpack.c.h.b16 %v505
      %v859 = vunpack.c.l.b16 %v506
      %v860 = vunpack.c.l.b16 %v507
      %v861 = vunpack.c.h.b16 %v507
      %v862 = vunpack.c.l.b16 %v508
      %v863 = vunpack.c.l.b16 %v509
      %v864 = vunpack.c.h.b16 %v509
      %v865 = vunpack.c.l.b16 %v510
      %v866 = vunpack.c.l.b16 %v511
      %v867 = vunpack.c.h.b16 %v511
      %v868 = vunpack.c.l.b16 %v512
      %v869 = vunpack.c.l.b16 %v513
      %v870 = vunpack.c.h.b16 %v513
      %v871 = vunpack.c.l.b16 %v514
      %v872 = vunpack.c.l.b16 %v515
      %v873 = vunpack.c.h.b16 %v515
      %v874 = vunpack.c.l.b16 %v516
      %v875 = vunpack.c.l.b16 %v517
      %v876 = vunpack.c.h.b16 %v517
      %v877 = vunpack.c.l.b16 %v518
      %v878 = vunpack.c.l.b16 %v519
      %v879 = vunpack.c.h.b16 %v519
      %v880 = vunpack.c.l.b16 %v520
      %v881 = vunpack.c.l.b16 %v521
      %v882 = vunpack.c.h.b16 %v521
      %v883 = vunpack.c.l.b16 %v522
      %v884 = vunpack.c.l.b16 %v523
      %v885 = vunpack.c.h.b16 %v523
      %v886 = vunpack.c.l.b16 %v524
      %v887 = vunpack.c.l.b16 %v525
      %v888 = vunpack.c.h.b16 %v525
      %v889 = vunpack.c.l.b16 %v526
      %v890 = vunpack.c.l.b16 %v527
      %v891 = vunpack.c.h.b16 %v527
      %v892 = vunpack.c.l.b16 %v528
      %v893 = vunpack.c.l.b16 %v529
      %v894 = vunpack.c.h.b16 %v529
      %v895 = vunpack.c.l.b16 %v530
      %v896 = vunpack.c.l.b16 %v531
      %v897 = vunpack.c.h.b16 %v531
      %v898 = vunpack.c.l.b16 %v532
      %v899 = vunpack.c.l.b16 %v533
      %v900 = vunpack.c.h.b16 %v533
      %v901 = vunpack.c.l.b16 %v534
      %v902 = vunpack.c.l.b16 %v535
      %v903 = vunpack.c.h.b16 %v535
      %v904 = vunpack.c.l.b16 %v536
      %v905 = vunpack.c.l.b16 %v537
      %v906 = vunpack.c.h.b16 %v537
      %v907 = vunpack.c.l.b16 %v538
      %v908 = vunpack.c.l.b16 %v539
      %v909 = vunpack.c.h.b16 %v539
      %v910 = vunpack.c.l.b16 %v540
      %v911 = vunpack.c.l.b16 %v541
      %v912 = vunpack.c.h.b16 %v541
      %v913 = vunpack.c.l.b16 %v542
      %v914 = vunpack.c.l.b16 %v543
      %v915 = vunpack.c.h.b16 %v543
      %v916 = vunpack.c.l.b16 %v544
      %v917 = vunpack.c.l.b16 %v545
      %v918 = vunpack.c.h.b16 %v545
      %v919 = vunpack.c.l.b16 %v546
      %v920 = vunpack.c.l.b16 %v547
      %v921 = vunpack.c.h.b16 %v547
      %v922 = vunpack.c.l.b16 %v548
      %v923 = vunpack.c.l.b16 %v549
      %v924 = vunpack.c.h.b16 %v549
      %v925 = vunpack.c.l.b16 %v550
      %v926 = vunpack.c.l.b16 %v551
      %v927 = vunpack.c.h.b16 %v551
      %v928 = vunpack.c.l.b16 %v552
      %v929 = vunpack.c.l.b16 %v553
      %v930 = vunpack.c.h.b16 %v553
      %v931 = vunpack.c.l.b16 %v554
      %v932 = vunpack.c.l.b16 %v555
      %v933 = vunpack.c.h.b16 %v555
      %v934 = vunpack.c.l.b16 %v556
      %v935 = vunpack.c.l.b16 %v557
      %v936 = vunpack.c.h.b16 %v557
      %v937 = vunpack.c.l.b16 %v558
      %v938 = vunpack.c.l.b16 %v559
      %v939 = vunpack.c.h.b16 %v559
      %v940 = vunpack.c.l.b16 %v560
      %v941 = vpack.c.b16 %v716, %v713
      %v942 = vpack.c.b16 %v717, %v714
      %v943 = vpack.c.b16 %v718, %v715
      %v944 = vpack.c.b16 %v722, %v719
      %v945 = vpack.c.b16 %v723, %v720
      %v946 = vpack.c.b16 %v724, %v721
      %v947 = vpack.c.b16 %v728, %v725
      %v948 = vpack.c.b16 %v729, %v726
      %v949 = vpack.c.b16 %v730, %v727
      %v950 = vpack.c.b16 %v734, %v731
      %v951 = vpack.c.b16 %v735, %v732
      %v952 = vpack.c.b16 %v736, %v733
      %v953 = vpack.c.b16 %v740, %v737
      %v954 = vpack.c.b16 %v741, %v738
      %v955 = vpack.c.b16 %v742, %v739
      %v956 = vpack.c.b16 %v746, %v743
      %v957 = vpack.c.b16 %v747, %v744
      %v958 = vpack.c.b16 %v748, %v745
      %v959 = vpack.c.b16 %v752, %v749
      %v960 = vpack.c.b16 %v753, %v750
      %v961 = vpack.c.b16 %v754, %v751
      %v962 = vpack.c.b16 %v758, %v755
      %v963 = vpack.c.b16 %v759, %v756
      %v964 = vpack.c.b16 %v760, %v757
      %v965 = vpack.c.b16 %v764, %v761
      %v966 = vpack.c.b16 %v765, %v762
      %v967 = vpack.c.b16 %v766, %v763
      %v968 = vpack.c.b16 %v770, %v767
      %v969 = vpack.c.b16 %v771, %v768
      %v970 = vpack.c.b16 %v772, %v769
      %v971 = vpack.c.b16 %v776, %v773
      %v972 = vpack.c.b16 %v777, %v774
      %v973 = vpack.c.b16 %v778, %v775
      %v974 = vpack.c.b16 %v782, %v779
      %v975 = vpack.c.b16 %v783, %v780
      %v976 = vpack.c.b16 %v784, %v781
      %v977 = vpack.c.b16 %v788, %v785
      %v978 = vpack.c.b16 %v789, %v786
      %v979 = vpack.c.b16 %v790, %v787
      %v980 = vpack.c.b16 %v794, %v791
      %v981 = vpack.c.b16 %v795, %v792
      %v982 = vpack.c.b16 %v796, %v793
      %v983 = vpack.c.b16 %v800, %v797
      %v984 = vpack.c.b16 %v801, %v798
      %v985 = vpack.c.b16 %v802, %v799
      %v986 = vpack.c.b16 %v806, %v803
      %v987 = vpack.c.b16 %v807, %v804
      %v988 = vpack.c.b16 %v808, %v805
      %v989 = vpack.c.b16 %v812, %v809
      %v990 = vpack.c.b16 %v813, %v810
      %v991 = vpack.c.b16 %v814, %v811
      %v992 = vpack.c.b16 %v818, %v815
      %v993 = vpack.c.b16 %v819, %v816
      %v994 = vpack.c.b16 %v820, %v817
      %v995 = vpack.c.b16 %v824, %v821
      %v996 = vpack.c.b16 %v825, %v822
      %v997 = vpack.c.b16 %v826, %v823
      %v998 = vpack.c.b16 %v830, %v827
      %v999 = vpack.c.b16 %v831, %v828
      %v1000 = vpack.c.b16 %v832, %v829
      %v1001 = vpack.c.b16 %v836, %v833
      %v1002 = vpack.c.b16 %v837, %v834
      %v1003 = vpack.c.b16 %v838, %v835
      %v1004 = vpack.c.b16 %v842, %v839
      %v1005 = vpack.c.b16 %v843, %v840
      %v1006 = vpack.c.b16 %v844, %v841
      %v1007 = vpack.c.b16 %v848, %v845
      %v1008 = vpack.c.b16 %v849, %v846
      %v1009 = vpack.c.b16 %v850, %v847
      %v1010 = vpack.c.b16 %v854, %v851
      %v1011 = vpack.c.b16 %v855, %v852
      %v1012 = vpack.c.b16 %v856, %v853
      %v1013 = vpack.c.b16 %v860, %v857
      %v1014 = vpack.c.b16 %v861, %v858
      %v1015 = vpack.c.b16 %v862, %v859
      %v1016 = vpack.c.b16 %v866, %v863
      %v1017 = vpack.c.b16 %v867, %v864
      %v1018 = vpack.c.b16 %v868, %v865
      %v1019 = vpack.c.b16 %v872, %v869
      %v1020 = vpack.c.b16 %v873, %v870
      %v1021 = vpack.c.b16 %v874, %v871
      %v1022 = vpack.c.b16 %v878, %v875
      %v1023 = vpack.c.b16 %v879, %v876
      %v1024 = vpack.c.b16 %v880, %v877
      %v1025 = vpack.c.b16 %v884, %v881
      %v1026 = vpack.c.b16 %v885, %v882
      %v1027 = vpack.c.b16 %v886, %v883
      %v1028 = vpack.c.b16 %v890, %v887
      %v1029 = vpack.c.b16 %v891, %v888
      %v1030 = vpack.c.b16 %v892, %v889
      %v1031 = vpack.c.b16 %v896, %v893
      %v1032 = vpack.c.b16 %v897, %v894
      %v1033 = vpack.c.b16 %v898, %v895
      %v1034 = vpack.c.b16 %v902, %v899
      %v1035 = vpack.c.b16 %v903, %v900
      %v1036 = vpack.c.b16 %v904, %v901
      %v1037 = vpack.c.b16 %v908, %v905
      %v1038 = vpack.c.b16 %v909, %v906
      %v1039 = vpack.c.b16 %v910, %v907
      %v1040 = vpack.c.b16 %v914, %v911
      %v1041 = vpack.c.b16 %v915, %v912
      %v1042 = vpack.c.b16 %v916, %v913
      %v1043 = vpack.c.b16 %v920, %v917
      %v1044 = vpack.c.b16 %v921, %v918
      %v1045 = vpack.c.b16 %v922, %v919
      %v1046 = vpack.c.b16 %v926, %v923
      %v1047 = vpack.c.b16 %v927, %v924
      %v1048 = vpack.c.b16 %v928, %v925
      %v1049 = vpack.c.b16 %v932, %v929
      %v1050 = vpack.c.b16 %v933, %v930
      %v1051 = vpack.c.b16 %v934, %v931
      %v1052 = vpack.c.b16 %v938, %v935
      %v1053 = vpack.c.b16 %v939, %v936
      %v1054 = vpack.c.b16 %v940, %v937
      %vm1131 = vcmask 392192
      %v1133 = vsel %vm1131, %v943, 0
      %v1136 = vsel %vm1131, %v946, 0
      %v1139 = vsel %vm1131, %v949, 0
      %v1142 = vsel %vm1131, %v952, 0
      %v1145 = vsel %vm1131, %v955, 0
      %v1148 = vsel %vm1131, %v958, 0
      %v1151 = vsel %vm1131, %v961, 0
      %v1154 = vsel %vm1131, %v964, 0
      %v1157 = vsel %vm1131, %v967, 0
      %v1160 = vsel %vm1131, %v970, 0
      %v1163 = vsel %vm1131, %v973, 0
      %v1166 = vsel %vm1131, %v976, 0
      %v1169 = vsel %vm1131, %v979, 0
      %v1172 = vsel %vm1131, %v982, 0
      %v1175 = vsel %vm1131, %v985, 0
      %v1178 = vsel %vm1131, %v988, 0
      %v1181 = vsel %vm1131, %v991, 0
      %v1184 = vsel %vm1131, %v994, 0
      %v1187 = vsel %vm1131, %v997, 0
      %v1190 = vsel %vm1131, %v1000, 0
      %v1193 = vsel %vm1131, %v1003, 0
      %v1196 = vsel %vm1131, %v1006, 0
      %v1199 = vsel %vm1131, %v1009, 0
      %v1202 = vsel %vm1131, %v1012, 0
      %v1205 = vsel %vm1131, %v1015, 0
      %v1208 = vsel %vm1131, %v1018, 0
      %v1211 = vsel %vm1131, %v1021, 0
      %v1214 = vsel %vm1131, %v1024, 0
      %v1217 = vsel %vm1131, %v1027, 0
      %v1220 = vsel %vm1131, %v1030, 0
      %v1223 = vsel %vm1131, %v1033, 0
      %v1226 = vsel %vm1131, %v1036, 0
      %v1229 = vsel %vm1131, %v1039, 0
      %v1232 = vsel %vm1131, %v1042, 0
      %v1235 = vsel %vm1131, %v1045, 0
      %v1238 = vsel %vm1131, %v1048, 0
      %v1241 = vsel %vm1131, %v1051, 0
      %v1244 = vsel %vm1131, %v1054, 0
      %1246 = vmatpush.bf16.msra.mxu0 %v397
      %1247 = vmatpush.bf16.msra.mxu0 %v396
      %1248 = vmatpush.bf16.msra.mxu0 %v395
      %1249 = vmatpush.bf16.msra.mxu0 %v394
      %1250 = vmatpush.bf16.msra.mxu0 %v393
      %1251 = vmatpush.bf16.msra.mxu0 %v392
      %1252 = vmatpush.bf16.msra.mxu0 %v391
      %1253 = vmatpush.bf16.msra.mxu0 %v390
      %1254 = vmatmul.bf16.gmra.mxu0 %v941
      %v1255 = vpop.f32.mrf.mxu0
      %v1256 = vadd.f32 0.0, %v1255
      %v1257 = vpop.f32.mrf.mxu0
      %v1258 = vadd.f32 0.0, %v1257
      %1259 = vmatmul.bf16.gmra.mxu0 %v944
      %v1260 = vpop.f32.mrf.mxu0
      %v1261 = vadd.f32 0.0, %v1260
      %v1262 = vpop.f32.mrf.mxu0
      %v1263 = vadd.f32 0.0, %v1262
      %1264 = vmatmul.bf16.gmra.mxu0 %v947
      %v1265 = vpop.f32.mrf.mxu0
      %v1266 = vadd.f32 0.0, %v1265
      %v1267 = vpop.f32.mrf.mxu0
      %v1268 = vadd.f32 0.0, %v1267
      %1269 = vmatmul.bf16.gmra.mxu0 %v950
      %v1270 = vpop.f32.mrf.mxu0
      %v1271 = vadd.f32 0.0, %v1270
      %v1272 = vpop.f32.mrf.mxu0
      %v1273 = vadd.f32 0.0, %v1272
      %1274 = vmatmul.bf16.gmra.mxu0 %v953
      %v1275 = vpop.f32.mrf.mxu0
      %v1276 = vadd.f32 0.0, %v1275
      %v1277 = vpop.f32.mrf.mxu0
      %v1278 = vadd.f32 0.0, %v1277
      %1279 = vmatmul.bf16.gmra.mxu0 %v956
      %v1280 = vpop.f32.mrf.mxu0
      %v1281 = vadd.f32 0.0, %v1280
      %v1282 = vpop.f32.mrf.mxu0
      %v1283 = vadd.f32 0.0, %v1282
      %1284 = vmatmul.bf16.gmra.mxu0 %v959
      %v1285 = vpop.f32.mrf.mxu0
      %v1286 = vadd.f32 0.0, %v1285
      %v1287 = vpop.f32.mrf.mxu0
      %v1288 = vadd.f32 0.0, %v1287
      %1289 = vmatmul.bf16.gmra.mxu0 %v962
      %v1290 = vpop.f32.mrf.mxu0
      %v1291 = vadd.f32 0.0, %v1290
      %v1292 = vpop.f32.mrf.mxu0
      %v1293 = vadd.f32 0.0, %v1292
      %1294 = vmatmul.bf16.gmra.mxu0 %v965
      %v1295 = vpop.f32.mrf.mxu0
      %v1296 = vadd.f32 0.0, %v1295
      %v1297 = vpop.f32.mrf.mxu0
      %v1298 = vadd.f32 0.0, %v1297
      %1299 = vmatmul.bf16.gmra.mxu0 %v968
      %v1300 = vpop.f32.mrf.mxu0
      %v1301 = vadd.f32 0.0, %v1300
      %v1302 = vpop.f32.mrf.mxu0
      %v1303 = vadd.f32 0.0, %v1302
      %1304 = vmatmul.bf16.gmra.mxu0 %v971
      %v1305 = vpop.f32.mrf.mxu0
      %v1306 = vadd.f32 0.0, %v1305
      %v1307 = vpop.f32.mrf.mxu0
      %v1308 = vadd.f32 0.0, %v1307
      %1309 = vmatmul.bf16.gmra.mxu0 %v974
      %v1310 = vpop.f32.mrf.mxu0
      %v1311 = vadd.f32 0.0, %v1310
      %v1312 = vpop.f32.mrf.mxu0
      %v1313 = vadd.f32 0.0, %v1312
      %1314 = vmatmul.bf16.gmra.mxu0 %v977
      %v1315 = vpop.f32.mrf.mxu0
      %v1316 = vadd.f32 0.0, %v1315
      %v1317 = vpop.f32.mrf.mxu0
      %v1318 = vadd.f32 0.0, %v1317
      %1319 = vmatmul.bf16.gmra.mxu0 %v980
      %v1320 = vpop.f32.mrf.mxu0
      %v1321 = vadd.f32 0.0, %v1320
      %v1322 = vpop.f32.mrf.mxu0
      %v1323 = vadd.f32 0.0, %v1322
      %1324 = vmatmul.bf16.gmra.mxu0 %v983
      %v1325 = vpop.f32.mrf.mxu0
      %v1326 = vadd.f32 0.0, %v1325
      %v1327 = vpop.f32.mrf.mxu0
      %v1328 = vadd.f32 0.0, %v1327
      %1329 = vmatmul.bf16.gmra.mxu0 %v986
      %v1330 = vpop.f32.mrf.mxu0
      %v1331 = vadd.f32 0.0, %v1330
      %v1332 = vpop.f32.mrf.mxu0
      %v1333 = vadd.f32 0.0, %v1332
      %1334 = vmatmul.bf16.gmra.mxu0 %v989
      %v1335 = vpop.f32.mrf.mxu0
      %v1336 = vadd.f32 0.0, %v1335
      %v1337 = vpop.f32.mrf.mxu0
      %v1338 = vadd.f32 0.0, %v1337
      %1339 = vmatmul.bf16.gmra.mxu0 %v992
      %v1340 = vpop.f32.mrf.mxu0
      %v1341 = vadd.f32 0.0, %v1340
      %v1342 = vpop.f32.mrf.mxu0
      %v1343 = vadd.f32 0.0, %v1342
      %1344 = vmatmul.bf16.gmra.mxu0 %v995
      %v1345 = vpop.f32.mrf.mxu0
      %v1346 = vadd.f32 0.0, %v1345
      %v1347 = vpop.f32.mrf.mxu0
      %v1348 = vadd.f32 0.0, %v1347
      %1349 = vmatmul.bf16.gmra.mxu0 %v998
      %v1350 = vpop.f32.mrf.mxu0
      %v1351 = vadd.f32 0.0, %v1350
      %v1352 = vpop.f32.mrf.mxu0
      %v1353 = vadd.f32 0.0, %v1352
      %1354 = vmatmul.bf16.gmra.mxu0 %v1001
      %v1355 = vpop.f32.mrf.mxu0
      %v1356 = vadd.f32 0.0, %v1355
      %v1357 = vpop.f32.mrf.mxu0
      %v1358 = vadd.f32 0.0, %v1357
      %1359 = vmatmul.bf16.gmra.mxu0 %v1004
      %v1360 = vpop.f32.mrf.mxu0
      %v1361 = vadd.f32 0.0, %v1360
      %v1362 = vpop.f32.mrf.mxu0
      %v1363 = vadd.f32 0.0, %v1362
      %1364 = vmatmul.bf16.gmra.mxu0 %v1007
      %v1365 = vpop.f32.mrf.mxu0
      %v1366 = vadd.f32 0.0, %v1365
      %v1367 = vpop.f32.mrf.mxu0
      %v1368 = vadd.f32 0.0, %v1367
      %1369 = vmatmul.bf16.gmra.mxu0 %v1010
      %v1370 = vpop.f32.mrf.mxu0
      %v1371 = vadd.f32 0.0, %v1370
      %v1372 = vpop.f32.mrf.mxu0
      %v1373 = vadd.f32 0.0, %v1372
      %1374 = vmatmul.bf16.gmra.mxu0 %v1013
      %v1375 = vpop.f32.mrf.mxu0
      %v1376 = vadd.f32 0.0, %v1375
      %v1377 = vpop.f32.mrf.mxu0
      %v1378 = vadd.f32 0.0, %v1377
      %1379 = vmatmul.bf16.gmra.mxu0 %v1016
      %v1380 = vpop.f32.mrf.mxu0
      %v1381 = vadd.f32 0.0, %v1380
      %v1382 = vpop.f32.mrf.mxu0
      %v1383 = vadd.f32 0.0, %v1382
      %1384 = vmatmul.bf16.gmra.mxu0 %v1019
      %v1385 = vpop.f32.mrf.mxu0
      %v1386 = vadd.f32 0.0, %v1385
      %v1387 = vpop.f32.mrf.mxu0
      %v1388 = vadd.f32 0.0, %v1387
      %1389 = vmatmul.bf16.gmra.mxu0 %v1022
      %v1390 = vpop.f32.mrf.mxu0
      %v1391 = vadd.f32 0.0, %v1390
      %v1392 = vpop.f32.mrf.mxu0
      %v1393 = vadd.f32 0.0, %v1392
      %1394 = vmatmul.bf16.gmra.mxu0 %v1025
      %v1395 = vpop.f32.mrf.mxu0
      %v1396 = vadd.f32 0.0, %v1395
      %v1397 = vpop.f32.mrf.mxu0
      %v1398 = vadd.f32 0.0, %v1397
      %1399 = vmatmul.bf16.gmra.mxu0 %v1028
      %v1400 = vpop.f32.mrf.mxu0
      %v1401 = vadd.f32 0.0, %v1400
      %v1402 = vpop.f32.mrf.mxu0
      %v1403 = vadd.f32 0.0, %v1402
      %1404 = vmatmul.bf16.gmra.mxu0 %v1031
      %v1405 = vpop.f32.mrf.mxu0
      %v1406 = vadd.f32 0.0, %v1405
      %v1407 = vpop.f32.mrf.mxu0
      %v1408 = vadd.f32 0.0, %v1407
      %1409 = vmatmul.bf16.gmra.mxu0 %v1034
      %v1410 = vpop.f32.mrf.mxu0
      %v1411 = vadd.f32 0.0, %v1410
      %v1412 = vpop.f32.mrf.mxu0
      %v1413 = vadd.f32 0.0, %v1412
      %1414 = vmatmul.bf16.gmra.mxu0 %v1037
      %v1415 = vpop.f32.mrf.mxu0
      %v1416 = vadd.f32 0.0, %v1415
      %v1417 = vpop.f32.mrf.mxu0
      %v1418 = vadd.f32 0.0, %v1417
      %1419 = vmatmul.bf16.gmra.mxu0 %v1040
      %v1420 = vpop.f32.mrf.mxu0
      %v1421 = vadd.f32 0.0, %v1420
      %v1422 = vpop.f32.mrf.mxu0
      %v1423 = vadd.f32 0.0, %v1422
      %1424 = vmatmul.bf16.gmra.mxu0 %v1043
      %v1425 = vpop.f32.mrf.mxu0
      %v1426 = vadd.f32 0.0, %v1425
      %v1427 = vpop.f32.mrf.mxu0
      %v1428 = vadd.f32 0.0, %v1427
      %1429 = vmatmul.bf16.gmra.mxu0 %v1046
      %v1430 = vpop.f32.mrf.mxu0
      %v1431 = vadd.f32 0.0, %v1430
      %v1432 = vpop.f32.mrf.mxu0
      %v1433 = vadd.f32 0.0, %v1432
      %1434 = vmatmul.bf16.gmra.mxu0 %v1049
      %v1435 = vpop.f32.mrf.mxu0
      %v1436 = vadd.f32 0.0, %v1435
      %v1437 = vpop.f32.mrf.mxu0
      %v1438 = vadd.f32 0.0, %v1437
      %1439 = vmatmul.bf16.gmra.mxu0 %v1052
      %v1440 = vpop.f32.mrf.mxu0
      %v1441 = vadd.f32 0.0, %v1440
      %v1442 = vpop.f32.mrf.mxu0
      %v1443 = vadd.f32 0.0, %v1442
      %1444 = vdwg.mxu0
      %1445 = vmatpush.bf16.msra.mxu0 %v405
      %1446 = vmatpush.bf16.msra.mxu0 %v404
      %1447 = vmatpush.bf16.msra.mxu0 %v403
      %1448 = vmatpush.bf16.msra.mxu0 %v402
      %1449 = vmatpush.bf16.msra.mxu0 %v401
      %1450 = vmatpush.bf16.msra.mxu0 %v400
      %1451 = vmatpush.bf16.msra.mxu0 %v399
      %1452 = vmatpush.bf16.msra.mxu0 %v398
      %1453 = vmatmul.bf16.gmra.mxu0 %v942
      %v1454 = vpop.f32.mrf.mxu0
      %v1455 = vadd.f32 %v1256, %v1454
      %v1456 = vpop.f32.mrf.mxu0
      %v1457 = vadd.f32 %v1258, %v1456
      %1458 = vmatmul.bf16.gmra.mxu0 %v945
      %v1459 = vpop.f32.mrf.mxu0
      %v1460 = vadd.f32 %v1261, %v1459
      %v1461 = vpop.f32.mrf.mxu0
      %v1462 = vadd.f32 %v1263, %v1461
      %1463 = vmatmul.bf16.gmra.mxu0 %v948
      %v1464 = vpop.f32.mrf.mxu0
      %v1465 = vadd.f32 %v1266, %v1464
      %v1466 = vpop.f32.mrf.mxu0
      %v1467 = vadd.f32 %v1268, %v1466
      %1468 = vmatmul.bf16.gmra.mxu0 %v951
      %v1469 = vpop.f32.mrf.mxu0
      %v1470 = vadd.f32 %v1271, %v1469
      %v1471 = vpop.f32.mrf.mxu0
      %v1472 = vadd.f32 %v1273, %v1471
      %1473 = vmatmul.bf16.gmra.mxu0 %v954
      %v1474 = vpop.f32.mrf.mxu0
      %v1475 = vadd.f32 %v1276, %v1474
      %v1476 = vpop.f32.mrf.mxu0
      %v1477 = vadd.f32 %v1278, %v1476
      %1478 = vmatmul.bf16.gmra.mxu0 %v957
      %v1479 = vpop.f32.mrf.mxu0
      %v1480 = vadd.f32 %v1281, %v1479
      %v1481 = vpop.f32.mrf.mxu0
      %v1482 = vadd.f32 %v1283, %v1481
      %1483 = vmatmul.bf16.gmra.mxu0 %v960
      %v1484 = vpop.f32.mrf.mxu0
      %v1485 = vadd.f32 %v1286, %v1484
      %v1486 = vpop.f32.mrf.mxu0
      %v1487 = vadd.f32 %v1288, %v1486
      %1488 = vmatmul.bf16.gmra.mxu0 %v963
      %v1489 = vpop.f32.mrf.mxu0
      %v1490 = vadd.f32 %v1291, %v1489
      %v1491 = vpop.f32.mrf.mxu0
      %v1492 = vadd.f32 %v1293, %v1491
      %1493 = vmatmul.bf16.gmra.mxu0 %v966
      %v1494 = vpop.f32.mrf.mxu0
      %v1495 = vadd.f32 %v1296, %v1494
      %v1496 = vpop.f32.mrf.mxu0
      %v1497 = vadd.f32 %v1298, %v1496
      %1498 = vmatmul.bf16.gmra.mxu0 %v969
      %v1499 = vpop.f32.mrf.mxu0
      %v1500 = vadd.f32 %v1301, %v1499
      %v1501 = vpop.f32.mrf.mxu0
      %v1502 = vadd.f32 %v1303, %v1501
      %1503 = vmatmul.bf16.gmra.mxu0 %v972
      %v1504 = vpop.f32.mrf.mxu0
      %v1505 = vadd.f32 %v1306, %v1504
      %v1506 = vpop.f32.mrf.mxu0
      %v1507 = vadd.f32 %v1308, %v1506
      %1508 = vmatmul.bf16.gmra.mxu0 %v975
      %v1509 = vpop.f32.mrf.mxu0
      %v1510 = vadd.f32 %v1311, %v1509
      %v1511 = vpop.f32.mrf.mxu0
      %v1512 = vadd.f32 %v1313, %v1511
      %1513 = vmatmul.bf16.gmra.mxu0 %v978
      %v1514 = vpop.f32.mrf.mxu0
      %v1515 = vadd.f32 %v1316, %v1514
      %v1516 = vpop.f32.mrf.mxu0
      %v1517 = vadd.f32 %v1318, %v1516
      %1518 = vmatmul.bf16.gmra.mxu0 %v981
      %v1519 = vpop.f32.mrf.mxu0
      %v1520 = vadd.f32 %v1321, %v1519
      %v1521 = vpop.f32.mrf.mxu0
      %v1522 = vadd.f32 %v1323, %v1521
      %1523 = vmatmul.bf16.gmra.mxu0 %v984
      %v1524 = vpop.f32.mrf.mxu0
      %v1525 = vadd.f32 %v1326, %v1524
      %v1526 = vpop.f32.mrf.mxu0
      %v1527 = vadd.f32 %v1328, %v1526
      %1528 = vmatmul.bf16.gmra.mxu0 %v987
      %v1529 = vpop.f32.mrf.mxu0
      %v1530 = vadd.f32 %v1331, %v1529
      %v1531 = vpop.f32.mrf.mxu0
      %v1532 = vadd.f32 %v1333, %v1531
      %1533 = vmatmul.bf16.gmra.mxu0 %v990
      %v1534 = vpop.f32.mrf.mxu0
      %v1535 = vadd.f32 %v1336, %v1534
      %v1536 = vpop.f32.mrf.mxu0
      %v1537 = vadd.f32 %v1338, %v1536
      %1538 = vmatmul.bf16.gmra.mxu0 %v993
      %v1539 = vpop.f32.mrf.mxu0
      %v1540 = vadd.f32 %v1341, %v1539
      %v1541 = vpop.f32.mrf.mxu0
      %v1542 = vadd.f32 %v1343, %v1541
      %1543 = vmatmul.bf16.gmra.mxu0 %v996
      %v1544 = vpop.f32.mrf.mxu0
      %v1545 = vadd.f32 %v1346, %v1544
      %v1546 = vpop.f32.mrf.mxu0
      %v1547 = vadd.f32 %v1348, %v1546
      %1548 = vmatmul.bf16.gmra.mxu0 %v999
      %v1549 = vpop.f32.mrf.mxu0
      %v1550 = vadd.f32 %v1351, %v1549
      %v1551 = vpop.f32.mrf.mxu0
      %v1552 = vadd.f32 %v1353, %v1551
      %1553 = vmatmul.bf16.gmra.mxu0 %v1002
      %v1554 = vpop.f32.mrf.mxu0
      %v1555 = vadd.f32 %v1356, %v1554
      %v1556 = vpop.f32.mrf.mxu0
      %v1557 = vadd.f32 %v1358, %v1556
      %1558 = vmatmul.bf16.gmra.mxu0 %v1005
      %v1559 = vpop.f32.mrf.mxu0
      %v1560 = vadd.f32 %v1361, %v1559
      %v1561 = vpop.f32.mrf.mxu0
      %v1562 = vadd.f32 %v1363, %v1561
      %1563 = vmatmul.bf16.gmra.mxu0 %v1008
      %v1564 = vpop.f32.mrf.mxu0
      %v1565 = vadd.f32 %v1366, %v1564
      %v1566 = vpop.f32.mrf.mxu0
      %v1567 = vadd.f32 %v1368, %v1566
      %1568 = vmatmul.bf16.gmra.mxu0 %v1011
      %v1569 = vpop.f32.mrf.mxu0
      %v1570 = vadd.f32 %v1371, %v1569
      %v1571 = vpop.f32.mrf.mxu0
      %v1572 = vadd.f32 %v1373, %v1571
      %1573 = vmatmul.bf16.gmra.mxu0 %v1014
      %v1574 = vpop.f32.mrf.mxu0
      %v1575 = vadd.f32 %v1376, %v1574
      %v1576 = vpop.f32.mrf.mxu0
      %v1577 = vadd.f32 %v1378, %v1576
      %1578 = vmatmul.bf16.gmra.mxu0 %v1017
      %v1579 = vpop.f32.mrf.mxu0
      %v1580 = vadd.f32 %v1381, %v1579
      %v1581 = vpop.f32.mrf.mxu0
      %v1582 = vadd.f32 %v1383, %v1581
      %1583 = vmatmul.bf16.gmra.mxu0 %v1020
      %v1584 = vpop.f32.mrf.mxu0
      %v1585 = vadd.f32 %v1386, %v1584
      %v1586 = vpop.f32.mrf.mxu0
      %v1587 = vadd.f32 %v1388, %v1586
      %1588 = vmatmul.bf16.gmra.mxu0 %v1023
      %v1589 = vpop.f32.mrf.mxu0
      %v1590 = vadd.f32 %v1391, %v1589
      %v1591 = vpop.f32.mrf.mxu0
      %v1592 = vadd.f32 %v1393, %v1591
      %1593 = vmatmul.bf16.gmra.mxu0 %v1026
      %v1594 = vpop.f32.mrf.mxu0
      %v1595 = vadd.f32 %v1396, %v1594
      %v1596 = vpop.f32.mrf.mxu0
      %v1597 = vadd.f32 %v1398, %v1596
      %1598 = vmatmul.bf16.gmra.mxu0 %v1029
      %v1599 = vpop.f32.mrf.mxu0
      %v1600 = vadd.f32 %v1401, %v1599
      %v1601 = vpop.f32.mrf.mxu0
      %v1602 = vadd.f32 %v1403, %v1601
      %1603 = vmatmul.bf16.gmra.mxu0 %v1032
      %v1604 = vpop.f32.mrf.mxu0
      %v1605 = vadd.f32 %v1406, %v1604
      %v1606 = vpop.f32.mrf.mxu0
      %v1607 = vadd.f32 %v1408, %v1606
      %1608 = vmatmul.bf16.gmra.mxu0 %v1035
      %v1609 = vpop.f32.mrf.mxu0
      %v1610 = vadd.f32 %v1411, %v1609
      %v1611 = vpop.f32.mrf.mxu0
      %v1612 = vadd.f32 %v1413, %v1611
      %1613 = vmatmul.bf16.gmra.mxu0 %v1038
      %v1614 = vpop.f32.mrf.mxu0
      %v1615 = vadd.f32 %v1416, %v1614
      %v1616 = vpop.f32.mrf.mxu0
      %v1617 = vadd.f32 %v1418, %v1616
      %1618 = vmatmul.bf16.gmra.mxu0 %v1041
      %v1619 = vpop.f32.mrf.mxu0
      %v1620 = vadd.f32 %v1421, %v1619
      %v1621 = vpop.f32.mrf.mxu0
      %v1622 = vadd.f32 %v1423, %v1621
      %1623 = vmatmul.bf16.gmra.mxu0 %v1044
      %v1624 = vpop.f32.mrf.mxu0
      %v1625 = vadd.f32 %v1426, %v1624
      %v1626 = vpop.f32.mrf.mxu0
      %v1627 = vadd.f32 %v1428, %v1626
      %1628 = vmatmul.bf16.gmra.mxu0 %v1047
      %v1629 = vpop.f32.mrf.mxu0
      %v1630 = vadd.f32 %v1431, %v1629
      %v1631 = vpop.f32.mrf.mxu0
      %v1632 = vadd.f32 %v1433, %v1631
      %1633 = vmatmul.bf16.gmra.mxu0 %v1050
      %v1634 = vpop.f32.mrf.mxu0
      %v1635 = vadd.f32 %v1436, %v1634
      %v1636 = vpop.f32.mrf.mxu0
      %v1637 = vadd.f32 %v1438, %v1636
      %1638 = vmatmul.bf16.gmra.mxu0 %v1053
      %v1639 = vpop.f32.mrf.mxu0
      %v1640 = vadd.f32 %v1441, %v1639
      %v1641 = vpop.f32.mrf.mxu0
      %v1642 = vadd.f32 %v1443, %v1641
      %1643 = vdwg.mxu0
      %1644 = vmatpush.bf16.msra.mxu0 0
      %1645 = vmatpush.bf16.msra.mxu0 0
      %1646 = vmatpush.bf16.msra.mxu0 0
      %1647 = vmatpush.bf16.msra.mxu0 0
      %1648 = vmatpush.bf16.msra.mxu0 0
      %1649 = vmatpush.bf16.msra.mxu0 %v408
      %1650 = vmatpush.bf16.msra.mxu0 %v407
      %1651 = vmatpush.bf16.msra.mxu0 %v406
      %1652 = vmatmul.bf16.gmra.mxu0 %v1133
      %v1653 = vpop.f32.mrf.mxu0
      %v1654 = vadd.f32 %v1455, %v1653
      %v1655 = vpop.f32.mrf.mxu0
      %v1656 = vadd.f32 %v1457, %v1655
      %1657 = vmatmul.bf16.gmra.mxu0 %v1136
      %v1658 = vpop.f32.mrf.mxu0
      %v1659 = vadd.f32 %v1460, %v1658
      %v1660 = vpop.f32.mrf.mxu0
      %v1661 = vadd.f32 %v1462, %v1660
      %1662 = vmatmul.bf16.gmra.mxu0 %v1139
      %v1663 = vpop.f32.mrf.mxu0
      %v1664 = vadd.f32 %v1465, %v1663
      %v1665 = vpop.f32.mrf.mxu0
      %v1666 = vadd.f32 %v1467, %v1665
      %1667 = vmatmul.bf16.gmra.mxu0 %v1142
      %v1668 = vpop.f32.mrf.mxu0
      %v1669 = vadd.f32 %v1470, %v1668
      %v1670 = vpop.f32.mrf.mxu0
      %v1671 = vadd.f32 %v1472, %v1670
      %1672 = vmatmul.bf16.gmra.mxu0 %v1145
      %v1673 = vpop.f32.mrf.mxu0
      %v1674 = vadd.f32 %v1475, %v1673
      %v1675 = vpop.f32.mrf.mxu0
      %v1676 = vadd.f32 %v1477, %v1675
      %1677 = vmatmul.bf16.gmra.mxu0 %v1148
      %v1678 = vpop.f32.mrf.mxu0
      %v1679 = vadd.f32 %v1480, %v1678
      %v1680 = vpop.f32.mrf.mxu0
      %v1681 = vadd.f32 %v1482, %v1680
      %1682 = vmatmul.bf16.gmra.mxu0 %v1151
      %v1683 = vpop.f32.mrf.mxu0
      %v1684 = vadd.f32 %v1485, %v1683
      %v1685 = vpop.f32.mrf.mxu0
      %v1686 = vadd.f32 %v1487, %v1685
      %1687 = vmatmul.bf16.gmra.mxu0 %v1154
      %v1688 = vpop.f32.mrf.mxu0
      %v1689 = vadd.f32 %v1490, %v1688
      %v1690 = vpop.f32.mrf.mxu0
      %v1691 = vadd.f32 %v1492, %v1690
      %1692 = vmatmul.bf16.gmra.mxu0 %v1157
      %v1693 = vpop.f32.mrf.mxu0
      %v1694 = vadd.f32 %v1495, %v1693
      %v1695 = vpop.f32.mrf.mxu0
      %v1696 = vadd.f32 %v1497, %v1695
      %1697 = vmatmul.bf16.gmra.mxu0 %v1160
      %v1698 = vpop.f32.mrf.mxu0
      %v1699 = vadd.f32 %v1500, %v1698
      %v1700 = vpop.f32.mrf.mxu0
      %v1701 = vadd.f32 %v1502, %v1700
      %1702 = vmatmul.bf16.gmra.mxu0 %v1163
      %v1703 = vpop.f32.mrf.mxu0
      %v1704 = vadd.f32 %v1505, %v1703
      %v1705 = vpop.f32.mrf.mxu0
      %v1706 = vadd.f32 %v1507, %v1705
      %1707 = vmatmul.bf16.gmra.mxu0 %v1166
      %v1708 = vpop.f32.mrf.mxu0
      %v1709 = vadd.f32 %v1510, %v1708
      %v1710 = vpop.f32.mrf.mxu0
      %v1711 = vadd.f32 %v1512, %v1710
      %1712 = vmatmul.bf16.gmra.mxu0 %v1169
      %v1713 = vpop.f32.mrf.mxu0
      %v1714 = vadd.f32 %v1515, %v1713
      %v1715 = vpop.f32.mrf.mxu0
      %v1716 = vadd.f32 %v1517, %v1715
      %1717 = vmatmul.bf16.gmra.mxu0 %v1172
      %v1718 = vpop.f32.mrf.mxu0
      %v1719 = vadd.f32 %v1520, %v1718
      %v1720 = vpop.f32.mrf.mxu0
      %v1721 = vadd.f32 %v1522, %v1720
      %1722 = vmatmul.bf16.gmra.mxu0 %v1175
      %v1723 = vpop.f32.mrf.mxu0
      %v1724 = vadd.f32 %v1525, %v1723
      %v1725 = vpop.f32.mrf.mxu0
      %v1726 = vadd.f32 %v1527, %v1725
      %1727 = vmatmul.bf16.gmra.mxu0 %v1178
      %v1728 = vpop.f32.mrf.mxu0
      %v1729 = vadd.f32 %v1530, %v1728
      %v1730 = vpop.f32.mrf.mxu0
      %v1731 = vadd.f32 %v1532, %v1730
      %1732 = vmatmul.bf16.gmra.mxu0 %v1181
      %v1733 = vpop.f32.mrf.mxu0
      %v1734 = vadd.f32 %v1535, %v1733
      %v1735 = vpop.f32.mrf.mxu0
      %v1736 = vadd.f32 %v1537, %v1735
      %1737 = vmatmul.bf16.gmra.mxu0 %v1184
      %v1738 = vpop.f32.mrf.mxu0
      %v1739 = vadd.f32 %v1540, %v1738
      %v1740 = vpop.f32.mrf.mxu0
      %v1741 = vadd.f32 %v1542, %v1740
      %1742 = vmatmul.bf16.gmra.mxu0 %v1187
      %v1743 = vpop.f32.mrf.mxu0
      %v1744 = vadd.f32 %v1545, %v1743
      %v1745 = vpop.f32.mrf.mxu0
      %v1746 = vadd.f32 %v1547, %v1745
      %1747 = vmatmul.bf16.gmra.mxu0 %v1190
      %v1748 = vpop.f32.mrf.mxu0
      %v1749 = vadd.f32 %v1550, %v1748
      %v1750 = vpop.f32.mrf.mxu0
      %v1751 = vadd.f32 %v1552, %v1750
      %1752 = vmatmul.bf16.gmra.mxu0 %v1193
      %v1753 = vpop.f32.mrf.mxu0
      %v1754 = vadd.f32 %v1555, %v1753
      %v1755 = vpop.f32.mrf.mxu0
      %v1756 = vadd.f32 %v1557, %v1755
      %1757 = vmatmul.bf16.gmra.mxu0 %v1196
      %v1758 = vpop.f32.mrf.mxu0
      %v1759 = vadd.f32 %v1560, %v1758
      %v1760 = vpop.f32.mrf.mxu0
      %v1761 = vadd.f32 %v1562, %v1760
      %1762 = vmatmul.bf16.gmra.mxu0 %v1199
      %v1763 = vpop.f32.mrf.mxu0
      %v1764 = vadd.f32 %v1565, %v1763
      %v1765 = vpop.f32.mrf.mxu0
      %v1766 = vadd.f32 %v1567, %v1765
      %1767 = vmatmul.bf16.gmra.mxu0 %v1202
      %v1768 = vpop.f32.mrf.mxu0
      %v1769 = vadd.f32 %v1570, %v1768
      %v1770 = vpop.f32.mrf.mxu0
      %v1771 = vadd.f32 %v1572, %v1770
      %1772 = vmatmul.bf16.gmra.mxu0 %v1205
      %v1773 = vpop.f32.mrf.mxu0
      %v1774 = vadd.f32 %v1575, %v1773
      %v1775 = vpop.f32.mrf.mxu0
      %v1776 = vadd.f32 %v1577, %v1775
      %1777 = vmatmul.bf16.gmra.mxu0 %v1208
      %v1778 = vpop.f32.mrf.mxu0
      %v1779 = vadd.f32 %v1580, %v1778
      %v1780 = vpop.f32.mrf.mxu0
      %v1781 = vadd.f32 %v1582, %v1780
      %1782 = vmatmul.bf16.gmra.mxu0 %v1211
      %v1783 = vpop.f32.mrf.mxu0
      %v1784 = vadd.f32 %v1585, %v1783
      %v1785 = vpop.f32.mrf.mxu0
      %v1786 = vadd.f32 %v1587, %v1785
      %1787 = vmatmul.bf16.gmra.mxu0 %v1214
      %v1788 = vpop.f32.mrf.mxu0
      %v1789 = vadd.f32 %v1590, %v1788
      %v1790 = vpop.f32.mrf.mxu0
      %v1791 = vadd.f32 %v1592, %v1790
      %1792 = vmatmul.bf16.gmra.mxu0 %v1217
      %v1793 = vpop.f32.mrf.mxu0
      %v1794 = vadd.f32 %v1595, %v1793
      %v1795 = vpop.f32.mrf.mxu0
      %v1796 = vadd.f32 %v1597, %v1795
      %1797 = vmatmul.bf16.gmra.mxu0 %v1220
      %v1798 = vpop.f32.mrf.mxu0
      %v1799 = vadd.f32 %v1600, %v1798
      %v1800 = vpop.f32.mrf.mxu0
      %v1801 = vadd.f32 %v1602, %v1800
      %1802 = vmatmul.bf16.gmra.mxu0 %v1223
      %v1803 = vpop.f32.mrf.mxu0
      %v1804 = vadd.f32 %v1605, %v1803
      %v1805 = vpop.f32.mrf.mxu0
      %v1806 = vadd.f32 %v1607, %v1805
      %1807 = vmatmul.bf16.gmra.mxu0 %v1226
      %v1808 = vpop.f32.mrf.mxu0
      %v1809 = vadd.f32 %v1610, %v1808
      %v1810 = vpop.f32.mrf.mxu0
      %v1811 = vadd.f32 %v1612, %v1810
      %1812 = vmatmul.bf16.gmra.mxu0 %v1229
      %v1813 = vpop.f32.mrf.mxu0
      %v1814 = vadd.f32 %v1615, %v1813
      %v1815 = vpop.f32.mrf.mxu0
      %v1816 = vadd.f32 %v1617, %v1815
      %1817 = vmatmul.bf16.gmra.mxu0 %v1232
      %v1818 = vpop.f32.mrf.mxu0
      %v1819 = vadd.f32 %v1620, %v1818
      %v1820 = vpop.f32.mrf.mxu0
      %v1821 = vadd.f32 %v1622, %v1820
      %1822 = vmatmul.bf16.gmra.mxu0 %v1235
      %v1823 = vpop.f32.mrf.mxu0
      %v1824 = vadd.f32 %v1625, %v1823
      %v1825 = vpop.f32.mrf.mxu0
      %v1826 = vadd.f32 %v1627, %v1825
      %1827 = vmatmul.bf16.gmra.mxu0 %v1238
      %v1828 = vpop.f32.mrf.mxu0
      %v1829 = vadd.f32 %v1630, %v1828
      %v1830 = vpop.f32.mrf.mxu0
      %v1831 = vadd.f32 %v1632, %v1830
      %1832 = vmatmul.bf16.gmra.mxu0 %v1241
      %v1833 = vpop.f32.mrf.mxu0
      %v1834 = vadd.f32 %v1635, %v1833
      %v1835 = vpop.f32.mrf.mxu0
      %v1836 = vadd.f32 %v1637, %v1835
      %1837 = vmatmul.bf16.gmra.mxu0 %v1244
      %v1838 = vpop.f32.mrf.mxu0
      %v1839 = vadd.f32 %v1640, %v1838
      %v1840 = vpop.f32.mrf.mxu0
      %v1841 = vadd.f32 %v1642, %v1840
      %1842 = vdwg.mxu0
      %vm1843 = vcmask 400384
      %v1844 = vsel %vm1843, %v1654, 0.0
      %1845 = vadd.xlane.f32.xlu0 %v1844
      %v1846 = vpop.xlane.xlu0 %1845
      %v1847 = vsel %vm1843, %v1656, 0.0
      %1848 = vadd.xlane.f32.xlu0 %v1847
      %v1849 = vpop.xlane.xlu0 %1848
      %v1850 = vsel %vm1843, %v1659, 0.0
      %1851 = vadd.xlane.f32.xlu0 %v1850
      %v1852 = vpop.xlane.xlu0 %1851
      %v1853 = vsel %vm1843, %v1661, 0.0
      %1854 = vadd.xlane.f32.xlu0 %v1853
      %v1855 = vpop.xlane.xlu0 %1854
      %v1856 = vsel %vm1843, %v1664, 0.0
      %1857 = vadd.xlane.f32.xlu0 %v1856
      %v1858 = vpop.xlane.xlu0 %1857
      %v1859 = vsel %vm1843, %v1666, 0.0
      %1860 = vadd.xlane.f32.xlu0 %v1859
      %v1861 = vpop.xlane.xlu0 %1860
      %v1862 = vsel %vm1843, %v1669, 0.0
      %1863 = vadd.xlane.f32.xlu0 %v1862
      %v1864 = vpop.xlane.xlu0 %1863
      %v1865 = vsel %vm1843, %v1671, 0.0
      %1866 = vadd.xlane.f32.xlu0 %v1865
      %v1867 = vpop.xlane.xlu0 %1866
      %v1868 = vsel %vm1843, %v1674, 0.0
      %1869 = vadd.xlane.f32.xlu0 %v1868
      %v1870 = vpop.xlane.xlu0 %1869
      %v1871 = vsel %vm1843, %v1676, 0.0
      %1872 = vadd.xlane.f32.xlu0 %v1871
      %v1873 = vpop.xlane.xlu0 %1872
      %v1874 = vsel %vm1843, %v1679, 0.0
      %1875 = vadd.xlane.f32.xlu0 %v1874
      %v1876 = vpop.xlane.xlu0 %1875
      %v1877 = vsel %vm1843, %v1681, 0.0
      %1878 = vadd.xlane.f32.xlu0 %v1877
      %v1879 = vpop.xlane.xlu0 %1878
      %v1880 = vsel %vm1843, %v1684, 0.0
      %1881 = vadd.xlane.f32.xlu0 %v1880
      %v1882 = vpop.xlane.xlu0 %1881
      %v1883 = vsel %vm1843, %v1686, 0.0
      %1884 = vadd.xlane.f32.xlu0 %v1883
      %v1885 = vpop.xlane.xlu0 %1884
      %v1886 = vsel %vm1843, %v1689, 0.0
      %1887 = vadd.xlane.f32.xlu0 %v1886
      %v1888 = vpop.xlane.xlu0 %1887
      %v1889 = vsel %vm1843, %v1691, 0.0
      %1890 = vadd.xlane.f32.xlu0 %v1889
      %v1891 = vpop.xlane.xlu0 %1890
      %v1892 = vsel %vm1843, %v1694, 0.0
      %1893 = vadd.xlane.f32.xlu0 %v1892
      %v1894 = vpop.xlane.xlu0 %1893
      %v1895 = vsel %vm1843, %v1696, 0.0
      %1896 = vadd.xlane.f32.xlu0 %v1895
      %v1897 = vpop.xlane.xlu0 %1896
      %v1898 = vsel %vm1843, %v1699, 0.0
      %1899 = vadd.xlane.f32.xlu0 %v1898
      %v1900 = vpop.xlane.xlu0 %1899
      %v1901 = vsel %vm1843, %v1701, 0.0
      %1902 = vadd.xlane.f32.xlu0 %v1901
      %v1903 = vpop.xlane.xlu0 %1902
      %v1904 = vsel %vm1843, %v1704, 0.0
      %1905 = vadd.xlane.f32.xlu0 %v1904
      %v1906 = vpop.xlane.xlu0 %1905
      %v1907 = vsel %vm1843, %v1706, 0.0
      %1908 = vadd.xlane.f32.xlu0 %v1907
      %v1909 = vpop.xlane.xlu0 %1908
      %v1910 = vsel %vm1843, %v1709, 0.0
      %1911 = vadd.xlane.f32.xlu0 %v1910
      %v1912 = vpop.xlane.xlu0 %1911
      %v1913 = vsel %vm1843, %v1711, 0.0
      %1914 = vadd.xlane.f32.xlu0 %v1913
      %v1915 = vpop.xlane.xlu0 %1914
      %v1916 = vsel %vm1843, %v1714, 0.0
      %1917 = vadd.xlane.f32.xlu0 %v1916
      %v1918 = vpop.xlane.xlu0 %1917
      %v1919 = vsel %vm1843, %v1716, 0.0
      %1920 = vadd.xlane.f32.xlu0 %v1919
      %v1921 = vpop.xlane.xlu0 %1920
      %v1922 = vsel %vm1843, %v1719, 0.0
      %1923 = vadd.xlane.f32.xlu0 %v1922
      %v1924 = vpop.xlane.xlu0 %1923
      %v1925 = vsel %vm1843, %v1721, 0.0
      %1926 = vadd.xlane.f32.xlu0 %v1925
      %v1927 = vpop.xlane.xlu0 %1926
      %v1928 = vsel %vm1843, %v1724, 0.0
      %1929 = vadd.xlane.f32.xlu0 %v1928
      %v1930 = vpop.xlane.xlu0 %1929
      %v1931 = vsel %vm1843, %v1726, 0.0
      %1932 = vadd.xlane.f32.xlu0 %v1931
      %v1933 = vpop.xlane.xlu0 %1932
      %v1934 = vsel %vm1843, %v1729, 0.0
      %1935 = vadd.xlane.f32.xlu0 %v1934
      %v1936 = vpop.xlane.xlu0 %1935
      %v1937 = vsel %vm1843, %v1731, 0.0
      %1938 = vadd.xlane.f32.xlu0 %v1937
      %v1939 = vpop.xlane.xlu0 %1938
      %v1940 = vsel %vm1843, %v1734, 0.0
      %1941 = vadd.xlane.f32.xlu0 %v1940
      %v1942 = vpop.xlane.xlu0 %1941
      %v1943 = vsel %vm1843, %v1736, 0.0
      %1944 = vadd.xlane.f32.xlu0 %v1943
      %v1945 = vpop.xlane.xlu0 %1944
      %v1946 = vsel %vm1843, %v1739, 0.0
      %1947 = vadd.xlane.f32.xlu0 %v1946
      %v1948 = vpop.xlane.xlu0 %1947
      %v1949 = vsel %vm1843, %v1741, 0.0
      %1950 = vadd.xlane.f32.xlu0 %v1949
      %v1951 = vpop.xlane.xlu0 %1950
      %v1952 = vsel %vm1843, %v1744, 0.0
      %1953 = vadd.xlane.f32.xlu0 %v1952
      %v1954 = vpop.xlane.xlu0 %1953
      %v1955 = vsel %vm1843, %v1746, 0.0
      %1956 = vadd.xlane.f32.xlu0 %v1955
      %v1957 = vpop.xlane.xlu0 %1956
      %v1958 = vsel %vm1843, %v1749, 0.0
      %1959 = vadd.xlane.f32.xlu0 %v1958
      %v1960 = vpop.xlane.xlu0 %1959
      %v1961 = vsel %vm1843, %v1751, 0.0
      %1962 = vadd.xlane.f32.xlu0 %v1961
      %v1963 = vpop.xlane.xlu0 %1962
      %v1964 = vsel %vm1843, %v1754, 0.0
      %1965 = vadd.xlane.f32.xlu0 %v1964
      %v1966 = vpop.xlane.xlu0 %1965
      %v1967 = vsel %vm1843, %v1756, 0.0
      %1968 = vadd.xlane.f32.xlu0 %v1967
      %v1969 = vpop.xlane.xlu0 %1968
      %v1970 = vsel %vm1843, %v1759, 0.0
      %1971 = vadd.xlane.f32.xlu0 %v1970
      %v1972 = vpop.xlane.xlu0 %1971
      %v1973 = vsel %vm1843, %v1761, 0.0
      %1974 = vadd.xlane.f32.xlu0 %v1973
      %v1975 = vpop.xlane.xlu0 %1974
      %v1976 = vsel %vm1843, %v1764, 0.0
      %1977 = vadd.xlane.f32.xlu0 %v1976
      %v1978 = vpop.xlane.xlu0 %1977
      %v1979 = vsel %vm1843, %v1766, 0.0
      %1980 = vadd.xlane.f32.xlu0 %v1979
      %v1981 = vpop.xlane.xlu0 %1980
      %v1982 = vsel %vm1843, %v1769, 0.0
      %1983 = vadd.xlane.f32.xlu0 %v1982
      %v1984 = vpop.xlane.xlu0 %1983
      %v1985 = vsel %vm1843, %v1771, 0.0
      %1986 = vadd.xlane.f32.xlu0 %v1985
      %v1987 = vpop.xlane.xlu0 %1986
      %v1988 = vsel %vm1843, %v1774, 0.0
      %1989 = vadd.xlane.f32.xlu0 %v1988
      %v1990 = vpop.xlane.xlu0 %1989
      %v1991 = vsel %vm1843, %v1776, 0.0
      %1992 = vadd.xlane.f32.xlu0 %v1991
      %v1993 = vpop.xlane.xlu0 %1992
      %v1994 = vsel %vm1843, %v1779, 0.0
      %1995 = vadd.xlane.f32.xlu0 %v1994
      %v1996 = vpop.xlane.xlu0 %1995
      %v1997 = vsel %vm1843, %v1781, 0.0
      %1998 = vadd.xlane.f32.xlu0 %v1997
      %v1999 = vpop.xlane.xlu0 %1998
      %v2000 = vsel %vm1843, %v1784, 0.0
      %2001 = vadd.xlane.f32.xlu0 %v2000
      %v2002 = vpop.xlane.xlu0 %2001
      %v2003 = vsel %vm1843, %v1786, 0.0
      %2004 = vadd.xlane.f32.xlu0 %v2003
      %v2005 = vpop.xlane.xlu0 %2004
      %v2006 = vsel %vm1843, %v1789, 0.0
      %2007 = vadd.xlane.f32.xlu0 %v2006
      %v2008 = vpop.xlane.xlu0 %2007
      %v2009 = vsel %vm1843, %v1791, 0.0
      %2010 = vadd.xlane.f32.xlu0 %v2009
      %v2011 = vpop.xlane.xlu0 %2010
      %v2012 = vsel %vm1843, %v1794, 0.0
      %2013 = vadd.xlane.f32.xlu0 %v2012
      %v2014 = vpop.xlane.xlu0 %2013
      %v2015 = vsel %vm1843, %v1796, 0.0
      %2016 = vadd.xlane.f32.xlu0 %v2015
      %v2017 = vpop.xlane.xlu0 %2016
      %v2018 = vsel %vm1843, %v1799, 0.0
      %2019 = vadd.xlane.f32.xlu0 %v2018
      %v2020 = vpop.xlane.xlu0 %2019
      %v2021 = vsel %vm1843, %v1801, 0.0
      %2022 = vadd.xlane.f32.xlu0 %v2021
      %v2023 = vpop.xlane.xlu0 %2022
      %v2024 = vsel %vm1843, %v1804, 0.0
      %2025 = vadd.xlane.f32.xlu0 %v2024
      %v2026 = vpop.xlane.xlu0 %2025
      %v2027 = vsel %vm1843, %v1806, 0.0
      %2028 = vadd.xlane.f32.xlu0 %v2027
      %v2029 = vpop.xlane.xlu0 %2028
      %v2030 = vsel %vm1843, %v1809, 0.0
      %2031 = vadd.xlane.f32.xlu0 %v2030
      %v2032 = vpop.xlane.xlu0 %2031
      %v2033 = vsel %vm1843, %v1811, 0.0
      %2034 = vadd.xlane.f32.xlu0 %v2033
      %v2035 = vpop.xlane.xlu0 %2034
      %v2036 = vsel %vm1843, %v1814, 0.0
      %2037 = vadd.xlane.f32.xlu0 %v2036
      %v2038 = vpop.xlane.xlu0 %2037
      %v2039 = vsel %vm1843, %v1816, 0.0
      %2040 = vadd.xlane.f32.xlu0 %v2039
      %v2041 = vpop.xlane.xlu0 %2040
      %v2042 = vsel %vm1843, %v1819, 0.0
      %2043 = vadd.xlane.f32.xlu0 %v2042
      %v2044 = vpop.xlane.xlu0 %2043
      %v2045 = vsel %vm1843, %v1821, 0.0
      %2046 = vadd.xlane.f32.xlu0 %v2045
      %v2047 = vpop.xlane.xlu0 %2046
      %v2048 = vsel %vm1843, %v1824, 0.0
      %2049 = vadd.xlane.f32.xlu0 %v2048
      %v2050 = vpop.xlane.xlu0 %2049
      %v2051 = vsel %vm1843, %v1826, 0.0
      %2052 = vadd.xlane.f32.xlu0 %v2051
      %v2053 = vpop.xlane.xlu0 %2052
      %v2054 = vsel %vm1843, %v1829, 0.0
      %2055 = vadd.xlane.f32.xlu0 %v2054
      %v2056 = vpop.xlane.xlu0 %2055
      %v2057 = vsel %vm1843, %v1831, 0.0
      %2058 = vadd.xlane.f32.xlu0 %v2057
      %v2059 = vpop.xlane.xlu0 %2058
      %v2060 = vsel %vm1843, %v1834, 0.0
      %2061 = vadd.xlane.f32.xlu0 %v2060
      %v2062 = vpop.xlane.xlu0 %2061
      %v2063 = vsel %vm1843, %v1836, 0.0
      %2064 = vadd.xlane.f32.xlu0 %v2063
      %v2065 = vpop.xlane.xlu0 %2064
      %v2066 = vsel %vm1843, %v1839, 0.0
      %2067 = vadd.xlane.f32.xlu0 %v2066
      %v2068 = vpop.xlane.xlu0 %2067
      %v2069 = vsel %vm1843, %v1841, 0.0
      %2070 = vadd.xlane.f32.xlu0 %v2069
      %v2071 = vpop.xlane.xlu0 %2070
      %v2072 = vmul.f32 %v1654, %v1654
      %v2073 = vmul.f32 %v1656, %v1656
      %v2074 = vmul.f32 %v1659, %v1659
      %v2075 = vmul.f32 %v1661, %v1661
      %v2076 = vmul.f32 %v1664, %v1664
      %v2077 = vmul.f32 %v1666, %v1666
      %v2078 = vmul.f32 %v1669, %v1669
      %v2079 = vmul.f32 %v1671, %v1671
      %v2080 = vmul.f32 %v1674, %v1674
      %v2081 = vmul.f32 %v1676, %v1676
      %v2082 = vmul.f32 %v1679, %v1679
      %v2083 = vmul.f32 %v1681, %v1681
      %v2084 = vmul.f32 %v1684, %v1684
      %v2085 = vmul.f32 %v1686, %v1686
      %v2086 = vmul.f32 %v1689, %v1689
      %v2087 = vmul.f32 %v1691, %v1691
      %v2088 = vmul.f32 %v1694, %v1694
      %v2089 = vmul.f32 %v1696, %v1696
      %v2090 = vmul.f32 %v1699, %v1699
      %v2091 = vmul.f32 %v1701, %v1701
      %v2092 = vmul.f32 %v1704, %v1704
      %v2093 = vmul.f32 %v1706, %v1706
      %v2094 = vmul.f32 %v1709, %v1709
      %v2095 = vmul.f32 %v1711, %v1711
      %v2096 = vmul.f32 %v1714, %v1714
      %v2097 = vmul.f32 %v1716, %v1716
      %v2098 = vmul.f32 %v1719, %v1719
      %v2099 = vmul.f32 %v1721, %v1721
      %v2100 = vmul.f32 %v1724, %v1724
      %v2101 = vmul.f32 %v1726, %v1726
      %v2102 = vmul.f32 %v1729, %v1729
      %v2103 = vmul.f32 %v1731, %v1731
      %v2104 = vmul.f32 %v1734, %v1734
      %v2105 = vmul.f32 %v1736, %v1736
      %v2106 = vmul.f32 %v1739, %v1739
      %v2107 = vmul.f32 %v1741, %v1741
      %v2108 = vmul.f32 %v1744, %v1744
      %v2109 = vmul.f32 %v1746, %v1746
      %v2110 = vmul.f32 %v1749, %v1749
      %v2111 = vmul.f32 %v1751, %v1751
      %v2112 = vmul.f32 %v1754, %v1754
      %v2113 = vmul.f32 %v1756, %v1756
      %v2114 = vmul.f32 %v1759, %v1759
      %v2115 = vmul.f32 %v1761, %v1761
      %v2116 = vmul.f32 %v1764, %v1764
      %v2117 = vmul.f32 %v1766, %v1766
      %v2118 = vmul.f32 %v1769, %v1769
      %v2119 = vmul.f32 %v1771, %v1771
      %v2120 = vmul.f32 %v1774, %v1774
      %v2121 = vmul.f32 %v1776, %v1776
      %v2122 = vmul.f32 %v1779, %v1779
      %v2123 = vmul.f32 %v1781, %v1781
      %v2124 = vmul.f32 %v1784, %v1784
      %v2125 = vmul.f32 %v1786, %v1786
      %v2126 = vmul.f32 %v1789, %v1789
      %v2127 = vmul.f32 %v1791, %v1791
      %v2128 = vmul.f32 %v1794, %v1794
      %v2129 = vmul.f32 %v1796, %v1796
      %v2130 = vmul.f32 %v1799, %v1799
      %v2131 = vmul.f32 %v1801, %v1801
      %v2132 = vmul.f32 %v1804, %v1804
      %v2133 = vmul.f32 %v1806, %v1806
      %v2134 = vmul.f32 %v1809, %v1809
      %v2135 = vmul.f32 %v1811, %v1811
      %v2136 = vmul.f32 %v1814, %v1814
      %v2137 = vmul.f32 %v1816, %v1816
      %v2138 = vmul.f32 %v1819, %v1819
      %v2139 = vmul.f32 %v1821, %v1821
      %v2140 = vmul.f32 %v1824, %v1824
      %v2141 = vmul.f32 %v1826, %v1826
      %v2142 = vmul.f32 %v1829, %v1829
      %v2143 = vmul.f32 %v1831, %v1831
      %v2144 = vmul.f32 %v1834, %v1834
      %v2145 = vmul.f32 %v1836, %v1836
      %v2146 = vmul.f32 %v1839, %v1839
      %v2147 = vmul.f32 %v1841, %v1841
      %v2148 = vsel %vm1843, %v2072, 0.0
      %2149 = vadd.xlane.f32.xlu0 %v2148
      %v2150 = vpop.xlane.xlu0 %2149
      %v2151 = vsel %vm1843, %v2073, 0.0
      %2152 = vadd.xlane.f32.xlu0 %v2151
      %v2153 = vpop.xlane.xlu0 %2152
      %v2154 = vsel %vm1843, %v2074, 0.0
      %2155 = vadd.xlane.f32.xlu0 %v2154
      %v2156 = vpop.xlane.xlu0 %2155
      %v2157 = vsel %vm1843, %v2075, 0.0
      %2158 = vadd.xlane.f32.xlu0 %v2157
      %v2159 = vpop.xlane.xlu0 %2158
      %v2160 = vsel %vm1843, %v2076, 0.0
      %2161 = vadd.xlane.f32.xlu0 %v2160
      %v2162 = vpop.xlane.xlu0 %2161
      %v2163 = vsel %vm1843, %v2077, 0.0
      %2164 = vadd.xlane.f32.xlu0 %v2163
      %v2165 = vpop.xlane.xlu0 %2164
      %v2166 = vsel %vm1843, %v2078, 0.0
      %2167 = vadd.xlane.f32.xlu0 %v2166
      %v2168 = vpop.xlane.xlu0 %2167
      %v2169 = vsel %vm1843, %v2079, 0.0
      %2170 = vadd.xlane.f32.xlu0 %v2169
      %v2171 = vpop.xlane.xlu0 %2170
      %v2172 = vsel %vm1843, %v2080, 0.0
      %2173 = vadd.xlane.f32.xlu0 %v2172
      %v2174 = vpop.xlane.xlu0 %2173
      %v2175 = vsel %vm1843, %v2081, 0.0
      %2176 = vadd.xlane.f32.xlu0 %v2175
      %v2177 = vpop.xlane.xlu0 %2176
      %v2178 = vsel %vm1843, %v2082, 0.0
      %2179 = vadd.xlane.f32.xlu0 %v2178
      %v2180 = vpop.xlane.xlu0 %2179
      %v2181 = vsel %vm1843, %v2083, 0.0
      %2182 = vadd.xlane.f32.xlu0 %v2181
      %v2183 = vpop.xlane.xlu0 %2182
      %v2184 = vsel %vm1843, %v2084, 0.0
      %2185 = vadd.xlane.f32.xlu0 %v2184
      %v2186 = vpop.xlane.xlu0 %2185
      %v2187 = vsel %vm1843, %v2085, 0.0
      %2188 = vadd.xlane.f32.xlu0 %v2187
      %v2189 = vpop.xlane.xlu0 %2188
      %v2190 = vsel %vm1843, %v2086, 0.0
      %2191 = vadd.xlane.f32.xlu0 %v2190
      %v2192 = vpop.xlane.xlu0 %2191
      %v2193 = vsel %vm1843, %v2087, 0.0
      %2194 = vadd.xlane.f32.xlu0 %v2193
      %v2195 = vpop.xlane.xlu0 %2194
      %v2196 = vsel %vm1843, %v2088, 0.0
      %2197 = vadd.xlane.f32.xlu0 %v2196
      %v2198 = vpop.xlane.xlu0 %2197
      %v2199 = vsel %vm1843, %v2089, 0.0
      %2200 = vadd.xlane.f32.xlu0 %v2199
      %v2201 = vpop.xlane.xlu0 %2200
      %v2202 = vsel %vm1843, %v2090, 0.0
      %2203 = vadd.xlane.f32.xlu0 %v2202
      %v2204 = vpop.xlane.xlu0 %2203
      %v2205 = vsel %vm1843, %v2091, 0.0
      %2206 = vadd.xlane.f32.xlu0 %v2205
      %v2207 = vpop.xlane.xlu0 %2206
      %v2208 = vsel %vm1843, %v2092, 0.0
      %2209 = vadd.xlane.f32.xlu0 %v2208
      %v2210 = vpop.xlane.xlu0 %2209
      %v2211 = vsel %vm1843, %v2093, 0.0
      %2212 = vadd.xlane.f32.xlu0 %v2211
      %v2213 = vpop.xlane.xlu0 %2212
      %v2214 = vsel %vm1843, %v2094, 0.0
      %2215 = vadd.xlane.f32.xlu0 %v2214
      %v2216 = vpop.xlane.xlu0 %2215
      %v2217 = vsel %vm1843, %v2095, 0.0
      %2218 = vadd.xlane.f32.xlu0 %v2217
      %v2219 = vpop.xlane.xlu0 %2218
      %v2220 = vsel %vm1843, %v2096, 0.0
      %2221 = vadd.xlane.f32.xlu0 %v2220
      %v2222 = vpop.xlane.xlu0 %2221
      %v2223 = vsel %vm1843, %v2097, 0.0
      %2224 = vadd.xlane.f32.xlu0 %v2223
      %v2225 = vpop.xlane.xlu0 %2224
      %v2226 = vsel %vm1843, %v2098, 0.0
      %2227 = vadd.xlane.f32.xlu0 %v2226
      %v2228 = vpop.xlane.xlu0 %2227
      %v2229 = vsel %vm1843, %v2099, 0.0
      %2230 = vadd.xlane.f32.xlu0 %v2229
      %v2231 = vpop.xlane.xlu0 %2230
      %v2232 = vsel %vm1843, %v2100, 0.0
      %2233 = vadd.xlane.f32.xlu0 %v2232
      %v2234 = vpop.xlane.xlu0 %2233
      %v2235 = vsel %vm1843, %v2101, 0.0
      %2236 = vadd.xlane.f32.xlu0 %v2235
      %v2237 = vpop.xlane.xlu0 %2236
      %v2238 = vsel %vm1843, %v2102, 0.0
      %2239 = vadd.xlane.f32.xlu0 %v2238
      %v2240 = vpop.xlane.xlu0 %2239
      %v2241 = vsel %vm1843, %v2103, 0.0
      %2242 = vadd.xlane.f32.xlu0 %v2241
      %v2243 = vpop.xlane.xlu0 %2242
      %v2244 = vsel %vm1843, %v2104, 0.0
      %2245 = vadd.xlane.f32.xlu0 %v2244
      %v2246 = vpop.xlane.xlu0 %2245
      %v2247 = vsel %vm1843, %v2105, 0.0
      %2248 = vadd.xlane.f32.xlu0 %v2247
      %v2249 = vpop.xlane.xlu0 %2248
      %v2250 = vsel %vm1843, %v2106, 0.0
      %2251 = vadd.xlane.f32.xlu0 %v2250
      %v2252 = vpop.xlane.xlu0 %2251
      %v2253 = vsel %vm1843, %v2107, 0.0
      %2254 = vadd.xlane.f32.xlu0 %v2253
      %v2255 = vpop.xlane.xlu0 %2254
      %v2256 = vsel %vm1843, %v2108, 0.0
      %2257 = vadd.xlane.f32.xlu0 %v2256
      %v2258 = vpop.xlane.xlu0 %2257
      %v2259 = vsel %vm1843, %v2109, 0.0
      %2260 = vadd.xlane.f32.xlu0 %v2259
      %v2261 = vpop.xlane.xlu0 %2260
      %v2262 = vsel %vm1843, %v2110, 0.0
      %2263 = vadd.xlane.f32.xlu0 %v2262
      %v2264 = vpop.xlane.xlu0 %2263
      %v2265 = vsel %vm1843, %v2111, 0.0
      %2266 = vadd.xlane.f32.xlu0 %v2265
      %v2267 = vpop.xlane.xlu0 %2266
      %v2268 = vsel %vm1843, %v2112, 0.0
      %2269 = vadd.xlane.f32.xlu0 %v2268
      %v2270 = vpop.xlane.xlu0 %2269
      %v2271 = vsel %vm1843, %v2113, 0.0
      %2272 = vadd.xlane.f32.xlu0 %v2271
      %v2273 = vpop.xlane.xlu0 %2272
      %v2274 = vsel %vm1843, %v2114, 0.0
      %2275 = vadd.xlane.f32.xlu0 %v2274
      %v2276 = vpop.xlane.xlu0 %2275
      %v2277 = vsel %vm1843, %v2115, 0.0
      %2278 = vadd.xlane.f32.xlu0 %v2277
      %v2279 = vpop.xlane.xlu0 %2278
      %v2280 = vsel %vm1843, %v2116, 0.0
      %2281 = vadd.xlane.f32.xlu0 %v2280
      %v2282 = vpop.xlane.xlu0 %2281
      %v2283 = vsel %vm1843, %v2117, 0.0
      %2284 = vadd.xlane.f32.xlu0 %v2283
      %v2285 = vpop.xlane.xlu0 %2284
      %v2286 = vsel %vm1843, %v2118, 0.0
      %2287 = vadd.xlane.f32.xlu0 %v2286
      %v2288 = vpop.xlane.xlu0 %2287
      %v2289 = vsel %vm1843, %v2119, 0.0
      %2290 = vadd.xlane.f32.xlu0 %v2289
      %v2291 = vpop.xlane.xlu0 %2290
      %v2292 = vsel %vm1843, %v2120, 0.0
      %2293 = vadd.xlane.f32.xlu0 %v2292
      %v2294 = vpop.xlane.xlu0 %2293
      %v2295 = vsel %vm1843, %v2121, 0.0
      %2296 = vadd.xlane.f32.xlu0 %v2295
      %v2297 = vpop.xlane.xlu0 %2296
      %v2298 = vsel %vm1843, %v2122, 0.0
      %2299 = vadd.xlane.f32.xlu0 %v2298
      %v2300 = vpop.xlane.xlu0 %2299
      %v2301 = vsel %vm1843, %v2123, 0.0
      %2302 = vadd.xlane.f32.xlu0 %v2301
      %v2303 = vpop.xlane.xlu0 %2302
      %v2304 = vsel %vm1843, %v2124, 0.0
      %2305 = vadd.xlane.f32.xlu0 %v2304
      %v2306 = vpop.xlane.xlu0 %2305
      %v2307 = vsel %vm1843, %v2125, 0.0
      %2308 = vadd.xlane.f32.xlu0 %v2307
      %v2309 = vpop.xlane.xlu0 %2308
      %v2310 = vsel %vm1843, %v2126, 0.0
      %2311 = vadd.xlane.f32.xlu0 %v2310
      %v2312 = vpop.xlane.xlu0 %2311
      %v2313 = vsel %vm1843, %v2127, 0.0
      %2314 = vadd.xlane.f32.xlu0 %v2313
      %v2315 = vpop.xlane.xlu0 %2314
      %v2316 = vsel %vm1843, %v2128, 0.0
      %2317 = vadd.xlane.f32.xlu0 %v2316
      %v2318 = vpop.xlane.xlu0 %2317
      %v2319 = vsel %vm1843, %v2129, 0.0
      %2320 = vadd.xlane.f32.xlu0 %v2319
      %v2321 = vpop.xlane.xlu0 %2320
      %v2322 = vsel %vm1843, %v2130, 0.0
      %2323 = vadd.xlane.f32.xlu0 %v2322
      %v2324 = vpop.xlane.xlu0 %2323
      %v2325 = vsel %vm1843, %v2131, 0.0
      %2326 = vadd.xlane.f32.xlu0 %v2325
      %v2327 = vpop.xlane.xlu0 %2326
      %v2328 = vsel %vm1843, %v2132, 0.0
      %2329 = vadd.xlane.f32.xlu0 %v2328
      %v2330 = vpop.xlane.xlu0 %2329
      %v2331 = vsel %vm1843, %v2133, 0.0
      %2332 = vadd.xlane.f32.xlu0 %v2331
      %v2333 = vpop.xlane.xlu0 %2332
      %v2334 = vsel %vm1843, %v2134, 0.0
      %2335 = vadd.xlane.f32.xlu0 %v2334
      %v2336 = vpop.xlane.xlu0 %2335
      %v2337 = vsel %vm1843, %v2135, 0.0
      %2338 = vadd.xlane.f32.xlu0 %v2337
      %v2339 = vpop.xlane.xlu0 %2338
      %v2340 = vsel %vm1843, %v2136, 0.0
      %2341 = vadd.xlane.f32.xlu0 %v2340
      %v2342 = vpop.xlane.xlu0 %2341
      %v2343 = vsel %vm1843, %v2137, 0.0
      %2344 = vadd.xlane.f32.xlu0 %v2343
      %v2345 = vpop.xlane.xlu0 %2344
      %v2346 = vsel %vm1843, %v2138, 0.0
      %2347 = vadd.xlane.f32.xlu0 %v2346
      %v2348 = vpop.xlane.xlu0 %2347
      %v2349 = vsel %vm1843, %v2139, 0.0
      %2350 = vadd.xlane.f32.xlu0 %v2349
      %v2351 = vpop.xlane.xlu0 %2350
      %v2352 = vsel %vm1843, %v2140, 0.0
      %2353 = vadd.xlane.f32.xlu0 %v2352
      %v2354 = vpop.xlane.xlu0 %2353
      %v2355 = vsel %vm1843, %v2141, 0.0
      %2356 = vadd.xlane.f32.xlu0 %v2355
      %v2357 = vpop.xlane.xlu0 %2356
      %v2358 = vsel %vm1843, %v2142, 0.0
      %2359 = vadd.xlane.f32.xlu0 %v2358
      %v2360 = vpop.xlane.xlu0 %2359
      %v2361 = vsel %vm1843, %v2143, 0.0
      %2362 = vadd.xlane.f32.xlu0 %v2361
      %v2363 = vpop.xlane.xlu0 %2362
      %v2364 = vsel %vm1843, %v2144, 0.0
      %2365 = vadd.xlane.f32.xlu0 %v2364
      %v2366 = vpop.xlane.xlu0 %2365
      %v2367 = vsel %vm1843, %v2145, 0.0
      %2368 = vadd.xlane.f32.xlu0 %v2367
      %v2369 = vpop.xlane.xlu0 %2368
      %v2370 = vsel %vm1843, %v2146, 0.0
      %2371 = vadd.xlane.f32.xlu0 %v2370
      %v2372 = vpop.xlane.xlu0 %2371
      %v2373 = vsel %vm1843, %v2147, 0.0
      %2374 = vadd.xlane.f32.xlu0 %v2373
      %v2375 = vpop.xlane.xlu0 %2374
      %v2376 = vmul.f32 %v1846, 0.020408163
      %v2377 = vmul.f32 %v1849, 0.020408163
      %v2378 = vmul.f32 %v1852, 0.020408163
      %v2379 = vmul.f32 %v1855, 0.020408163
      %v2380 = vmul.f32 %v1858, 0.020408163
      %v2381 = vmul.f32 %v1861, 0.020408163
      %v2382 = vmul.f32 %v1864, 0.020408163
      %v2383 = vmul.f32 %v1867, 0.020408163
      %v2384 = vmul.f32 %v1870, 0.020408163
      %v2385 = vmul.f32 %v1873, 0.020408163
      %v2386 = vmul.f32 %v1876, 0.020408163
      %v2387 = vmul.f32 %v1879, 0.020408163
      %v2388 = vmul.f32 %v1882, 0.020408163
      %v2389 = vmul.f32 %v1885, 0.020408163
      %v2390 = vmul.f32 %v1888, 0.020408163
      %v2391 = vmul.f32 %v1891, 0.020408163
      %v2392 = vmul.f32 %v1894, 0.020408163
      %v2393 = vmul.f32 %v1897, 0.020408163
      %v2394 = vmul.f32 %v1900, 0.020408163
      %v2395 = vmul.f32 %v1903, 0.020408163
      %v2396 = vmul.f32 %v1906, 0.020408163
      %v2397 = vmul.f32 %v1909, 0.020408163
      %v2398 = vmul.f32 %v1912, 0.020408163
      %v2399 = vmul.f32 %v1915, 0.020408163
      %v2400 = vmul.f32 %v1918, 0.020408163
      %v2401 = vmul.f32 %v1921, 0.020408163
      %v2402 = vmul.f32 %v1924, 0.020408163
      %v2403 = vmul.f32 %v1927, 0.020408163
      %v2404 = vmul.f32 %v1930, 0.020408163
      %v2405 = vmul.f32 %v1933, 0.020408163
      %v2406 = vmul.f32 %v1936, 0.020408163
      %v2407 = vmul.f32 %v1939, 0.020408163
      %v2408 = vmul.f32 %v1942, 0.020408163
      %v2409 = vmul.f32 %v1945, 0.020408163
      %v2410 = vmul.f32 %v1948, 0.020408163
      %v2411 = vmul.f32 %v1951, 0.020408163
      %v2412 = vmul.f32 %v1954, 0.020408163
      %v2413 = vmul.f32 %v1957, 0.020408163
      %v2414 = vmul.f32 %v1960, 0.020408163
      %v2415 = vmul.f32 %v1963, 0.020408163
      %v2416 = vmul.f32 %v1966, 0.020408163
      %v2417 = vmul.f32 %v1969, 0.020408163
      %v2418 = vmul.f32 %v1972, 0.020408163
      %v2419 = vmul.f32 %v1975, 0.020408163
      %v2420 = vmul.f32 %v1978, 0.020408163
      %v2421 = vmul.f32 %v1981, 0.020408163
      %v2422 = vmul.f32 %v1984, 0.020408163
      %v2423 = vmul.f32 %v1987, 0.020408163
      %v2424 = vmul.f32 %v1990, 0.020408163
      %v2425 = vmul.f32 %v1993, 0.020408163
      %v2426 = vmul.f32 %v1996, 0.020408163
      %v2427 = vmul.f32 %v1999, 0.020408163
      %v2428 = vmul.f32 %v2002, 0.020408163
      %v2429 = vmul.f32 %v2005, 0.020408163
      %v2430 = vmul.f32 %v2008, 0.020408163
      %v2431 = vmul.f32 %v2011, 0.020408163
      %v2432 = vmul.f32 %v2014, 0.020408163
      %v2433 = vmul.f32 %v2017, 0.020408163
      %v2434 = vmul.f32 %v2020, 0.020408163
      %v2435 = vmul.f32 %v2023, 0.020408163
      %v2436 = vmul.f32 %v2026, 0.020408163
      %v2437 = vmul.f32 %v2029, 0.020408163
      %v2438 = vmul.f32 %v2032, 0.020408163
      %v2439 = vmul.f32 %v2035, 0.020408163
      %v2440 = vmul.f32 %v2038, 0.020408163
      %v2441 = vmul.f32 %v2041, 0.020408163
      %v2442 = vmul.f32 %v2044, 0.020408163
      %v2443 = vmul.f32 %v2047, 0.020408163
      %v2444 = vmul.f32 %v2050, 0.020408163
      %v2445 = vmul.f32 %v2053, 0.020408163
      %v2446 = vmul.f32 %v2056, 0.020408163
      %v2447 = vmul.f32 %v2059, 0.020408163
      %v2448 = vmul.f32 %v2062, 0.020408163
      %v2449 = vmul.f32 %v2065, 0.020408163
      %v2450 = vmul.f32 %v2068, 0.020408163
      %v2451 = vmul.f32 %v2071, 0.020408163
      %v2452 = vmul.f32 %v2150, 0.020408163
      %v2453 = vmul.f32 %v2153, 0.020408163
      %v2454 = vmul.f32 %v2156, 0.020408163
      %v2455 = vmul.f32 %v2159, 0.020408163
      %v2456 = vmul.f32 %v2162, 0.020408163
      %v2457 = vmul.f32 %v2165, 0.020408163
      %v2458 = vmul.f32 %v2168, 0.020408163
      %v2459 = vmul.f32 %v2171, 0.020408163
      %v2460 = vmul.f32 %v2174, 0.020408163
      %v2461 = vmul.f32 %v2177, 0.020408163
      %v2462 = vmul.f32 %v2180, 0.020408163
      %v2463 = vmul.f32 %v2183, 0.020408163
      %v2464 = vmul.f32 %v2186, 0.020408163
      %v2465 = vmul.f32 %v2189, 0.020408163
      %v2466 = vmul.f32 %v2192, 0.020408163
      %v2467 = vmul.f32 %v2195, 0.020408163
      %v2468 = vmul.f32 %v2198, 0.020408163
      %v2469 = vmul.f32 %v2201, 0.020408163
      %v2470 = vmul.f32 %v2204, 0.020408163
      %v2471 = vmul.f32 %v2207, 0.020408163
      %v2472 = vmul.f32 %v2210, 0.020408163
      %v2473 = vmul.f32 %v2213, 0.020408163
      %v2474 = vmul.f32 %v2216, 0.020408163
      %v2475 = vmul.f32 %v2219, 0.020408163
      %v2476 = vmul.f32 %v2222, 0.020408163
      %v2477 = vmul.f32 %v2225, 0.020408163
      %v2478 = vmul.f32 %v2228, 0.020408163
      %v2479 = vmul.f32 %v2231, 0.020408163
      %v2480 = vmul.f32 %v2234, 0.020408163
      %v2481 = vmul.f32 %v2237, 0.020408163
      %v2482 = vmul.f32 %v2240, 0.020408163
      %v2483 = vmul.f32 %v2243, 0.020408163
      %v2484 = vmul.f32 %v2246, 0.020408163
      %v2485 = vmul.f32 %v2249, 0.020408163
      %v2486 = vmul.f32 %v2252, 0.020408163
      %v2487 = vmul.f32 %v2255, 0.020408163
      %v2488 = vmul.f32 %v2258, 0.020408163
      %v2489 = vmul.f32 %v2261, 0.020408163
      %v2490 = vmul.f32 %v2264, 0.020408163
      %v2491 = vmul.f32 %v2267, 0.020408163
      %v2492 = vmul.f32 %v2270, 0.020408163
      %v2493 = vmul.f32 %v2273, 0.020408163
      %v2494 = vmul.f32 %v2276, 0.020408163
      %v2495 = vmul.f32 %v2279, 0.020408163
      %v2496 = vmul.f32 %v2282, 0.020408163
      %v2497 = vmul.f32 %v2285, 0.020408163
      %v2498 = vmul.f32 %v2288, 0.020408163
      %v2499 = vmul.f32 %v2291, 0.020408163
      %v2500 = vmul.f32 %v2294, 0.020408163
      %v2501 = vmul.f32 %v2297, 0.020408163
      %v2502 = vmul.f32 %v2300, 0.020408163
      %v2503 = vmul.f32 %v2303, 0.020408163
      %v2504 = vmul.f32 %v2306, 0.020408163
      %v2505 = vmul.f32 %v2309, 0.020408163
      %v2506 = vmul.f32 %v2312, 0.020408163
      %v2507 = vmul.f32 %v2315, 0.020408163
      %v2508 = vmul.f32 %v2318, 0.020408163
      %v2509 = vmul.f32 %v2321, 0.020408163
      %v2510 = vmul.f32 %v2324, 0.020408163
      %v2511 = vmul.f32 %v2327, 0.020408163
      %v2512 = vmul.f32 %v2330, 0.020408163
      %v2513 = vmul.f32 %v2333, 0.020408163
      %v2514 = vmul.f32 %v2336, 0.020408163
      %v2515 = vmul.f32 %v2339, 0.020408163
      %v2516 = vmul.f32 %v2342, 0.020408163
      %v2517 = vmul.f32 %v2345, 0.020408163
      %v2518 = vmul.f32 %v2348, 0.020408163
      %v2519 = vmul.f32 %v2351, 0.020408163
      %v2520 = vmul.f32 %v2354, 0.020408163
      %v2521 = vmul.f32 %v2357, 0.020408163
      %v2522 = vmul.f32 %v2360, 0.020408163
      %v2523 = vmul.f32 %v2363, 0.020408163
      %v2524 = vmul.f32 %v2366, 0.020408163
      %v2525 = vmul.f32 %v2369, 0.020408163
      %v2526 = vmul.f32 %v2372, 0.020408163
      %v2527 = vmul.f32 %v2375, 0.020408163
      %v2528 = vmul.f32 %v2376, %v2376
      %v2529 = vmul.f32 %v2377, %v2377
      %v2530 = vmul.f32 %v2378, %v2378
      %v2531 = vmul.f32 %v2379, %v2379
      %v2532 = vmul.f32 %v2380, %v2380
      %v2533 = vmul.f32 %v2381, %v2381
      %v2534 = vmul.f32 %v2382, %v2382
      %v2535 = vmul.f32 %v2383, %v2383
      %v2536 = vmul.f32 %v2384, %v2384
      %v2537 = vmul.f32 %v2385, %v2385
      %v2538 = vmul.f32 %v2386, %v2386
      %v2539 = vmul.f32 %v2387, %v2387
      %v2540 = vmul.f32 %v2388, %v2388
      %v2541 = vmul.f32 %v2389, %v2389
      %v2542 = vmul.f32 %v2390, %v2390
      %v2543 = vmul.f32 %v2391, %v2391
      %v2544 = vmul.f32 %v2392, %v2392
      %v2545 = vmul.f32 %v2393, %v2393
      %v2546 = vmul.f32 %v2394, %v2394
      %v2547 = vmul.f32 %v2395, %v2395
      %v2548 = vmul.f32 %v2396, %v2396
      %v2549 = vmul.f32 %v2397, %v2397
      %v2550 = vmul.f32 %v2398, %v2398
      %v2551 = vmul.f32 %v2399, %v2399
      %v2552 = vmul.f32 %v2400, %v2400
      %v2553 = vmul.f32 %v2401, %v2401
      %v2554 = vmul.f32 %v2402, %v2402
      %v2555 = vmul.f32 %v2403, %v2403
      %v2556 = vmul.f32 %v2404, %v2404
      %v2557 = vmul.f32 %v2405, %v2405
      %v2558 = vmul.f32 %v2406, %v2406
      %v2559 = vmul.f32 %v2407, %v2407
      %v2560 = vmul.f32 %v2408, %v2408
      %v2561 = vmul.f32 %v2409, %v2409
      %v2562 = vmul.f32 %v2410, %v2410
      %v2563 = vmul.f32 %v2411, %v2411
      %v2564 = vmul.f32 %v2412, %v2412
      %v2565 = vmul.f32 %v2413, %v2413
      %v2566 = vmul.f32 %v2414, %v2414
      %v2567 = vmul.f32 %v2415, %v2415
      %v2568 = vmul.f32 %v2416, %v2416
      %v2569 = vmul.f32 %v2417, %v2417
      %v2570 = vmul.f32 %v2418, %v2418
      %v2571 = vmul.f32 %v2419, %v2419
      %v2572 = vmul.f32 %v2420, %v2420
      %v2573 = vmul.f32 %v2421, %v2421
      %v2574 = vmul.f32 %v2422, %v2422
      %v2575 = vmul.f32 %v2423, %v2423
      %v2576 = vmul.f32 %v2424, %v2424
      %v2577 = vmul.f32 %v2425, %v2425
      %v2578 = vmul.f32 %v2426, %v2426
      %v2579 = vmul.f32 %v2427, %v2427
      %v2580 = vmul.f32 %v2428, %v2428
      %v2581 = vmul.f32 %v2429, %v2429
      %v2582 = vmul.f32 %v2430, %v2430
      %v2583 = vmul.f32 %v2431, %v2431
      %v2584 = vmul.f32 %v2432, %v2432
      %v2585 = vmul.f32 %v2433, %v2433
      %v2586 = vmul.f32 %v2434, %v2434
      %v2587 = vmul.f32 %v2435, %v2435
      %v2588 = vmul.f32 %v2436, %v2436
      %v2589 = vmul.f32 %v2437, %v2437
      %v2590 = vmul.f32 %v2438, %v2438
      %v2591 = vmul.f32 %v2439, %v2439
      %v2592 = vmul.f32 %v2440, %v2440
      %v2593 = vmul.f32 %v2441, %v2441
      %v2594 = vmul.f32 %v2442, %v2442
      %v2595 = vmul.f32 %v2443, %v2443
      %v2596 = vmul.f32 %v2444, %v2444
      %v2597 = vmul.f32 %v2445, %v2445
      %v2598 = vmul.f32 %v2446, %v2446
      %v2599 = vmul.f32 %v2447, %v2447
      %v2600 = vmul.f32 %v2448, %v2448
      %v2601 = vmul.f32 %v2449, %v2449
      %v2602 = vmul.f32 %v2450, %v2450
      %v2603 = vmul.f32 %v2451, %v2451
      %v2604 = vsub.f32 %v2452, %v2528
      %v2605 = vsub.f32 %v2453, %v2529
      %v2606 = vsub.f32 %v2454, %v2530
      %v2607 = vsub.f32 %v2455, %v2531
      %v2608 = vsub.f32 %v2456, %v2532
      %v2609 = vsub.f32 %v2457, %v2533
      %v2610 = vsub.f32 %v2458, %v2534
      %v2611 = vsub.f32 %v2459, %v2535
      %v2612 = vsub.f32 %v2460, %v2536
      %v2613 = vsub.f32 %v2461, %v2537
      %v2614 = vsub.f32 %v2462, %v2538
      %v2615 = vsub.f32 %v2463, %v2539
      %v2616 = vsub.f32 %v2464, %v2540
      %v2617 = vsub.f32 %v2465, %v2541
      %v2618 = vsub.f32 %v2466, %v2542
      %v2619 = vsub.f32 %v2467, %v2543
      %v2620 = vsub.f32 %v2468, %v2544
      %v2621 = vsub.f32 %v2469, %v2545
      %v2622 = vsub.f32 %v2470, %v2546
      %v2623 = vsub.f32 %v2471, %v2547
      %v2624 = vsub.f32 %v2472, %v2548
      %v2625 = vsub.f32 %v2473, %v2549
      %v2626 = vsub.f32 %v2474, %v2550
      %v2627 = vsub.f32 %v2475, %v2551
      %v2628 = vsub.f32 %v2476, %v2552
      %v2629 = vsub.f32 %v2477, %v2553
      %v2630 = vsub.f32 %v2478, %v2554
      %v2631 = vsub.f32 %v2479, %v2555
      %v2632 = vsub.f32 %v2480, %v2556
      %v2633 = vsub.f32 %v2481, %v2557
      %v2634 = vsub.f32 %v2482, %v2558
      %v2635 = vsub.f32 %v2483, %v2559
      %v2636 = vsub.f32 %v2484, %v2560
      %v2637 = vsub.f32 %v2485, %v2561
      %v2638 = vsub.f32 %v2486, %v2562
      %v2639 = vsub.f32 %v2487, %v2563
      %v2640 = vsub.f32 %v2488, %v2564
      %v2641 = vsub.f32 %v2489, %v2565
      %v2642 = vsub.f32 %v2490, %v2566
      %v2643 = vsub.f32 %v2491, %v2567
      %v2644 = vsub.f32 %v2492, %v2568
      %v2645 = vsub.f32 %v2493, %v2569
      %v2646 = vsub.f32 %v2494, %v2570
      %v2647 = vsub.f32 %v2495, %v2571
      %v2648 = vsub.f32 %v2496, %v2572
      %v2649 = vsub.f32 %v2497, %v2573
      %v2650 = vsub.f32 %v2498, %v2574
      %v2651 = vsub.f32 %v2499, %v2575
      %v2652 = vsub.f32 %v2500, %v2576
      %v2653 = vsub.f32 %v2501, %v2577
      %v2654 = vsub.f32 %v2502, %v2578
      %v2655 = vsub.f32 %v2503, %v2579
      %v2656 = vsub.f32 %v2504, %v2580
      %v2657 = vsub.f32 %v2505, %v2581
      %v2658 = vsub.f32 %v2506, %v2582
      %v2659 = vsub.f32 %v2507, %v2583
      %v2660 = vsub.f32 %v2508, %v2584
      %v2661 = vsub.f32 %v2509, %v2585
      %v2662 = vsub.f32 %v2510, %v2586
      %v2663 = vsub.f32 %v2511, %v2587
      %v2664 = vsub.f32 %v2512, %v2588
      %v2665 = vsub.f32 %v2513, %v2589
      %v2666 = vsub.f32 %v2514, %v2590
      %v2667 = vsub.f32 %v2515, %v2591
      %v2668 = vsub.f32 %v2516, %v2592
      %v2669 = vsub.f32 %v2517, %v2593
      %v2670 = vsub.f32 %v2518, %v2594
      %v2671 = vsub.f32 %v2519, %v2595
      %v2672 = vsub.f32 %v2520, %v2596
      %v2673 = vsub.f32 %v2521, %v2597
      %v2674 = vsub.f32 %v2522, %v2598
      %v2675 = vsub.f32 %v2523, %v2599
      %v2676 = vsub.f32 %v2524, %v2600
      %v2677 = vsub.f32 %v2525, %v2601
      %v2678 = vsub.f32 %v2526, %v2602
      %v2679 = vsub.f32 %v2527, %v2603
      %v2680 = vadd.f32 %v2604, 0.001
      %v2681 = vadd.f32 %v2605, 0.001
      %v2682 = vadd.f32 %v2606, 0.001
      %v2683 = vadd.f32 %v2607, 0.001
      %v2684 = vadd.f32 %v2608, 0.001
      %v2685 = vadd.f32 %v2609, 0.001
      %v2686 = vadd.f32 %v2610, 0.001
      %v2687 = vadd.f32 %v2611, 0.001
      %v2688 = vadd.f32 %v2612, 0.001
      %v2689 = vadd.f32 %v2613, 0.001
      %v2690 = vadd.f32 %v2614, 0.001
      %v2691 = vadd.f32 %v2615, 0.001
      %v2692 = vadd.f32 %v2616, 0.001
      %v2693 = vadd.f32 %v2617, 0.001
      %v2694 = vadd.f32 %v2618, 0.001
      %v2695 = vadd.f32 %v2619, 0.001
      %v2696 = vadd.f32 %v2620, 0.001
      %v2697 = vadd.f32 %v2621, 0.001
      %v2698 = vadd.f32 %v2622, 0.001
      %v2699 = vadd.f32 %v2623, 0.001
      %v2700 = vadd.f32 %v2624, 0.001
      %v2701 = vadd.f32 %v2625, 0.001
      %v2702 = vadd.f32 %v2626, 0.001
      %v2703 = vadd.f32 %v2627, 0.001
      %v2704 = vadd.f32 %v2628, 0.001
      %v2705 = vadd.f32 %v2629, 0.001
      %v2706 = vadd.f32 %v2630, 0.001
      %v2707 = vadd.f32 %v2631, 0.001
      %v2708 = vadd.f32 %v2632, 0.001
      %v2709 = vadd.f32 %v2633, 0.001
      %v2710 = vadd.f32 %v2634, 0.001
      %v2711 = vadd.f32 %v2635, 0.001
      %v2712 = vadd.f32 %v2636, 0.001
      %v2713 = vadd.f32 %v2637, 0.001
      %v2714 = vadd.f32 %v2638, 0.001
      %v2715 = vadd.f32 %v2639, 0.001
      %v2716 = vadd.f32 %v2640, 0.001
      %v2717 = vadd.f32 %v2641, 0.001
      %v2718 = vadd.f32 %v2642, 0.001
      %v2719 = vadd.f32 %v2643, 0.001
      %v2720 = vadd.f32 %v2644, 0.001
      %v2721 = vadd.f32 %v2645, 0.001
      %v2722 = vadd.f32 %v2646, 0.001
      %v2723 = vadd.f32 %v2647, 0.001
      %v2724 = vadd.f32 %v2648, 0.001
      %v2725 = vadd.f32 %v2649, 0.001
      %v2726 = vadd.f32 %v2650, 0.001
      %v2727 = vadd.f32 %v2651, 0.001
      %v2728 = vadd.f32 %v2652, 0.001
      %v2729 = vadd.f32 %v2653, 0.001
      %v2730 = vadd.f32 %v2654, 0.001
      %v2731 = vadd.f32 %v2655, 0.001
      %v2732 = vadd.f32 %v2656, 0.001
      %v2733 = vadd.f32 %v2657, 0.001
      %v2734 = vadd.f32 %v2658, 0.001
      %v2735 = vadd.f32 %v2659, 0.001
      %v2736 = vadd.f32 %v2660, 0.001
      %v2737 = vadd.f32 %v2661, 0.001
      %v2738 = vadd.f32 %v2662, 0.001
      %v2739 = vadd.f32 %v2663, 0.001
      %v2740 = vadd.f32 %v2664, 0.001
      %v2741 = vadd.f32 %v2665, 0.001
      %v2742 = vadd.f32 %v2666, 0.001
      %v2743 = vadd.f32 %v2667, 0.001
      %v2744 = vadd.f32 %v2668, 0.001
      %v2745 = vadd.f32 %v2669, 0.001
      %v2746 = vadd.f32 %v2670, 0.001
      %v2747 = vadd.f32 %v2671, 0.001
      %v2748 = vadd.f32 %v2672, 0.001
      %v2749 = vadd.f32 %v2673, 0.001
      %v2750 = vadd.f32 %v2674, 0.001
      %v2751 = vadd.f32 %v2675, 0.001
      %v2752 = vadd.f32 %v2676, 0.001
      %v2753 = vadd.f32 %v2677, 0.001
      %v2754 = vadd.f32 %v2678, 0.001
      %v2755 = vadd.f32 %v2679, 0.001
      %v2756 = vrsqrt.pop %v2680
      %v2757 = vmul.f32 %v2756, %v2680
      %v2758 = vmul.f32 %v2757, %v2756
      %v2759 = vmul.f32 0.5, %v2758
      %v2760 = vsub.f32 1.5, %v2759
      %v2761 = vmul.f32 %v2756, %v2760
      %vm2762 = vweird.f32 %v2680
      %vm2763 = vweird.f32 %v2756
      %vm2764 = vmor %vm2762, %vm2763
      %v2765 = vsel %vm2764, %v2756, %v2761
      %v2766 = vrsqrt.pop %v2681
      %v2767 = vmul.f32 %v2766, %v2681
      %v2768 = vmul.f32 %v2767, %v2766
      %v2769 = vmul.f32 0.5, %v2768
      %v2770 = vsub.f32 1.5, %v2769
      %v2771 = vmul.f32 %v2766, %v2770
      %vm2772 = vweird.f32 %v2681
      %vm2773 = vweird.f32 %v2766
      %vm2774 = vmor %vm2772, %vm2773
      %v2775 = vsel %vm2774, %v2766, %v2771
      %v2776 = vrsqrt.pop %v2682
      %v2777 = vmul.f32 %v2776, %v2682
      %v2778 = vmul.f32 %v2777, %v2776
      %v2779 = vmul.f32 0.5, %v2778
      %v2780 = vsub.f32 1.5, %v2779
      %v2781 = vmul.f32 %v2776, %v2780
      %vm2782 = vweird.f32 %v2682
      %vm2783 = vweird.f32 %v2776
      %vm2784 = vmor %vm2782, %vm2783
      %v2785 = vsel %vm2784, %v2776, %v2781
      %v2786 = vrsqrt.pop %v2683
      %v2787 = vmul.f32 %v2786, %v2683
      %v2788 = vmul.f32 %v2787, %v2786
      %v2789 = vmul.f32 0.5, %v2788
      %v2790 = vsub.f32 1.5, %v2789
      %v2791 = vmul.f32 %v2786, %v2790
      %vm2792 = vweird.f32 %v2683
      %vm2793 = vweird.f32 %v2786
      %vm2794 = vmor %vm2792, %vm2793
      %v2795 = vsel %vm2794, %v2786, %v2791
      %v2796 = vrsqrt.pop %v2684
      %v2797 = vmul.f32 %v2796, %v2684
      %v2798 = vmul.f32 %v2797, %v2796
      %v2799 = vmul.f32 0.5, %v2798
      %v2800 = vsub.f32 1.5, %v2799
      %v2801 = vmul.f32 %v2796, %v2800
      %vm2802 = vweird.f32 %v2684
      %vm2803 = vweird.f32 %v2796
      %vm2804 = vmor %vm2802, %vm2803
      %v2805 = vsel %vm2804, %v2796, %v2801
      %v2806 = vrsqrt.pop %v2685
      %v2807 = vmul.f32 %v2806, %v2685
      %v2808 = vmul.f32 %v2807, %v2806
      %v2809 = vmul.f32 0.5, %v2808
      %v2810 = vsub.f32 1.5, %v2809
      %v2811 = vmul.f32 %v2806, %v2810
      %vm2812 = vweird.f32 %v2685
      %vm2813 = vweird.f32 %v2806
      %vm2814 = vmor %vm2812, %vm2813
      %v2815 = vsel %vm2814, %v2806, %v2811
      %v2816 = vrsqrt.pop %v2686
      %v2817 = vmul.f32 %v2816, %v2686
      %v2818 = vmul.f32 %v2817, %v2816
      %v2819 = vmul.f32 0.5, %v2818
      %v2820 = vsub.f32 1.5, %v2819
      %v2821 = vmul.f32 %v2816, %v2820
      %vm2822 = vweird.f32 %v2686
      %vm2823 = vweird.f32 %v2816
      %vm2824 = vmor %vm2822, %vm2823
      %v2825 = vsel %vm2824, %v2816, %v2821
      %v2826 = vrsqrt.pop %v2687
      %v2827 = vmul.f32 %v2826, %v2687
      %v2828 = vmul.f32 %v2827, %v2826
      %v2829 = vmul.f32 0.5, %v2828
      %v2830 = vsub.f32 1.5, %v2829
      %v2831 = vmul.f32 %v2826, %v2830
      %vm2832 = vweird.f32 %v2687
      %vm2833 = vweird.f32 %v2826
      %vm2834 = vmor %vm2832, %vm2833
      %v2835 = vsel %vm2834, %v2826, %v2831
      %v2836 = vrsqrt.pop %v2688
      %v2837 = vmul.f32 %v2836, %v2688
      %v2838 = vmul.f32 %v2837, %v2836
      %v2839 = vmul.f32 0.5, %v2838
      %v2840 = vsub.f32 1.5, %v2839
      %v2841 = vmul.f32 %v2836, %v2840
      %vm2842 = vweird.f32 %v2688
      %vm2843 = vweird.f32 %v2836
      %vm2844 = vmor %vm2842, %vm2843
      %v2845 = vsel %vm2844, %v2836, %v2841
      %v2846 = vrsqrt.pop %v2689
      %v2847 = vmul.f32 %v2846, %v2689
      %v2848 = vmul.f32 %v2847, %v2846
      %v2849 = vmul.f32 0.5, %v2848
      %v2850 = vsub.f32 1.5, %v2849
      %v2851 = vmul.f32 %v2846, %v2850
      %vm2852 = vweird.f32 %v2689
      %vm2853 = vweird.f32 %v2846
      %vm2854 = vmor %vm2852, %vm2853
      %v2855 = vsel %vm2854, %v2846, %v2851
      %v2856 = vrsqrt.pop %v2690
      %v2857 = vmul.f32 %v2856, %v2690
      %v2858 = vmul.f32 %v2857, %v2856
      %v2859 = vmul.f32 0.5, %v2858
      %v2860 = vsub.f32 1.5, %v2859
      %v2861 = vmul.f32 %v2856, %v2860
      %vm2862 = vweird.f32 %v2690
      %vm2863 = vweird.f32 %v2856
      %vm2864 = vmor %vm2862, %vm2863
      %v2865 = vsel %vm2864, %v2856, %v2861
      %v2866 = vrsqrt.pop %v2691
      %v2867 = vmul.f32 %v2866, %v2691
      %v2868 = vmul.f32 %v2867, %v2866
      %v2869 = vmul.f32 0.5, %v2868
      %v2870 = vsub.f32 1.5, %v2869
      %v2871 = vmul.f32 %v2866, %v2870
      %vm2872 = vweird.f32 %v2691
      %vm2873 = vweird.f32 %v2866
      %vm2874 = vmor %vm2872, %vm2873
      %v2875 = vsel %vm2874, %v2866, %v2871
      %v2876 = vrsqrt.pop %v2692
      %v2877 = vmul.f32 %v2876, %v2692
      %v2878 = vmul.f32 %v2877, %v2876
      %v2879 = vmul.f32 0.5, %v2878
      %v2880 = vsub.f32 1.5, %v2879
      %v2881 = vmul.f32 %v2876, %v2880
      %vm2882 = vweird.f32 %v2692
      %vm2883 = vweird.f32 %v2876
      %vm2884 = vmor %vm2882, %vm2883
      %v2885 = vsel %vm2884, %v2876, %v2881
      %v2886 = vrsqrt.pop %v2693
      %v2887 = vmul.f32 %v2886, %v2693
      %v2888 = vmul.f32 %v2887, %v2886
      %v2889 = vmul.f32 0.5, %v2888
      %v2890 = vsub.f32 1.5, %v2889
      %v2891 = vmul.f32 %v2886, %v2890
      %vm2892 = vweird.f32 %v2693
      %vm2893 = vweird.f32 %v2886
      %vm2894 = vmor %vm2892, %vm2893
      %v2895 = vsel %vm2894, %v2886, %v2891
      %v2896 = vrsqrt.pop %v2694
      %v2897 = vmul.f32 %v2896, %v2694
      %v2898 = vmul.f32 %v2897, %v2896
      %v2899 = vmul.f32 0.5, %v2898
      %v2900 = vsub.f32 1.5, %v2899
      %v2901 = vmul.f32 %v2896, %v2900
      %vm2902 = vweird.f32 %v2694
      %vm2903 = vweird.f32 %v2896
      %vm2904 = vmor %vm2902, %vm2903
      %v2905 = vsel %vm2904, %v2896, %v2901
      %v2906 = vrsqrt.pop %v2695
      %v2907 = vmul.f32 %v2906, %v2695
      %v2908 = vmul.f32 %v2907, %v2906
      %v2909 = vmul.f32 0.5, %v2908
      %v2910 = vsub.f32 1.5, %v2909
      %v2911 = vmul.f32 %v2906, %v2910
      %vm2912 = vweird.f32 %v2695
      %vm2913 = vweird.f32 %v2906
      %vm2914 = vmor %vm2912, %vm2913
      %v2915 = vsel %vm2914, %v2906, %v2911
      %v2916 = vrsqrt.pop %v2696
      %v2917 = vmul.f32 %v2916, %v2696
      %v2918 = vmul.f32 %v2917, %v2916
      %v2919 = vmul.f32 0.5, %v2918
      %v2920 = vsub.f32 1.5, %v2919
      %v2921 = vmul.f32 %v2916, %v2920
      %vm2922 = vweird.f32 %v2696
      %vm2923 = vweird.f32 %v2916
      %vm2924 = vmor %vm2922, %vm2923
      %v2925 = vsel %vm2924, %v2916, %v2921
      %v2926 = vrsqrt.pop %v2697
      %v2927 = vmul.f32 %v2926, %v2697
      %v2928 = vmul.f32 %v2927, %v2926
      %v2929 = vmul.f32 0.5, %v2928
      %v2930 = vsub.f32 1.5, %v2929
      %v2931 = vmul.f32 %v2926, %v2930
      %vm2932 = vweird.f32 %v2697
      %vm2933 = vweird.f32 %v2926
      %vm2934 = vmor %vm2932, %vm2933
      %v2935 = vsel %vm2934, %v2926, %v2931
      %v2936 = vrsqrt.pop %v2698
      %v2937 = vmul.f32 %v2936, %v2698
      %v2938 = vmul.f32 %v2937, %v2936
      %v2939 = vmul.f32 0.5, %v2938
      %v2940 = vsub.f32 1.5, %v2939
      %v2941 = vmul.f32 %v2936, %v2940
      %vm2942 = vweird.f32 %v2698
      %vm2943 = vweird.f32 %v2936
      %vm2944 = vmor %vm2942, %vm2943
      %v2945 = vsel %vm2944, %v2936, %v2941
      %v2946 = vrsqrt.pop %v2699
      %v2947 = vmul.f32 %v2946, %v2699
      %v2948 = vmul.f32 %v2947, %v2946
      %v2949 = vmul.f32 0.5, %v2948
      %v2950 = vsub.f32 1.5, %v2949
      %v2951 = vmul.f32 %v2946, %v2950
      %vm2952 = vweird.f32 %v2699
      %vm2953 = vweird.f32 %v2946
      %vm2954 = vmor %vm2952, %vm2953
      %v2955 = vsel %vm2954, %v2946, %v2951
      %v2956 = vrsqrt.pop %v2700
      %v2957 = vmul.f32 %v2956, %v2700
      %v2958 = vmul.f32 %v2957, %v2956
      %v2959 = vmul.f32 0.5, %v2958
      %v2960 = vsub.f32 1.5, %v2959
      %v2961 = vmul.f32 %v2956, %v2960
      %vm2962 = vweird.f32 %v2700
      %vm2963 = vweird.f32 %v2956
      %vm2964 = vmor %vm2962, %vm2963
      %v2965 = vsel %vm2964, %v2956, %v2961
      %v2966 = vrsqrt.pop %v2701
      %v2967 = vmul.f32 %v2966, %v2701
      %v2968 = vmul.f32 %v2967, %v2966
      %v2969 = vmul.f32 0.5, %v2968
      %v2970 = vsub.f32 1.5, %v2969
      %v2971 = vmul.f32 %v2966, %v2970
      %vm2972 = vweird.f32 %v2701
      %vm2973 = vweird.f32 %v2966
      %vm2974 = vmor %vm2972, %vm2973
      %v2975 = vsel %vm2974, %v2966, %v2971
      %v2976 = vrsqrt.pop %v2702
      %v2977 = vmul.f32 %v2976, %v2702
      %v2978 = vmul.f32 %v2977, %v2976
      %v2979 = vmul.f32 0.5, %v2978
      %v2980 = vsub.f32 1.5, %v2979
      %v2981 = vmul.f32 %v2976, %v2980
      %vm2982 = vweird.f32 %v2702
      %vm2983 = vweird.f32 %v2976
      %vm2984 = vmor %vm2982, %vm2983
      %v2985 = vsel %vm2984, %v2976, %v2981
      %v2986 = vrsqrt.pop %v2703
      %v2987 = vmul.f32 %v2986, %v2703
      %v2988 = vmul.f32 %v2987, %v2986
      %v2989 = vmul.f32 0.5, %v2988
      %v2990 = vsub.f32 1.5, %v2989
      %v2991 = vmul.f32 %v2986, %v2990
      %vm2992 = vweird.f32 %v2703
      %vm2993 = vweird.f32 %v2986
      %vm2994 = vmor %vm2992, %vm2993
      %v2995 = vsel %vm2994, %v2986, %v2991
      %v2996 = vrsqrt.pop %v2704
      %v2997 = vmul.f32 %v2996, %v2704
      %v2998 = vmul.f32 %v2997, %v2996
      %v2999 = vmul.f32 0.5, %v2998
      %v3000 = vsub.f32 1.5, %v2999
      %v3001 = vmul.f32 %v2996, %v3000
      %vm3002 = vweird.f32 %v2704
      %vm3003 = vweird.f32 %v2996
      %vm3004 = vmor %vm3002, %vm3003
      %v3005 = vsel %vm3004, %v2996, %v3001
      %v3006 = vrsqrt.pop %v2705
      %v3007 = vmul.f32 %v3006, %v2705
      %v3008 = vmul.f32 %v3007, %v3006
      %v3009 = vmul.f32 0.5, %v3008
      %v3010 = vsub.f32 1.5, %v3009
      %v3011 = vmul.f32 %v3006, %v3010
      %vm3012 = vweird.f32 %v2705
      %vm3013 = vweird.f32 %v3006
      %vm3014 = vmor %vm3012, %vm3013
      %v3015 = vsel %vm3014, %v3006, %v3011
      %v3016 = vrsqrt.pop %v2706
      %v3017 = vmul.f32 %v3016, %v2706
      %v3018 = vmul.f32 %v3017, %v3016
      %v3019 = vmul.f32 0.5, %v3018
      %v3020 = vsub.f32 1.5, %v3019
      %v3021 = vmul.f32 %v3016, %v3020
      %vm3022 = vweird.f32 %v2706
      %vm3023 = vweird.f32 %v3016
      %vm3024 = vmor %vm3022, %vm3023
      %v3025 = vsel %vm3024, %v3016, %v3021
      %v3026 = vrsqrt.pop %v2707
      %v3027 = vmul.f32 %v3026, %v2707
      %v3028 = vmul.f32 %v3027, %v3026
      %v3029 = vmul.f32 0.5, %v3028
      %v3030 = vsub.f32 1.5, %v3029
      %v3031 = vmul.f32 %v3026, %v3030
      %vm3032 = vweird.f32 %v2707
      %vm3033 = vweird.f32 %v3026
      %vm3034 = vmor %vm3032, %vm3033
      %v3035 = vsel %vm3034, %v3026, %v3031
      %v3036 = vrsqrt.pop %v2708
      %v3037 = vmul.f32 %v3036, %v2708
      %v3038 = vmul.f32 %v3037, %v3036
      %v3039 = vmul.f32 0.5, %v3038
      %v3040 = vsub.f32 1.5, %v3039
      %v3041 = vmul.f32 %v3036, %v3040
      %vm3042 = vweird.f32 %v2708
      %vm3043 = vweird.f32 %v3036
      %vm3044 = vmor %vm3042, %vm3043
      %v3045 = vsel %vm3044, %v3036, %v3041
      %v3046 = vrsqrt.pop %v2709
      %v3047 = vmul.f32 %v3046, %v2709
      %v3048 = vmul.f32 %v3047, %v3046
      %v3049 = vmul.f32 0.5, %v3048
      %v3050 = vsub.f32 1.5, %v3049
      %v3051 = vmul.f32 %v3046, %v3050
      %vm3052 = vweird.f32 %v2709
      %vm3053 = vweird.f32 %v3046
      %vm3054 = vmor %vm3052, %vm3053
      %v3055 = vsel %vm3054, %v3046, %v3051
      %v3056 = vrsqrt.pop %v2710
      %v3057 = vmul.f32 %v3056, %v2710
      %v3058 = vmul.f32 %v3057, %v3056
      %v3059 = vmul.f32 0.5, %v3058
      %v3060 = vsub.f32 1.5, %v3059
      %v3061 = vmul.f32 %v3056, %v3060
      %vm3062 = vweird.f32 %v2710
      %vm3063 = vweird.f32 %v3056
      %vm3064 = vmor %vm3062, %vm3063
      %v3065 = vsel %vm3064, %v3056, %v3061
      %v3066 = vrsqrt.pop %v2711
      %v3067 = vmul.f32 %v3066, %v2711
      %v3068 = vmul.f32 %v3067, %v3066
      %v3069 = vmul.f32 0.5, %v3068
      %v3070 = vsub.f32 1.5, %v3069
      %v3071 = vmul.f32 %v3066, %v3070
      %vm3072 = vweird.f32 %v2711
      %vm3073 = vweird.f32 %v3066
      %vm3074 = vmor %vm3072, %vm3073
      %v3075 = vsel %vm3074, %v3066, %v3071
      %v3076 = vrsqrt.pop %v2712
      %v3077 = vmul.f32 %v3076, %v2712
      %v3078 = vmul.f32 %v3077, %v3076
      %v3079 = vmul.f32 0.5, %v3078
      %v3080 = vsub.f32 1.5, %v3079
      %v3081 = vmul.f32 %v3076, %v3080
      %vm3082 = vweird.f32 %v2712
      %vm3083 = vweird.f32 %v3076
      %vm3084 = vmor %vm3082, %vm3083
      %v3085 = vsel %vm3084, %v3076, %v3081
      %v3086 = vrsqrt.pop %v2713
      %v3087 = vmul.f32 %v3086, %v2713
      %v3088 = vmul.f32 %v3087, %v3086
      %v3089 = vmul.f32 0.5, %v3088
      %v3090 = vsub.f32 1.5, %v3089
      %v3091 = vmul.f32 %v3086, %v3090
      %vm3092 = vweird.f32 %v2713
      %vm3093 = vweird.f32 %v3086
      %vm3094 = vmor %vm3092, %vm3093
      %v3095 = vsel %vm3094, %v3086, %v3091
      %v3096 = vrsqrt.pop %v2714
      %v3097 = vmul.f32 %v3096, %v2714
      %v3098 = vmul.f32 %v3097, %v3096
      %v3099 = vmul.f32 0.5, %v3098
      %v3100 = vsub.f32 1.5, %v3099
      %v3101 = vmul.f32 %v3096, %v3100
      %vm3102 = vweird.f32 %v2714
      %vm3103 = vweird.f32 %v3096
      %vm3104 = vmor %vm3102, %vm3103
      %v3105 = vsel %vm3104, %v3096, %v3101
      %v3106 = vrsqrt.pop %v2715
      %v3107 = vmul.f32 %v3106, %v2715
      %v3108 = vmul.f32 %v3107, %v3106
      %v3109 = vmul.f32 0.5, %v3108
      %v3110 = vsub.f32 1.5, %v3109
      %v3111 = vmul.f32 %v3106, %v3110
      %vm3112 = vweird.f32 %v2715
      %vm3113 = vweird.f32 %v3106
      %vm3114 = vmor %vm3112, %vm3113
      %v3115 = vsel %vm3114, %v3106, %v3111
      %v3116 = vrsqrt.pop %v2716
      %v3117 = vmul.f32 %v3116, %v2716
      %v3118 = vmul.f32 %v3117, %v3116
      %v3119 = vmul.f32 0.5, %v3118
      %v3120 = vsub.f32 1.5, %v3119
      %v3121 = vmul.f32 %v3116, %v3120
      %vm3122 = vweird.f32 %v2716
      %vm3123 = vweird.f32 %v3116
      %vm3124 = vmor %vm3122, %vm3123
      %v3125 = vsel %vm3124, %v3116, %v3121
      %v3126 = vrsqrt.pop %v2717
      %v3127 = vmul.f32 %v3126, %v2717
      %v3128 = vmul.f32 %v3127, %v3126
      %v3129 = vmul.f32 0.5, %v3128
      %v3130 = vsub.f32 1.5, %v3129
      %v3131 = vmul.f32 %v3126, %v3130
      %vm3132 = vweird.f32 %v2717
      %vm3133 = vweird.f32 %v3126
      %vm3134 = vmor %vm3132, %vm3133
      %v3135 = vsel %vm3134, %v3126, %v3131
      %v3136 = vrsqrt.pop %v2718
      %v3137 = vmul.f32 %v3136, %v2718
      %v3138 = vmul.f32 %v3137, %v3136
      %v3139 = vmul.f32 0.5, %v3138
      %v3140 = vsub.f32 1.5, %v3139
      %v3141 = vmul.f32 %v3136, %v3140
      %vm3142 = vweird.f32 %v2718
      %vm3143 = vweird.f32 %v3136
      %vm3144 = vmor %vm3142, %vm3143
      %v3145 = vsel %vm3144, %v3136, %v3141
      %v3146 = vrsqrt.pop %v2719
      %v3147 = vmul.f32 %v3146, %v2719
      %v3148 = vmul.f32 %v3147, %v3146
      %v3149 = vmul.f32 0.5, %v3148
      %v3150 = vsub.f32 1.5, %v3149
      %v3151 = vmul.f32 %v3146, %v3150
      %vm3152 = vweird.f32 %v2719
      %vm3153 = vweird.f32 %v3146
      %vm3154 = vmor %vm3152, %vm3153
      %v3155 = vsel %vm3154, %v3146, %v3151
      %v3156 = vrsqrt.pop %v2720
      %v3157 = vmul.f32 %v3156, %v2720
      %v3158 = vmul.f32 %v3157, %v3156
      %v3159 = vmul.f32 0.5, %v3158
      %v3160 = vsub.f32 1.5, %v3159
      %v3161 = vmul.f32 %v3156, %v3160
      %vm3162 = vweird.f32 %v2720
      %vm3163 = vweird.f32 %v3156
      %vm3164 = vmor %vm3162, %vm3163
      %v3165 = vsel %vm3164, %v3156, %v3161
      %v3166 = vrsqrt.pop %v2721
      %v3167 = vmul.f32 %v3166, %v2721
      %v3168 = vmul.f32 %v3167, %v3166
      %v3169 = vmul.f32 0.5, %v3168
      %v3170 = vsub.f32 1.5, %v3169
      %v3171 = vmul.f32 %v3166, %v3170
      %vm3172 = vweird.f32 %v2721
      %vm3173 = vweird.f32 %v3166
      %vm3174 = vmor %vm3172, %vm3173
      %v3175 = vsel %vm3174, %v3166, %v3171
      %v3176 = vrsqrt.pop %v2722
      %v3177 = vmul.f32 %v3176, %v2722
      %v3178 = vmul.f32 %v3177, %v3176
      %v3179 = vmul.f32 0.5, %v3178
      %v3180 = vsub.f32 1.5, %v3179
      %v3181 = vmul.f32 %v3176, %v3180
      %vm3182 = vweird.f32 %v2722
      %vm3183 = vweird.f32 %v3176
      %vm3184 = vmor %vm3182, %vm3183
      %v3185 = vsel %vm3184, %v3176, %v3181
      %v3186 = vrsqrt.pop %v2723
      %v3187 = vmul.f32 %v3186, %v2723
      %v3188 = vmul.f32 %v3187, %v3186
      %v3189 = vmul.f32 0.5, %v3188
      %v3190 = vsub.f32 1.5, %v3189
      %v3191 = vmul.f32 %v3186, %v3190
      %vm3192 = vweird.f32 %v2723
      %vm3193 = vweird.f32 %v3186
      %vm3194 = vmor %vm3192, %vm3193
      %v3195 = vsel %vm3194, %v3186, %v3191
      %v3196 = vrsqrt.pop %v2724
      %v3197 = vmul.f32 %v3196, %v2724
      %v3198 = vmul.f32 %v3197, %v3196
      %v3199 = vmul.f32 0.5, %v3198
      %v3200 = vsub.f32 1.5, %v3199
      %v3201 = vmul.f32 %v3196, %v3200
      %vm3202 = vweird.f32 %v2724
      %vm3203 = vweird.f32 %v3196
      %vm3204 = vmor %vm3202, %vm3203
      %v3205 = vsel %vm3204, %v3196, %v3201
      %v3206 = vrsqrt.pop %v2725
      %v3207 = vmul.f32 %v3206, %v2725
      %v3208 = vmul.f32 %v3207, %v3206
      %v3209 = vmul.f32 0.5, %v3208
      %v3210 = vsub.f32 1.5, %v3209
      %v3211 = vmul.f32 %v3206, %v3210
      %vm3212 = vweird.f32 %v2725
      %vm3213 = vweird.f32 %v3206
      %vm3214 = vmor %vm3212, %vm3213
      %v3215 = vsel %vm3214, %v3206, %v3211
      %v3216 = vrsqrt.pop %v2726
      %v3217 = vmul.f32 %v3216, %v2726
      %v3218 = vmul.f32 %v3217, %v3216
      %v3219 = vmul.f32 0.5, %v3218
      %v3220 = vsub.f32 1.5, %v3219
      %v3221 = vmul.f32 %v3216, %v3220
      %vm3222 = vweird.f32 %v2726
      %vm3223 = vweird.f32 %v3216
      %vm3224 = vmor %vm3222, %vm3223
      %v3225 = vsel %vm3224, %v3216, %v3221
      %v3226 = vrsqrt.pop %v2727
      %v3227 = vmul.f32 %v3226, %v2727
      %v3228 = vmul.f32 %v3227, %v3226
      %v3229 = vmul.f32 0.5, %v3228
      %v3230 = vsub.f32 1.5, %v3229
      %v3231 = vmul.f32 %v3226, %v3230
      %vm3232 = vweird.f32 %v2727
      %vm3233 = vweird.f32 %v3226
      %vm3234 = vmor %vm3232, %vm3233
      %v3235 = vsel %vm3234, %v3226, %v3231
      %v3236 = vrsqrt.pop %v2728
      %v3237 = vmul.f32 %v3236, %v2728
      %v3238 = vmul.f32 %v3237, %v3236
      %v3239 = vmul.f32 0.5, %v3238
      %v3240 = vsub.f32 1.5, %v3239
      %v3241 = vmul.f32 %v3236, %v3240
      %vm3242 = vweird.f32 %v2728
      %vm3243 = vweird.f32 %v3236
      %vm3244 = vmor %vm3242, %vm3243
      %v3245 = vsel %vm3244, %v3236, %v3241
      %v3246 = vrsqrt.pop %v2729
      %v3247 = vmul.f32 %v3246, %v2729
      %v3248 = vmul.f32 %v3247, %v3246
      %v3249 = vmul.f32 0.5, %v3248
      %v3250 = vsub.f32 1.5, %v3249
      %v3251 = vmul.f32 %v3246, %v3250
      %vm3252 = vweird.f32 %v2729
      %vm3253 = vweird.f32 %v3246
      %vm3254 = vmor %vm3252, %vm3253
      %v3255 = vsel %vm3254, %v3246, %v3251
      %v3256 = vrsqrt.pop %v2730
      %v3257 = vmul.f32 %v3256, %v2730
      %v3258 = vmul.f32 %v3257, %v3256
      %v3259 = vmul.f32 0.5, %v3258
      %v3260 = vsub.f32 1.5, %v3259
      %v3261 = vmul.f32 %v3256, %v3260
      %vm3262 = vweird.f32 %v2730
      %vm3263 = vweird.f32 %v3256
      %vm3264 = vmor %vm3262, %vm3263
      %v3265 = vsel %vm3264, %v3256, %v3261
      %v3266 = vrsqrt.pop %v2731
      %v3267 = vmul.f32 %v3266, %v2731
      %v3268 = vmul.f32 %v3267, %v3266
      %v3269 = vmul.f32 0.5, %v3268
      %v3270 = vsub.f32 1.5, %v3269
      %v3271 = vmul.f32 %v3266, %v3270
      %vm3272 = vweird.f32 %v2731
      %vm3273 = vweird.f32 %v3266
      %vm3274 = vmor %vm3272, %vm3273
      %v3275 = vsel %vm3274, %v3266, %v3271
      %v3276 = vrsqrt.pop %v2732
      %v3277 = vmul.f32 %v3276, %v2732
      %v3278 = vmul.f32 %v3277, %v3276
      %v3279 = vmul.f32 0.5, %v3278
      %v3280 = vsub.f32 1.5, %v3279
      %v3281 = vmul.f32 %v3276, %v3280
      %vm3282 = vweird.f32 %v2732
      %vm3283 = vweird.f32 %v3276
      %vm3284 = vmor %vm3282, %vm3283
      %v3285 = vsel %vm3284, %v3276, %v3281
      %v3286 = vrsqrt.pop %v2733
      %v3287 = vmul.f32 %v3286, %v2733
      %v3288 = vmul.f32 %v3287, %v3286
      %v3289 = vmul.f32 0.5, %v3288
      %v3290 = vsub.f32 1.5, %v3289
      %v3291 = vmul.f32 %v3286, %v3290
      %vm3292 = vweird.f32 %v2733
      %vm3293 = vweird.f32 %v3286
      %vm3294 = vmor %vm3292, %vm3293
      %v3295 = vsel %vm3294, %v3286, %v3291
      %v3296 = vrsqrt.pop %v2734
      %v3297 = vmul.f32 %v3296, %v2734
      %v3298 = vmul.f32 %v3297, %v3296
      %v3299 = vmul.f32 0.5, %v3298
      %v3300 = vsub.f32 1.5, %v3299
      %v3301 = vmul.f32 %v3296, %v3300
      %vm3302 = vweird.f32 %v2734
      %vm3303 = vweird.f32 %v3296
      %vm3304 = vmor %vm3302, %vm3303
      %v3305 = vsel %vm3304, %v3296, %v3301
      %v3306 = vrsqrt.pop %v2735
      %v3307 = vmul.f32 %v3306, %v2735
      %v3308 = vmul.f32 %v3307, %v3306
      %v3309 = vmul.f32 0.5, %v3308
      %v3310 = vsub.f32 1.5, %v3309
      %v3311 = vmul.f32 %v3306, %v3310
      %vm3312 = vweird.f32 %v2735
      %vm3313 = vweird.f32 %v3306
      %vm3314 = vmor %vm3312, %vm3313
      %v3315 = vsel %vm3314, %v3306, %v3311
      %v3316 = vrsqrt.pop %v2736
      %v3317 = vmul.f32 %v3316, %v2736
      %v3318 = vmul.f32 %v3317, %v3316
      %v3319 = vmul.f32 0.5, %v3318
      %v3320 = vsub.f32 1.5, %v3319
      %v3321 = vmul.f32 %v3316, %v3320
      %vm3322 = vweird.f32 %v2736
      %vm3323 = vweird.f32 %v3316
      %vm3324 = vmor %vm3322, %vm3323
      %v3325 = vsel %vm3324, %v3316, %v3321
      %v3326 = vrsqrt.pop %v2737
      %v3327 = vmul.f32 %v3326, %v2737
      %v3328 = vmul.f32 %v3327, %v3326
      %v3329 = vmul.f32 0.5, %v3328
      %v3330 = vsub.f32 1.5, %v3329
      %v3331 = vmul.f32 %v3326, %v3330
      %vm3332 = vweird.f32 %v2737
      %vm3333 = vweird.f32 %v3326
      %vm3334 = vmor %vm3332, %vm3333
      %v3335 = vsel %vm3334, %v3326, %v3331
      %v3336 = vrsqrt.pop %v2738
      %v3337 = vmul.f32 %v3336, %v2738
      %v3338 = vmul.f32 %v3337, %v3336
      %v3339 = vmul.f32 0.5, %v3338
      %v3340 = vsub.f32 1.5, %v3339
      %v3341 = vmul.f32 %v3336, %v3340
      %vm3342 = vweird.f32 %v2738
      %vm3343 = vweird.f32 %v3336
      %vm3344 = vmor %vm3342, %vm3343
      %v3345 = vsel %vm3344, %v3336, %v3341
      %v3346 = vrsqrt.pop %v2739
      %v3347 = vmul.f32 %v3346, %v2739
      %v3348 = vmul.f32 %v3347, %v3346
      %v3349 = vmul.f32 0.5, %v3348
      %v3350 = vsub.f32 1.5, %v3349
      %v3351 = vmul.f32 %v3346, %v3350
      %vm3352 = vweird.f32 %v2739
      %vm3353 = vweird.f32 %v3346
      %vm3354 = vmor %vm3352, %vm3353
      %v3355 = vsel %vm3354, %v3346, %v3351
      %v3356 = vrsqrt.pop %v2740
      %v3357 = vmul.f32 %v3356, %v2740
      %v3358 = vmul.f32 %v3357, %v3356
      %v3359 = vmul.f32 0.5, %v3358
      %v3360 = vsub.f32 1.5, %v3359
      %v3361 = vmul.f32 %v3356, %v3360
      %vm3362 = vweird.f32 %v2740
      %vm3363 = vweird.f32 %v3356
      %vm3364 = vmor %vm3362, %vm3363
      %v3365 = vsel %vm3364, %v3356, %v3361
      %v3366 = vrsqrt.pop %v2741
      %v3367 = vmul.f32 %v3366, %v2741
      %v3368 = vmul.f32 %v3367, %v3366
      %v3369 = vmul.f32 0.5, %v3368
      %v3370 = vsub.f32 1.5, %v3369
      %v3371 = vmul.f32 %v3366, %v3370
      %vm3372 = vweird.f32 %v2741
      %vm3373 = vweird.f32 %v3366
      %vm3374 = vmor %vm3372, %vm3373
      %v3375 = vsel %vm3374, %v3366, %v3371
      %v3376 = vrsqrt.pop %v2742
      %v3377 = vmul.f32 %v3376, %v2742
      %v3378 = vmul.f32 %v3377, %v3376
      %v3379 = vmul.f32 0.5, %v3378
      %v3380 = vsub.f32 1.5, %v3379
      %v3381 = vmul.f32 %v3376, %v3380
      %vm3382 = vweird.f32 %v2742
      %vm3383 = vweird.f32 %v3376
      %vm3384 = vmor %vm3382, %vm3383
      %v3385 = vsel %vm3384, %v3376, %v3381
      %v3386 = vrsqrt.pop %v2743
      %v3387 = vmul.f32 %v3386, %v2743
      %v3388 = vmul.f32 %v3387, %v3386
      %v3389 = vmul.f32 0.5, %v3388
      %v3390 = vsub.f32 1.5, %v3389
      %v3391 = vmul.f32 %v3386, %v3390
      %vm3392 = vweird.f32 %v2743
      %vm3393 = vweird.f32 %v3386
      %vm3394 = vmor %vm3392, %vm3393
      %v3395 = vsel %vm3394, %v3386, %v3391
      %v3396 = vrsqrt.pop %v2744
      %v3397 = vmul.f32 %v3396, %v2744
      %v3398 = vmul.f32 %v3397, %v3396
      %v3399 = vmul.f32 0.5, %v3398
      %v3400 = vsub.f32 1.5, %v3399
      %v3401 = vmul.f32 %v3396, %v3400
      %vm3402 = vweird.f32 %v2744
      %vm3403 = vweird.f32 %v3396
      %vm3404 = vmor %vm3402, %vm3403
      %v3405 = vsel %vm3404, %v3396, %v3401
      %v3406 = vrsqrt.pop %v2745
      %v3407 = vmul.f32 %v3406, %v2745
      %v3408 = vmul.f32 %v3407, %v3406
      %v3409 = vmul.f32 0.5, %v3408
      %v3410 = vsub.f32 1.5, %v3409
      %v3411 = vmul.f32 %v3406, %v3410
      %vm3412 = vweird.f32 %v2745
      %vm3413 = vweird.f32 %v3406
      %vm3414 = vmor %vm3412, %vm3413
      %v3415 = vsel %vm3414, %v3406, %v3411
      %v3416 = vrsqrt.pop %v2746
      %v3417 = vmul.f32 %v3416, %v2746
      %v3418 = vmul.f32 %v3417, %v3416
      %v3419 = vmul.f32 0.5, %v3418
      %v3420 = vsub.f32 1.5, %v3419
      %v3421 = vmul.f32 %v3416, %v3420
      %vm3422 = vweird.f32 %v2746
      %vm3423 = vweird.f32 %v3416
      %vm3424 = vmor %vm3422, %vm3423
      %v3425 = vsel %vm3424, %v3416, %v3421
      %v3426 = vrsqrt.pop %v2747
      %v3427 = vmul.f32 %v3426, %v2747
      %v3428 = vmul.f32 %v3427, %v3426
      %v3429 = vmul.f32 0.5, %v3428
      %v3430 = vsub.f32 1.5, %v3429
      %v3431 = vmul.f32 %v3426, %v3430
      %vm3432 = vweird.f32 %v2747
      %vm3433 = vweird.f32 %v3426
      %vm3434 = vmor %vm3432, %vm3433
      %v3435 = vsel %vm3434, %v3426, %v3431
      %v3436 = vrsqrt.pop %v2748
      %v3437 = vmul.f32 %v3436, %v2748
      %v3438 = vmul.f32 %v3437, %v3436
      %v3439 = vmul.f32 0.5, %v3438
      %v3440 = vsub.f32 1.5, %v3439
      %v3441 = vmul.f32 %v3436, %v3440
      %vm3442 = vweird.f32 %v2748
      %vm3443 = vweird.f32 %v3436
      %vm3444 = vmor %vm3442, %vm3443
      %v3445 = vsel %vm3444, %v3436, %v3441
      %v3446 = vrsqrt.pop %v2749
      %v3447 = vmul.f32 %v3446, %v2749
      %v3448 = vmul.f32 %v3447, %v3446
      %v3449 = vmul.f32 0.5, %v3448
      %v3450 = vsub.f32 1.5, %v3449
      %v3451 = vmul.f32 %v3446, %v3450
      %vm3452 = vweird.f32 %v2749
      %vm3453 = vweird.f32 %v3446
      %vm3454 = vmor %vm3452, %vm3453
      %v3455 = vsel %vm3454, %v3446, %v3451
      %v3456 = vrsqrt.pop %v2750
      %v3457 = vmul.f32 %v3456, %v2750
      %v3458 = vmul.f32 %v3457, %v3456
      %v3459 = vmul.f32 0.5, %v3458
      %v3460 = vsub.f32 1.5, %v3459
      %v3461 = vmul.f32 %v3456, %v3460
      %vm3462 = vweird.f32 %v2750
      %vm3463 = vweird.f32 %v3456
      %vm3464 = vmor %vm3462, %vm3463
      %v3465 = vsel %vm3464, %v3456, %v3461
      %v3466 = vrsqrt.pop %v2751
      %v3467 = vmul.f32 %v3466, %v2751
      %v3468 = vmul.f32 %v3467, %v3466
      %v3469 = vmul.f32 0.5, %v3468
      %v3470 = vsub.f32 1.5, %v3469
      %v3471 = vmul.f32 %v3466, %v3470
      %vm3472 = vweird.f32 %v2751
      %vm3473 = vweird.f32 %v3466
      %vm3474 = vmor %vm3472, %vm3473
      %v3475 = vsel %vm3474, %v3466, %v3471
      %v3476 = vrsqrt.pop %v2752
      %v3477 = vmul.f32 %v3476, %v2752
      %v3478 = vmul.f32 %v3477, %v3476
      %v3479 = vmul.f32 0.5, %v3478
      %v3480 = vsub.f32 1.5, %v3479
      %v3481 = vmul.f32 %v3476, %v3480
      %vm3482 = vweird.f32 %v2752
      %vm3483 = vweird.f32 %v3476
      %vm3484 = vmor %vm3482, %vm3483
      %v3485 = vsel %vm3484, %v3476, %v3481
      %v3486 = vrsqrt.pop %v2753
      %v3487 = vmul.f32 %v3486, %v2753
      %v3488 = vmul.f32 %v3487, %v3486
      %v3489 = vmul.f32 0.5, %v3488
      %v3490 = vsub.f32 1.5, %v3489
      %v3491 = vmul.f32 %v3486, %v3490
      %vm3492 = vweird.f32 %v2753
      %vm3493 = vweird.f32 %v3486
      %vm3494 = vmor %vm3492, %vm3493
      %v3495 = vsel %vm3494, %v3486, %v3491
      %v3496 = vrsqrt.pop %v2754
      %v3497 = vmul.f32 %v3496, %v2754
      %v3498 = vmul.f32 %v3497, %v3496
      %v3499 = vmul.f32 0.5, %v3498
      %v3500 = vsub.f32 1.5, %v3499
      %v3501 = vmul.f32 %v3496, %v3500
      %vm3502 = vweird.f32 %v2754
      %vm3503 = vweird.f32 %v3496
      %vm3504 = vmor %vm3502, %vm3503
      %v3505 = vsel %vm3504, %v3496, %v3501
      %v3506 = vrsqrt.pop %v2755
      %v3507 = vmul.f32 %v3506, %v2755
      %v3508 = vmul.f32 %v3507, %v3506
      %v3509 = vmul.f32 0.5, %v3508
      %v3510 = vsub.f32 1.5, %v3509
      %v3511 = vmul.f32 %v3506, %v3510
      %vm3512 = vweird.f32 %v2755
      %vm3513 = vweird.f32 %v3506
      %vm3514 = vmor %vm3512, %vm3513
      %v3515 = vsel %vm3514, %v3506, %v3511
      %v3516 = vld [vmem:[%s261] sm:$0xff]
      %v3517 = vld [vmem:[%s261 + $0x8] sm:$0xff]
      %v3518 = vld [vmem:[%s261 + $0x10] sm:$0xff]
      %v3519 = vld [vmem:[%s261 + $0x18] sm:$0xff]
      %v3520 = vld [vmem:[%s261 + $0x20] sm:$0xff]
      %v3521 = vld [vmem:[%s261 + $0x28] sm:$0xff]
      %v3522 = vld [vmem:[%s261 + $0x30] sm:$0xff]
      %v3523 = vld [vmem:[%s261 + $0x38] sm:$0xff]
      %v3524 = vld [vmem:[%s261 + $0x40] sm:$0xff]
      %v3525 = vld [vmem:[%s261 + $0x48] sm:$0xff]
      %v3526 = vld [vmem:[%s261 + $0x50] sm:$0xff]
      %v3527 = vld [vmem:[%s261 + $0x58] sm:$0xff]
      %v3528 = vld [vmem:[%s261 + $0x60] sm:$0xff]
      %v3529 = vld [vmem:[%s261 + $0x68] sm:$0xff]
      %v3530 = vld [vmem:[%s261 + $0x70] sm:$0xff]
      %v3531 = vld [vmem:[%s261 + $0x78] sm:$0xff]
      %v3532 = vld [vmem:[%s261 + $0x80] sm:$0xff]
      %v3533 = vld [vmem:[%s261 + $0x88] sm:$0xff]
      %v3534 = vld [vmem:[%s261 + $0x90] sm:$0xff]
      %v3535 = vld [vmem:[%s261 + $0x98] sm:$0xff]
      %v3536 = vld [vmem:[%s261 + $0xa0] sm:$0xff]
      %v3537 = vld [vmem:[%s261 + $0xa8] sm:$0xff]
      %v3538 = vld [vmem:[%s261 + $0xb0] sm:$0xff]
      %v3539 = vld [vmem:[%s261 + $0xb8] sm:$0xff]
      %v3540 = vld [vmem:[%s261 + $0xc0] sm:$0xff]
      %v3541 = vld [vmem:[%s261 + $0xc8] sm:$0xff]
      %v3542 = vld [vmem:[%s261 + $0xd0] sm:$0xff]
      %v3543 = vld [vmem:[%s261 + $0xd8] sm:$0xff]
      %v3544 = vld [vmem:[%s261 + $0xe0] sm:$0xff]
      %v3545 = vld [vmem:[%s261 + $0xe8] sm:$0xff]
      %v3546 = vld [vmem:[%s261 + $0xf0] sm:$0xff]
      %v3547 = vld [vmem:[%s261 + $0xf8] sm:$0xff]
      %v3548 = vld [vmem:[%s261 + $0x100] sm:$0xff]
      %v3549 = vld [vmem:[%s261 + $0x108] sm:$0xff]
      %v3550 = vld [vmem:[%s261 + $0x110] sm:$0xff]
      %v3551 = vld [vmem:[%s261 + $0x118] sm:$0xff]
      %v3552 = vld [vmem:[%s261 + $0x120] sm:$0xff]
      %v3553 = vld [vmem:[%s261 + $0x128] sm:$0xff]
      %v3554 = vld [vmem:[%s261 + $0x130] sm:$0xff]
      %v3555 = vld [vmem:[%s261 + $0x138] sm:$0xff]
      %v3556 = vld [vmem:[%s261 + $0x140] sm:$0xff]
      %v3557 = vld [vmem:[%s261 + $0x148] sm:$0xff]
      %v3558 = vld [vmem:[%s261 + $0x150] sm:$0xff]
      %v3559 = vld [vmem:[%s261 + $0x158] sm:$0xff]
      %v3560 = vld [vmem:[%s261 + $0x160] sm:$0xff]
      %v3561 = vld [vmem:[%s261 + $0x168] sm:$0xff]
      %v3562 = vld [vmem:[%s261 + $0x170] sm:$0xff]
      %v3563 = vld [vmem:[%s261 + $0x178] sm:$0xff]
      %v3564 = vld [vmem:[%s261 + $0x180] sm:$0xff]
      %v3565 = vld [vmem:[%s261 + $0x188] sm:$0xff]
      %v3566 = vld [vmem:[%s261 + $0x190] sm:$0xff]
      %v3567 = vld [vmem:[%s261 + $0x198] sm:$0xff]
      %v3568 = vld [vmem:[%s261 + $0x1a0] sm:$0xff]
      %v3569 = vld [vmem:[%s261 + $0x1a8] sm:$0xff]
      %v3570 = vld [vmem:[%s261 + $0x1b0] sm:$0xff]
      %v3571 = vld [vmem:[%s261 + $0x1b8] sm:$0xff]
      %v3572 = vld [vmem:[%s261 + $0x1c0] sm:$0xff]
      %v3573 = vld [vmem:[%s261 + $0x1c8] sm:$0xff]
      %v3574 = vld [vmem:[%s261 + $0x1d0] sm:$0xff]
      %v3575 = vld [vmem:[%s261 + $0x1d8] sm:$0xff]
      %v3576 = vld [vmem:[%s261 + $0x1e0] sm:$0xff]
      %v3577 = vld [vmem:[%s261 + $0x1e8] sm:$0xff]
      %v3578 = vld [vmem:[%s261 + $0x1f0] sm:$0xff]
      %v3579 = vld [vmem:[%s261 + $0x1f8] sm:$0xff]
      %v3580 = vld [vmem:[%s261 + $0x200] sm:$0xff]
      %v3581 = vld [vmem:[%s261 + $0x208] sm:$0xff]
      %v3582 = vld [vmem:[%s261 + $0x210] sm:$0xff]
      %v3583 = vld [vmem:[%s261 + $0x218] sm:$0xff]
      %v3584 = vld [vmem:[%s261 + $0x220] sm:$0xff]
      %v3585 = vld [vmem:[%s261 + $0x228] sm:$0xff]
      %v3586 = vld [vmem:[%s261 + $0x230] sm:$0xff]
      %v3587 = vld [vmem:[%s261 + $0x238] sm:$0xff]
      %v3588 = vld [vmem:[%s261 + $0x240] sm:$0xff]
      %v3589 = vld [vmem:[%s261 + $0x248] sm:$0xff]
      %v3590 = vld [vmem:[%s261 + $0x250] sm:$0xff]
      %v3591 = vld [vmem:[%s261 + $0x258] sm:$0xff]
      %v3592 = vmul.f32 %v3516, %v2765
      %v3593 = vmul.f32 %v3517, %v2775
      %v3594 = vmul.f32 %v3518, %v2785
      %v3595 = vmul.f32 %v3519, %v2795
      %v3596 = vmul.f32 %v3520, %v2805
      %v3597 = vmul.f32 %v3521, %v2815
      %v3598 = vmul.f32 %v3522, %v2825
      %v3599 = vmul.f32 %v3523, %v2835
      %v3600 = vmul.f32 %v3524, %v2845
      %v3601 = vmul.f32 %v3525, %v2855
      %v3602 = vmul.f32 %v3526, %v2865
      %v3603 = vmul.f32 %v3527, %v2875
      %v3604 = vmul.f32 %v3528, %v2885
      %v3605 = vmul.f32 %v3529, %v2895
      %v3606 = vmul.f32 %v3530, %v2905
      %v3607 = vmul.f32 %v3531, %v2915
      %v3608 = vmul.f32 %v3532, %v2925
      %v3609 = vmul.f32 %v3533, %v2935
      %v3610 = vmul.f32 %v3534, %v2945
      %v3611 = vmul.f32 %v3535, %v2955
      %v3612 = vmul.f32 %v3536, %v2965
      %v3613 = vmul.f32 %v3537, %v2975
      %v3614 = vmul.f32 %v3538, %v2985
      %v3615 = vmul.f32 %v3539, %v2995
      %v3616 = vmul.f32 %v3540, %v3005
      %v3617 = vmul.f32 %v3541, %v3015
      %v3618 = vmul.f32 %v3542, %v3025
      %v3619 = vmul.f32 %v3543, %v3035
      %v3620 = vmul.f32 %v3544, %v3045
      %v3621 = vmul.f32 %v3545, %v3055
      %v3622 = vmul.f32 %v3546, %v3065
      %v3623 = vmul.f32 %v3547, %v3075
      %v3624 = vmul.f32 %v3548, %v3085
      %v3625 = vmul.f32 %v3549, %v3095
      %v3626 = vmul.f32 %v3550, %v3105
      %v3627 = vmul.f32 %v3551, %v3115
      %v3628 = vmul.f32 %v3552, %v3125
      %v3629 = vmul.f32 %v3553, %v3135
      %v3630 = vmul.f32 %v3554, %v3145
      %v3631 = vmul.f32 %v3555, %v3155
      %v3632 = vmul.f32 %v3556, %v3165
      %v3633 = vmul.f32 %v3557, %v3175
      %v3634 = vmul.f32 %v3558, %v3185
      %v3635 = vmul.f32 %v3559, %v3195
      %v3636 = vmul.f32 %v3560, %v3205
      %v3637 = vmul.f32 %v3561, %v3215
      %v3638 = vmul.f32 %v3562, %v3225
      %v3639 = vmul.f32 %v3563, %v3235
      %v3640 = vmul.f32 %v3564, %v3245
      %v3641 = vmul.f32 %v3565, %v3255
      %v3642 = vmul.f32 %v3566, %v3265
      %v3643 = vmul.f32 %v3567, %v3275
      %v3644 = vmul.f32 %v3568, %v3285
      %v3645 = vmul.f32 %v3569, %v3295
      %v3646 = vmul.f32 %v3570, %v3305
      %v3647 = vmul.f32 %v3571, %v3315
      %v3648 = vmul.f32 %v3572, %v3325
      %v3649 = vmul.f32 %v3573, %v3335
      %v3650 = vmul.f32 %v3574, %v3345
      %v3651 = vmul.f32 %v3575, %v3355
      %v3652 = vmul.f32 %v3576, %v3365
      %v3653 = vmul.f32 %v3577, %v3375
      %v3654 = vmul.f32 %v3578, %v3385
      %v3655 = vmul.f32 %v3579, %v3395
      %v3656 = vmul.f32 %v3580, %v3405
      %v3657 = vmul.f32 %v3581, %v3415
      %v3658 = vmul.f32 %v3582, %v3425
      %v3659 = vmul.f32 %v3583, %v3435
      %v3660 = vmul.f32 %v3584, %v3445
      %v3661 = vmul.f32 %v3585, %v3455
      %v3662 = vmul.f32 %v3586, %v3465
      %v3663 = vmul.f32 %v3587, %v3475
      %v3664 = vmul.f32 %v3588, %v3485
      %v3665 = vmul.f32 %v3589, %v3495
      %v3666 = vmul.f32 %v3590, %v3505
      %v3667 = vmul.f32 %v3591, %v3515
      %v3668 = vld [vmem:[%s267] sm:$0xff]
      %v3669 = vld [vmem:[%s267 + $0x8] sm:$0xff]
      %v3670 = vld [vmem:[%s267 + $0x10] sm:$0xff]
      %v3671 = vld [vmem:[%s267 + $0x18] sm:$0xff]
      %v3672 = vld [vmem:[%s267 + $0x20] sm:$0xff]
      %v3673 = vld [vmem:[%s267 + $0x28] sm:$0xff]
      %v3674 = vld [vmem:[%s267 + $0x30] sm:$0xff]
      %v3675 = vld [vmem:[%s267 + $0x38] sm:$0xff]
      %v3676 = vld [vmem:[%s267 + $0x40] sm:$0xff]
      %v3677 = vld [vmem:[%s267 + $0x48] sm:$0xff]
      %v3678 = vld [vmem:[%s267 + $0x50] sm:$0xff]
      %v3679 = vld [vmem:[%s267 + $0x58] sm:$0xff]
      %v3680 = vld [vmem:[%s267 + $0x60] sm:$0xff]
      %v3681 = vld [vmem:[%s267 + $0x68] sm:$0xff]
      %v3682 = vld [vmem:[%s267 + $0x70] sm:$0xff]
      %v3683 = vld [vmem:[%s267 + $0x78] sm:$0xff]
      %v3684 = vld [vmem:[%s267 + $0x80] sm:$0xff]
      %v3685 = vld [vmem:[%s267 + $0x88] sm:$0xff]
      %v3686 = vld [vmem:[%s267 + $0x90] sm:$0xff]
      %v3687 = vld [vmem:[%s267 + $0x98] sm:$0xff]
      %v3688 = vld [vmem:[%s267 + $0xa0] sm:$0xff]
      %v3689 = vld [vmem:[%s267 + $0xa8] sm:$0xff]
      %v3690 = vld [vmem:[%s267 + $0xb0] sm:$0xff]
      %v3691 = vld [vmem:[%s267 + $0xb8] sm:$0xff]
      %v3692 = vld [vmem:[%s267 + $0xc0] sm:$0xff]
      %v3693 = vld [vmem:[%s267 + $0xc8] sm:$0xff]
      %v3694 = vld [vmem:[%s267 + $0xd0] sm:$0xff]
      %v3695 = vld [vmem:[%s267 + $0xd8] sm:$0xff]
      %v3696 = vld [vmem:[%s267 + $0xe0] sm:$0xff]
      %v3697 = vld [vmem:[%s267 + $0xe8] sm:$0xff]
      %v3698 = vld [vmem:[%s267 + $0xf0] sm:$0xff]
      %v3699 = vld [vmem:[%s267 + $0xf8] sm:$0xff]
      %v3700 = vld [vmem:[%s267 + $0x100] sm:$0xff]
      %v3701 = vld [vmem:[%s267 + $0x108] sm:$0xff]
      %v3702 = vld [vmem:[%s267 + $0x110] sm:$0xff]
      %v3703 = vld [vmem:[%s267 + $0x118] sm:$0xff]
      %v3704 = vld [vmem:[%s267 + $0x120] sm:$0xff]
      %v3705 = vld [vmem:[%s267 + $0x128] sm:$0xff]
      %v3706 = vld [vmem:[%s267 + $0x130] sm:$0xff]
      %v3707 = vld [vmem:[%s267 + $0x138] sm:$0xff]
      %v3708 = vld [vmem:[%s267 + $0x140] sm:$0xff]
      %v3709 = vld [vmem:[%s267 + $0x148] sm:$0xff]
      %v3710 = vld [vmem:[%s267 + $0x150] sm:$0xff]
      %v3711 = vld [vmem:[%s267 + $0x158] sm:$0xff]
      %v3712 = vld [vmem:[%s267 + $0x160] sm:$0xff]
      %v3713 = vld [vmem:[%s267 + $0x168] sm:$0xff]
      %v3714 = vld [vmem:[%s267 + $0x170] sm:$0xff]
      %v3715 = vld [vmem:[%s267 + $0x178] sm:$0xff]
      %v3716 = vld [vmem:[%s267 + $0x180] sm:$0xff]
      %v3717 = vld [vmem:[%s267 + $0x188] sm:$0xff]
      %v3718 = vld [vmem:[%s267 + $0x190] sm:$0xff]
      %v3719 = vld [vmem:[%s267 + $0x198] sm:$0xff]
      %v3720 = vld [vmem:[%s267 + $0x1a0] sm:$0xff]
      %v3721 = vld [vmem:[%s267 + $0x1a8] sm:$0xff]
      %v3722 = vld [vmem:[%s267 + $0x1b0] sm:$0xff]
      %v3723 = vld [vmem:[%s267 + $0x1b8] sm:$0xff]
      %v3724 = vld [vmem:[%s267 + $0x1c0] sm:$0xff]
      %v3725 = vld [vmem:[%s267 + $0x1c8] sm:$0xff]
      %v3726 = vld [vmem:[%s267 + $0x1d0] sm:$0xff]
      %v3727 = vld [vmem:[%s267 + $0x1d8] sm:$0xff]
      %v3728 = vld [vmem:[%s267 + $0x1e0] sm:$0xff]
      %v3729 = vld [vmem:[%s267 + $0x1e8] sm:$0xff]
      %v3730 = vld [vmem:[%s267 + $0x1f0] sm:$0xff]
      %v3731 = vld [vmem:[%s267 + $0x1f8] sm:$0xff]
      %v3732 = vld [vmem:[%s267 + $0x200] sm:$0xff]
      %v3733 = vld [vmem:[%s267 + $0x208] sm:$0xff]
      %v3734 = vld [vmem:[%s267 + $0x210] sm:$0xff]
      %v3735 = vld [vmem:[%s267 + $0x218] sm:$0xff]
      %v3736 = vld [vmem:[%s267 + $0x220] sm:$0xff]
      %v3737 = vld [vmem:[%s267 + $0x228] sm:$0xff]
      %v3738 = vld [vmem:[%s267 + $0x230] sm:$0xff]
      %v3739 = vld [vmem:[%s267 + $0x238] sm:$0xff]
      %v3740 = vld [vmem:[%s267 + $0x240] sm:$0xff]
      %v3741 = vld [vmem:[%s267 + $0x248] sm:$0xff]
      %v3742 = vld [vmem:[%s267 + $0x250] sm:$0xff]
      %v3743 = vld [vmem:[%s267 + $0x258] sm:$0xff]
      %v3744 = vmul.f32 %v2376, %v3592
      %v3745 = vmul.f32 %v2377, %v3593
      %v3746 = vmul.f32 %v2378, %v3594
      %v3747 = vmul.f32 %v2379, %v3595
      %v3748 = vmul.f32 %v2380, %v3596
      %v3749 = vmul.f32 %v2381, %v3597
      %v3750 = vmul.f32 %v2382, %v3598
      %v3751 = vmul.f32 %v2383, %v3599
      %v3752 = vmul.f32 %v2384, %v3600
      %v3753 = vmul.f32 %v2385, %v3601
      %v3754 = vmul.f32 %v2386, %v3602
      %v3755 = vmul.f32 %v2387, %v3603
      %v3756 = vmul.f32 %v2388, %v3604
      %v3757 = vmul.f32 %v2389, %v3605
      %v3758 = vmul.f32 %v2390, %v3606
      %v3759 = vmul.f32 %v2391, %v3607
      %v3760 = vmul.f32 %v2392, %v3608
      %v3761 = vmul.f32 %v2393, %v3609
      %v3762 = vmul.f32 %v2394, %v3610
      %v3763 = vmul.f32 %v2395, %v3611
      %v3764 = vmul.f32 %v2396, %v3612
      %v3765 = vmul.f32 %v2397, %v3613
      %v3766 = vmul.f32 %v2398, %v3614
      %v3767 = vmul.f32 %v2399, %v3615
      %v3768 = vmul.f32 %v2400, %v3616
      %v3769 = vmul.f32 %v2401, %v3617
      %v3770 = vmul.f32 %v2402, %v3618
      %v3771 = vmul.f32 %v2403, %v3619
      %v3772 = vmul.f32 %v2404, %v3620
      %v3773 = vmul.f32 %v2405, %v3621
      %v3774 = vmul.f32 %v2406, %v3622
      %v3775 = vmul.f32 %v2407, %v3623
      %v3776 = vmul.f32 %v2408, %v3624
      %v3777 = vmul.f32 %v2409, %v3625
      %v3778 = vmul.f32 %v2410, %v3626
      %v3779 = vmul.f32 %v2411, %v3627
      %v3780 = vmul.f32 %v2412, %v3628
      %v3781 = vmul.f32 %v2413, %v3629
      %v3782 = vmul.f32 %v2414, %v3630
      %v3783 = vmul.f32 %v2415, %v3631
      %v3784 = vmul.f32 %v2416, %v3632
      %v3785 = vmul.f32 %v2417, %v3633
      %v3786 = vmul.f32 %v2418, %v3634
      %v3787 = vmul.f32 %v2419, %v3635
      %v3788 = vmul.f32 %v2420, %v3636
      %v3789 = vmul.f32 %v2421, %v3637
      %v3790 = vmul.f32 %v2422, %v3638
      %v3791 = vmul.f32 %v2423, %v3639
      %v3792 = vmul.f32 %v2424, %v3640
      %v3793 = vmul.f32 %v2425, %v3641
      %v3794 = vmul.f32 %v2426, %v3642
      %v3795 = vmul.f32 %v2427, %v3643
      %v3796 = vmul.f32 %v2428, %v3644
      %v3797 = vmul.f32 %v2429, %v3645
      %v3798 = vmul.f32 %v2430, %v3646
      %v3799 = vmul.f32 %v2431, %v3647
      %v3800 = vmul.f32 %v2432, %v3648
      %v3801 = vmul.f32 %v2433, %v3649
      %v3802 = vmul.f32 %v2434, %v3650
      %v3803 = vmul.f32 %v2435, %v3651
      %v3804 = vmul.f32 %v2436, %v3652
      %v3805 = vmul.f32 %v2437, %v3653
      %v3806 = vmul.f32 %v2438, %v3654
      %v3807 = vmul.f32 %v2439, %v3655
      %v3808 = vmul.f32 %v2440, %v3656
      %v3809 = vmul.f32 %v2441, %v3657
      %v3810 = vmul.f32 %v2442, %v3658
      %v3811 = vmul.f32 %v2443, %v3659
      %v3812 = vmul.f32 %v2444, %v3660
      %v3813 = vmul.f32 %v2445, %v3661
      %v3814 = vmul.f32 %v2446, %v3662
      %v3815 = vmul.f32 %v2447, %v3663
      %v3816 = vmul.f32 %v2448, %v3664
      %v3817 = vmul.f32 %v2449, %v3665
      %v3818 = vmul.f32 %v2450, %v3666
      %v3819 = vmul.f32 %v2451, %v3667
      %v3820 = vsub.f32 %v3668, %v3744
      %v3821 = vsub.f32 %v3669, %v3745
      %v3822 = vsub.f32 %v3670, %v3746
      %v3823 = vsub.f32 %v3671, %v3747
      %v3824 = vsub.f32 %v3672, %v3748
      %v3825 = vsub.f32 %v3673, %v3749
      %v3826 = vsub.f32 %v3674, %v3750
      %v3827 = vsub.f32 %v3675, %v3751
      %v3828 = vsub.f32 %v3676, %v3752
      %v3829 = vsub.f32 %v3677, %v3753
      %v3830 = vsub.f32 %v3678, %v3754
      %v3831 = vsub.f32 %v3679, %v3755
      %v3832 = vsub.f32 %v3680, %v3756
      %v3833 = vsub.f32 %v3681, %v3757
      %v3834 = vsub.f32 %v3682, %v3758
      %v3835 = vsub.f32 %v3683, %v3759
      %v3836 = vsub.f32 %v3684, %v3760
      %v3837 = vsub.f32 %v3685, %v3761
      %v3838 = vsub.f32 %v3686, %v3762
      %v3839 = vsub.f32 %v3687, %v3763
      %v3840 = vsub.f32 %v3688, %v3764
      %v3841 = vsub.f32 %v3689, %v3765
      %v3842 = vsub.f32 %v3690, %v3766
      %v3843 = vsub.f32 %v3691, %v3767
      %v3844 = vsub.f32 %v3692, %v3768
      %v3845 = vsub.f32 %v3693, %v3769
      %v3846 = vsub.f32 %v3694, %v3770
      %v3847 = vsub.f32 %v3695, %v3771
      %v3848 = vsub.f32 %v3696, %v3772
      %v3849 = vsub.f32 %v3697, %v3773
      %v3850 = vsub.f32 %v3698, %v3774
      %v3851 = vsub.f32 %v3699, %v3775
      %v3852 = vsub.f32 %v3700, %v3776
      %v3853 = vsub.f32 %v3701, %v3777
      %v3854 = vsub.f32 %v3702, %v3778
      %v3855 = vsub.f32 %v3703, %v3779
      %v3856 = vsub.f32 %v3704, %v3780
      %v3857 = vsub.f32 %v3705, %v3781
      %v3858 = vsub.f32 %v3706, %v3782
      %v3859 = vsub.f32 %v3707, %v3783
      %v3860 = vsub.f32 %v3708, %v3784
      %v3861 = vsub.f32 %v3709, %v3785
      %v3862 = vsub.f32 %v3710, %v3786
      %v3863 = vsub.f32 %v3711, %v3787
      %v3864 = vsub.f32 %v3712, %v3788
      %v3865 = vsub.f32 %v3713, %v3789
      %v3866 = vsub.f32 %v3714, %v3790
      %v3867 = vsub.f32 %v3715, %v3791
      %v3868 = vsub.f32 %v3716, %v3792
      %v3869 = vsub.f32 %v3717, %v3793
      %v3870 = vsub.f32 %v3718, %v3794
      %v3871 = vsub.f32 %v3719, %v3795
      %v3872 = vsub.f32 %v3720, %v3796
      %v3873 = vsub.f32 %v3721, %v3797
      %v3874 = vsub.f32 %v3722, %v3798
      %v3875 = vsub.f32 %v3723, %v3799
      %v3876 = vsub.f32 %v3724, %v3800
      %v3877 = vsub.f32 %v3725, %v3801
      %v3878 = vsub.f32 %v3726, %v3802
      %v3879 = vsub.f32 %v3727, %v3803
      %v3880 = vsub.f32 %v3728, %v3804
      %v3881 = vsub.f32 %v3729, %v3805
      %v3882 = vsub.f32 %v3730, %v3806
      %v3883 = vsub.f32 %v3731, %v3807
      %v3884 = vsub.f32 %v3732, %v3808
      %v3885 = vsub.f32 %v3733, %v3809
      %v3886 = vsub.f32 %v3734, %v3810
      %v3887 = vsub.f32 %v3735, %v3811
      %v3888 = vsub.f32 %v3736, %v3812
      %v3889 = vsub.f32 %v3737, %v3813
      %v3890 = vsub.f32 %v3738, %v3814
      %v3891 = vsub.f32 %v3739, %v3815
      %v3892 = vsub.f32 %v3740, %v3816
      %v3893 = vsub.f32 %v3741, %v3817
      %v3894 = vsub.f32 %v3742, %v3818
      %v3895 = vsub.f32 %v3743, %v3819
      %3897 = vset.pattern.permute.xlu0 0
      %3898 = vperm.xlu0 %3897, %v3592
      %v3899 = vpop.permute.xlu0 %3898
      %3902 = vset.pattern.permute.xlu0 0
      %3903 = vperm.xlu0 %3902, %v3593
      %v3904 = vpop.permute.xlu0 %3903
      %3907 = vset.pattern.permute.xlu0 0
      %3908 = vperm.xlu0 %3907, %v3594
      %v3909 = vpop.permute.xlu0 %3908
      %3912 = vset.pattern.permute.xlu0 0
      %3913 = vperm.xlu0 %3912, %v3595
      %v3914 = vpop.permute.xlu0 %3913
      %3917 = vset.pattern.permute.xlu0 0
      %3918 = vperm.xlu0 %3917, %v3596
      %v3919 = vpop.permute.xlu0 %3918
      %3922 = vset.pattern.permute.xlu0 0
      %3923 = vperm.xlu0 %3922, %v3597
      %v3924 = vpop.permute.xlu0 %3923
      %3927 = vset.pattern.permute.xlu0 0
      %3928 = vperm.xlu0 %3927, %v3598
      %v3929 = vpop.permute.xlu0 %3928
      %3932 = vset.pattern.permute.xlu0 0
      %3933 = vperm.xlu0 %3932, %v3599
      %v3934 = vpop.permute.xlu0 %3933
      %3937 = vset.pattern.permute.xlu0 0
      %3938 = vperm.xlu0 %3937, %v3600
      %v3939 = vpop.permute.xlu0 %3938
      %3942 = vset.pattern.permute.xlu0 0
      %3943 = vperm.xlu0 %3942, %v3601
      %v3944 = vpop.permute.xlu0 %3943
      %3947 = vset.pattern.permute.xlu0 0
      %3948 = vperm.xlu0 %3947, %v3602
      %v3949 = vpop.permute.xlu0 %3948
      %3952 = vset.pattern.permute.xlu0 0
      %3953 = vperm.xlu0 %3952, %v3603
      %v3954 = vpop.permute.xlu0 %3953
      %3957 = vset.pattern.permute.xlu0 0
      %3958 = vperm.xlu0 %3957, %v3604
      %v3959 = vpop.permute.xlu0 %3958
      %3962 = vset.pattern.permute.xlu0 0
      %3963 = vperm.xlu0 %3962, %v3605
      %v3964 = vpop.permute.xlu0 %3963
      %3967 = vset.pattern.permute.xlu0 0
      %3968 = vperm.xlu0 %3967, %v3606
      %v3969 = vpop.permute.xlu0 %3968
      %3972 = vset.pattern.permute.xlu0 0
      %3973 = vperm.xlu0 %3972, %v3607
      %v3974 = vpop.permute.xlu0 %3973
      %3977 = vset.pattern.permute.xlu0 0
      %3978 = vperm.xlu0 %3977, %v3608
      %v3979 = vpop.permute.xlu0 %3978
      %3982 = vset.pattern.permute.xlu0 0
      %3983 = vperm.xlu0 %3982, %v3609
      %v3984 = vpop.permute.xlu0 %3983
      %3987 = vset.pattern.permute.xlu0 0
      %3988 = vperm.xlu0 %3987, %v3610
      %v3989 = vpop.permute.xlu0 %3988
      %3992 = vset.pattern.permute.xlu0 0
      %3993 = vperm.xlu0 %3992, %v3611
      %v3994 = vpop.permute.xlu0 %3993
      %3997 = vset.pattern.permute.xlu0 0
      %3998 = vperm.xlu0 %3997, %v3612
      %v3999 = vpop.permute.xlu0 %3998
      %4002 = vset.pattern.permute.xlu0 0
      %4003 = vperm.xlu0 %4002, %v3613
      %v4004 = vpop.permute.xlu0 %4003
      %4007 = vset.pattern.permute.xlu0 0
      %4008 = vperm.xlu0 %4007, %v3614
      %v4009 = vpop.permute.xlu0 %4008
      %4012 = vset.pattern.permute.xlu0 0
      %4013 = vperm.xlu0 %4012, %v3615
      %v4014 = vpop.permute.xlu0 %4013
      %4017 = vset.pattern.permute.xlu0 0
      %4018 = vperm.xlu0 %4017, %v3616
      %v4019 = vpop.permute.xlu0 %4018
      %4022 = vset.pattern.permute.xlu0 0
      %4023 = vperm.xlu0 %4022, %v3617
      %v4024 = vpop.permute.xlu0 %4023
      %4027 = vset.pattern.permute.xlu0 0
      %4028 = vperm.xlu0 %4027, %v3618
      %v4029 = vpop.permute.xlu0 %4028
      %4032 = vset.pattern.permute.xlu0 0
      %4033 = vperm.xlu0 %4032, %v3619
      %v4034 = vpop.permute.xlu0 %4033
      %4037 = vset.pattern.permute.xlu0 0
      %4038 = vperm.xlu0 %4037, %v3620
      %v4039 = vpop.permute.xlu0 %4038
      %4042 = vset.pattern.permute.xlu0 0
      %4043 = vperm.xlu0 %4042, %v3621
      %v4044 = vpop.permute.xlu0 %4043
      %4047 = vset.pattern.permute.xlu0 0
      %4048 = vperm.xlu0 %4047, %v3622
      %v4049 = vpop.permute.xlu0 %4048
      %4052 = vset.pattern.permute.xlu0 0
      %4053 = vperm.xlu0 %4052, %v3623
      %v4054 = vpop.permute.xlu0 %4053
      %4057 = vset.pattern.permute.xlu0 0
      %4058 = vperm.xlu0 %4057, %v3624
      %v4059 = vpop.permute.xlu0 %4058
      %4062 = vset.pattern.permute.xlu0 0
      %4063 = vperm.xlu0 %4062, %v3625
      %v4064 = vpop.permute.xlu0 %4063
      %4067 = vset.pattern.permute.xlu0 0
      %4068 = vperm.xlu0 %4067, %v3626
      %v4069 = vpop.permute.xlu0 %4068
      %4072 = vset.pattern.permute.xlu0 0
      %4073 = vperm.xlu0 %4072, %v3627
      %v4074 = vpop.permute.xlu0 %4073
      %4077 = vset.pattern.permute.xlu0 0
      %4078 = vperm.xlu0 %4077, %v3628
      %v4079 = vpop.permute.xlu0 %4078
      %4082 = vset.pattern.permute.xlu0 0
      %4083 = vperm.xlu0 %4082, %v3629
      %v4084 = vpop.permute.xlu0 %4083
      %4087 = vset.pattern.permute.xlu0 0
      %4088 = vperm.xlu0 %4087, %v3630
      %v4089 = vpop.permute.xlu0 %4088
      %4092 = vset.pattern.permute.xlu0 0
      %4093 = vperm.xlu0 %4092, %v3631
      %v4094 = vpop.permute.xlu0 %4093
      %4097 = vset.pattern.permute.xlu0 0
      %4098 = vperm.xlu0 %4097, %v3632
      %v4099 = vpop.permute.xlu0 %4098
      %4102 = vset.pattern.permute.xlu0 0
      %4103 = vperm.xlu0 %4102, %v3633
      %v4104 = vpop.permute.xlu0 %4103
      %4107 = vset.pattern.permute.xlu0 0
      %4108 = vperm.xlu0 %4107, %v3634
      %v4109 = vpop.permute.xlu0 %4108
      %4112 = vset.pattern.permute.xlu0 0
      %4113 = vperm.xlu0 %4112, %v3635
      %v4114 = vpop.permute.xlu0 %4113
      %4117 = vset.pattern.permute.xlu0 0
      %4118 = vperm.xlu0 %4117, %v3636
      %v4119 = vpop.permute.xlu0 %4118
      %4122 = vset.pattern.permute.xlu0 0
      %4123 = vperm.xlu0 %4122, %v3637
      %v4124 = vpop.permute.xlu0 %4123
      %4127 = vset.pattern.permute.xlu0 0
      %4128 = vperm.xlu0 %4127, %v3638
      %v4129 = vpop.permute.xlu0 %4128
      %4132 = vset.pattern.permute.xlu0 0
      %4133 = vperm.xlu0 %4132, %v3639
      %v4134 = vpop.permute.xlu0 %4133
      %4137 = vset.pattern.permute.xlu0 0
      %4138 = vperm.xlu0 %4137, %v3640
      %v4139 = vpop.permute.xlu0 %4138
      %4142 = vset.pattern.permute.xlu0 0
      %4143 = vperm.xlu0 %4142, %v3641
      %v4144 = vpop.permute.xlu0 %4143
      %4147 = vset.pattern.permute.xlu0 0
      %4148 = vperm.xlu0 %4147, %v3642
      %v4149 = vpop.permute.xlu0 %4148
      %4152 = vset.pattern.permute.xlu0 0
      %4153 = vperm.xlu0 %4152, %v3643
      %v4154 = vpop.permute.xlu0 %4153
      %4157 = vset.pattern.permute.xlu0 0
      %4158 = vperm.xlu0 %4157, %v3644
      %v4159 = vpop.permute.xlu0 %4158
      %4162 = vset.pattern.permute.xlu0 0
      %4163 = vperm.xlu0 %4162, %v3645
      %v4164 = vpop.permute.xlu0 %4163
      %4167 = vset.pattern.permute.xlu0 0
      %4168 = vperm.xlu0 %4167, %v3646
      %v4169 = vpop.permute.xlu0 %4168
      %4172 = vset.pattern.permute.xlu0 0
      %4173 = vperm.xlu0 %4172, %v3647
      %v4174 = vpop.permute.xlu0 %4173
      %4177 = vset.pattern.permute.xlu0 0
      %4178 = vperm.xlu0 %4177, %v3648
      %v4179 = vpop.permute.xlu0 %4178
      %4182 = vset.pattern.permute.xlu0 0
      %4183 = vperm.xlu0 %4182, %v3649
      %v4184 = vpop.permute.xlu0 %4183
      %4187 = vset.pattern.permute.xlu0 0
      %4188 = vperm.xlu0 %4187, %v3650
      %v4189 = vpop.permute.xlu0 %4188
      %4192 = vset.pattern.permute.xlu0 0
      %4193 = vperm.xlu0 %4192, %v3651
      %v4194 = vpop.permute.xlu0 %4193
      %4197 = vset.pattern.permute.xlu0 0
      %4198 = vperm.xlu0 %4197, %v3652
      %v4199 = vpop.permute.xlu0 %4198
      %4202 = vset.pattern.permute.xlu0 0
      %4203 = vperm.xlu0 %4202, %v3653
      %v4204 = vpop.permute.xlu0 %4203
      %4207 = vset.pattern.permute.xlu0 0
      %4208 = vperm.xlu0 %4207, %v3654
      %v4209 = vpop.permute.xlu0 %4208
      %4212 = vset.pattern.permute.xlu0 0
      %4213 = vperm.xlu0 %4212, %v3655
      %v4214 = vpop.permute.xlu0 %4213
      %4217 = vset.pattern.permute.xlu0 0
      %4218 = vperm.xlu0 %4217, %v3656
      %v4219 = vpop.permute.xlu0 %4218
      %4222 = vset.pattern.permute.xlu0 0
      %4223 = vperm.xlu0 %4222, %v3657
      %v4224 = vpop.permute.xlu0 %4223
      %4227 = vset.pattern.permute.xlu0 0
      %4228 = vperm.xlu0 %4227, %v3658
      %v4229 = vpop.permute.xlu0 %4228
      %4232 = vset.pattern.permute.xlu0 0
      %4233 = vperm.xlu0 %4232, %v3659
      %v4234 = vpop.permute.xlu0 %4233
      %4237 = vset.pattern.permute.xlu0 0
      %4238 = vperm.xlu0 %4237, %v3660
      %v4239 = vpop.permute.xlu0 %4238
      %4242 = vset.pattern.permute.xlu0 0
      %4243 = vperm.xlu0 %4242, %v3661
      %v4244 = vpop.permute.xlu0 %4243
      %4247 = vset.pattern.permute.xlu0 0
      %4248 = vperm.xlu0 %4247, %v3662
      %v4249 = vpop.permute.xlu0 %4248
      %4252 = vset.pattern.permute.xlu0 0
      %4253 = vperm.xlu0 %4252, %v3663
      %v4254 = vpop.permute.xlu0 %4253
      %4257 = vset.pattern.permute.xlu0 0
      %4258 = vperm.xlu0 %4257, %v3664
      %v4259 = vpop.permute.xlu0 %4258
      %4262 = vset.pattern.permute.xlu0 0
      %4263 = vperm.xlu0 %4262, %v3665
      %v4264 = vpop.permute.xlu0 %4263
      %4267 = vset.pattern.permute.xlu0 0
      %4268 = vperm.xlu0 %4267, %v3666
      %v4269 = vpop.permute.xlu0 %4268
      %4272 = vset.pattern.permute.xlu0 0
      %4273 = vperm.xlu0 %4272, %v3667
      %v4274 = vpop.permute.xlu0 %4273
      %v4276 = vmul.f32 %v1654, %v3899
      %v4277 = vmul.f32 %v1656, %v3904
      %v4278 = vmul.f32 %v1659, %v3909
      %v4279 = vmul.f32 %v1661, %v3914
      %v4280 = vmul.f32 %v1664, %v3919
      %v4281 = vmul.f32 %v1666, %v3924
      %v4282 = vmul.f32 %v1669, %v3929
      %v4283 = vmul.f32 %v1671, %v3934
      %v4284 = vmul.f32 %v1674, %v3939
      %v4285 = vmul.f32 %v1676, %v3944
      %v4286 = vmul.f32 %v1679, %v3949
      %v4287 = vmul.f32 %v1681, %v3954
      %v4288 = vmul.f32 %v1684, %v3959
      %v4289 = vmul.f32 %v1686, %v3964
      %v4290 = vmul.f32 %v1689, %v3969
      %v4291 = vmul.f32 %v1691, %v3974
      %v4292 = vmul.f32 %v1694, %v3979
      %v4293 = vmul.f32 %v1696, %v3984
      %v4294 = vmul.f32 %v1699, %v3989
      %v4295 = vmul.f32 %v1701, %v3994
      %v4296 = vmul.f32 %v1704, %v3999
      %v4297 = vmul.f32 %v1706, %v4004
      %v4298 = vmul.f32 %v1709, %v4009
      %v4299 = vmul.f32 %v1711, %v4014
      %v4300 = vmul.f32 %v1714, %v4019
      %v4301 = vmul.f32 %v1716, %v4024
      %v4302 = vmul.f32 %v1719, %v4029
      %v4303 = vmul.f32 %v1721, %v4034
      %v4304 = vmul.f32 %v1724, %v4039
      %v4305 = vmul.f32 %v1726, %v4044
      %v4306 = vmul.f32 %v1729, %v4049
      %v4307 = vmul.f32 %v1731, %v4054
      %v4308 = vmul.f32 %v1734, %v4059
      %v4309 = vmul.f32 %v1736, %v4064
      %v4310 = vmul.f32 %v1739, %v4069
      %v4311 = vmul.f32 %v1741, %v4074
      %v4312 = vmul.f32 %v1744, %v4079
      %v4313 = vmul.f32 %v1746, %v4084
      %v4314 = vmul.f32 %v1749, %v4089
      %v4315 = vmul.f32 %v1751, %v4094
      %v4316 = vmul.f32 %v1754, %v4099
      %v4317 = vmul.f32 %v1756, %v4104
      %v4318 = vmul.f32 %v1759, %v4109
      %v4319 = vmul.f32 %v1761, %v4114
      %v4320 = vmul.f32 %v1764, %v4119
      %v4321 = vmul.f32 %v1766, %v4124
      %v4322 = vmul.f32 %v1769, %v4129
      %v4323 = vmul.f32 %v1771, %v4134
      %v4324 = vmul.f32 %v1774, %v4139
      %v4325 = vmul.f32 %v1776, %v4144
      %v4326 = vmul.f32 %v1779, %v4149
      %v4327 = vmul.f32 %v1781, %v4154
      %v4328 = vmul.f32 %v1784, %v4159
      %v4329 = vmul.f32 %v1786, %v4164
      %v4330 = vmul.f32 %v1789, %v4169
      %v4331 = vmul.f32 %v1791, %v4174
      %v4332 = vmul.f32 %v1794, %v4179
      %v4333 = vmul.f32 %v1796, %v4184
      %v4334 = vmul.f32 %v1799, %v4189
      %v4335 = vmul.f32 %v1801, %v4194
      %v4336 = vmul.f32 %v1804, %v4199
      %v4337 = vmul.f32 %v1806, %v4204
      %v4338 = vmul.f32 %v1809, %v4209
      %v4339 = vmul.f32 %v1811, %v4214
      %v4340 = vmul.f32 %v1814, %v4219
      %v4341 = vmul.f32 %v1816, %v4224
      %v4342 = vmul.f32 %v1819, %v4229
      %v4343 = vmul.f32 %v1821, %v4234
      %v4344 = vmul.f32 %v1824, %v4239
      %v4345 = vmul.f32 %v1826, %v4244
      %v4346 = vmul.f32 %v1829, %v4249
      %v4347 = vmul.f32 %v1831, %v4254
      %v4348 = vmul.f32 %v1834, %v4259
      %v4349 = vmul.f32 %v1836, %v4264
      %v4350 = vmul.f32 %v1839, %v4269
      %v4351 = vmul.f32 %v1841, %v4274
      %4353 = vset.pattern.permute.xlu0 0
      %4354 = vperm.xlu0 %4353, %v3820
      %v4355 = vpop.permute.xlu0 %4354
      %4358 = vset.pattern.permute.xlu0 0
      %4359 = vperm.xlu0 %4358, %v3821
      %v4360 = vpop.permute.xlu0 %4359
      %4363 = vset.pattern.permute.xlu0 0
      %4364 = vperm.xlu0 %4363, %v3822
      %v4365 = vpop.permute.xlu0 %4364
      %4368 = vset.pattern.permute.xlu0 0
      %4369 = vperm.xlu0 %4368, %v3823
      %v4370 = vpop.permute.xlu0 %4369
      %4373 = vset.pattern.permute.xlu0 0
      %4374 = vperm.xlu0 %4373, %v3824
      %v4375 = vpop.permute.xlu0 %4374
      %4378 = vset.pattern.permute.xlu0 0
      %4379 = vperm.xlu0 %4378, %v3825
      %v4380 = vpop.permute.xlu0 %4379
      %4383 = vset.pattern.permute.xlu0 0
      %4384 = vperm.xlu0 %4383, %v3826
      %v4385 = vpop.permute.xlu0 %4384
      %4388 = vset.pattern.permute.xlu0 0
      %4389 = vperm.xlu0 %4388, %v3827
      %v4390 = vpop.permute.xlu0 %4389
      %4393 = vset.pattern.permute.xlu0 0
      %4394 = vperm.xlu0 %4393, %v3828
      %v4395 = vpop.permute.xlu0 %4394
      %4398 = vset.pattern.permute.xlu0 0
      %4399 = vperm.xlu0 %4398, %v3829
      %v4400 = vpop.permute.xlu0 %4399
      %4403 = vset.pattern.permute.xlu0 0
      %4404 = vperm.xlu0 %4403, %v3830
      %v4405 = vpop.permute.xlu0 %4404
      %4408 = vset.pattern.permute.xlu0 0
      %4409 = vperm.xlu0 %4408, %v3831
      %v4410 = vpop.permute.xlu0 %4409
      %4413 = vset.pattern.permute.xlu0 0
      %4414 = vperm.xlu0 %4413, %v3832
      %v4415 = vpop.permute.xlu0 %4414
      %4418 = vset.pattern.permute.xlu0 0
      %4419 = vperm.xlu0 %4418, %v3833
      %v4420 = vpop.permute.xlu0 %4419
      %4423 = vset.pattern.permute.xlu0 0
      %4424 = vperm.xlu0 %4423, %v3834
      %v4425 = vpop.permute.xlu0 %4424
      %4428 = vset.pattern.permute.xlu0 0
      %4429 = vperm.xlu0 %4428, %v3835
      %v4430 = vpop.permute.xlu0 %4429
      %4433 = vset.pattern.permute.xlu0 0
      %4434 = vperm.xlu0 %4433, %v3836
      %v4435 = vpop.permute.xlu0 %4434
      %4438 = vset.pattern.permute.xlu0 0
      %4439 = vperm.xlu0 %4438, %v3837
      %v4440 = vpop.permute.xlu0 %4439
      %4443 = vset.pattern.permute.xlu0 0
      %4444 = vperm.xlu0 %4443, %v3838
      %v4445 = vpop.permute.xlu0 %4444
      %4448 = vset.pattern.permute.xlu0 0
      %4449 = vperm.xlu0 %4448, %v3839
      %v4450 = vpop.permute.xlu0 %4449
      %4453 = vset.pattern.permute.xlu0 0
      %4454 = vperm.xlu0 %4453, %v3840
      %v4455 = vpop.permute.xlu0 %4454
      %4458 = vset.pattern.permute.xlu0 0
      %4459 = vperm.xlu0 %4458, %v3841
      %v4460 = vpop.permute.xlu0 %4459
      %4463 = vset.pattern.permute.xlu0 0
      %4464 = vperm.xlu0 %4463, %v3842
      %v4465 = vpop.permute.xlu0 %4464
      %4468 = vset.pattern.permute.xlu0 0
      %4469 = vperm.xlu0 %4468, %v3843
      %v4470 = vpop.permute.xlu0 %4469
      %4473 = vset.pattern.permute.xlu0 0
      %4474 = vperm.xlu0 %4473, %v3844
      %v4475 = vpop.permute.xlu0 %4474
      %4478 = vset.pattern.permute.xlu0 0
      %4479 = vperm.xlu0 %4478, %v3845
      %v4480 = vpop.permute.xlu0 %4479
      %4483 = vset.pattern.permute.xlu0 0
      %4484 = vperm.xlu0 %4483, %v3846
      %v4485 = vpop.permute.xlu0 %4484
      %4488 = vset.pattern.permute.xlu0 0
      %4489 = vperm.xlu0 %4488, %v3847
      %v4490 = vpop.permute.xlu0 %4489
      %4493 = vset.pattern.permute.xlu0 0
      %4494 = vperm.xlu0 %4493, %v3848
      %v4495 = vpop.permute.xlu0 %4494
      %4498 = vset.pattern.permute.xlu0 0
      %4499 = vperm.xlu0 %4498, %v3849
      %v4500 = vpop.permute.xlu0 %4499
      %4503 = vset.pattern.permute.xlu0 0
      %4504 = vperm.xlu0 %4503, %v3850
      %v4505 = vpop.permute.xlu0 %4504
      %4508 = vset.pattern.permute.xlu0 0
      %4509 = vperm.xlu0 %4508, %v3851
      %v4510 = vpop.permute.xlu0 %4509
      %4513 = vset.pattern.permute.xlu0 0
      %4514 = vperm.xlu0 %4513, %v3852
      %v4515 = vpop.permute.xlu0 %4514
      %4518 = vset.pattern.permute.xlu0 0
      %4519 = vperm.xlu0 %4518, %v3853
      %v4520 = vpop.permute.xlu0 %4519
      %4523 = vset.pattern.permute.xlu0 0
      %4524 = vperm.xlu0 %4523, %v3854
      %v4525 = vpop.permute.xlu0 %4524
      %4528 = vset.pattern.permute.xlu0 0
      %4529 = vperm.xlu0 %4528, %v3855
      %v4530 = vpop.permute.xlu0 %4529
      %4533 = vset.pattern.permute.xlu0 0
      %4534 = vperm.xlu0 %4533, %v3856
      %v4535 = vpop.permute.xlu0 %4534
      %4538 = vset.pattern.permute.xlu0 0
      %4539 = vperm.xlu0 %4538, %v3857
      %v4540 = vpop.permute.xlu0 %4539
      %4543 = vset.pattern.permute.xlu0 0
      %4544 = vperm.xlu0 %4543, %v3858
      %v4545 = vpop.permute.xlu0 %4544
      %4548 = vset.pattern.permute.xlu0 0
      %4549 = vperm.xlu0 %4548, %v3859
      %v4550 = vpop.permute.xlu0 %4549
      %4553 = vset.pattern.permute.xlu0 0
      %4554 = vperm.xlu0 %4553, %v3860
      %v4555 = vpop.permute.xlu0 %4554
      %4558 = vset.pattern.permute.xlu0 0
      %4559 = vperm.xlu0 %4558, %v3861
      %v4560 = vpop.permute.xlu0 %4559
      %4563 = vset.pattern.permute.xlu0 0
      %4564 = vperm.xlu0 %4563, %v3862
      %v4565 = vpop.permute.xlu0 %4564
      %4568 = vset.pattern.permute.xlu0 0
      %4569 = vperm.xlu0 %4568, %v3863
      %v4570 = vpop.permute.xlu0 %4569
      %4573 = vset.pattern.permute.xlu0 0
      %4574 = vperm.xlu0 %4573, %v3864
      %v4575 = vpop.permute.xlu0 %4574
      %4578 = vset.pattern.permute.xlu0 0
      %4579 = vperm.xlu0 %4578, %v3865
      %v4580 = vpop.permute.xlu0 %4579
      %4583 = vset.pattern.permute.xlu0 0
      %4584 = vperm.xlu0 %4583, %v3866
      %v4585 = vpop.permute.xlu0 %4584
      %4588 = vset.pattern.permute.xlu0 0
      %4589 = vperm.xlu0 %4588, %v3867
      %v4590 = vpop.permute.xlu0 %4589
      %4593 = vset.pattern.permute.xlu0 0
      %4594 = vperm.xlu0 %4593, %v3868
      %v4595 = vpop.permute.xlu0 %4594
      %4598 = vset.pattern.permute.xlu0 0
      %4599 = vperm.xlu0 %4598, %v3869
      %v4600 = vpop.permute.xlu0 %4599
      %4603 = vset.pattern.permute.xlu0 0
      %4604 = vperm.xlu0 %4603, %v3870
      %v4605 = vpop.permute.xlu0 %4604
      %4608 = vset.pattern.permute.xlu0 0
      %4609 = vperm.xlu0 %4608, %v3871
      %v4610 = vpop.permute.xlu0 %4609
      %4613 = vset.pattern.permute.xlu0 0
      %4614 = vperm.xlu0 %4613, %v3872
      %v4615 = vpop.permute.xlu0 %4614
      %4618 = vset.pattern.permute.xlu0 0
      %4619 = vperm.xlu0 %4618, %v3873
      %v4620 = vpop.permute.xlu0 %4619
      %4623 = vset.pattern.permute.xlu0 0
      %4624 = vperm.xlu0 %4623, %v3874
      %v4625 = vpop.permute.xlu0 %4624
      %4628 = vset.pattern.permute.xlu0 0
      %4629 = vperm.xlu0 %4628, %v3875
      %v4630 = vpop.permute.xlu0 %4629
      %4633 = vset.pattern.permute.xlu0 0
      %4634 = vperm.xlu0 %4633, %v3876
      %v4635 = vpop.permute.xlu0 %4634
      %4638 = vset.pattern.permute.xlu0 0
      %4639 = vperm.xlu0 %4638, %v3877
      %v4640 = vpop.permute.xlu0 %4639
      %4643 = vset.pattern.permute.xlu0 0
      %4644 = vperm.xlu0 %4643, %v3878
      %v4645 = vpop.permute.xlu0 %4644
      %4648 = vset.pattern.permute.xlu0 0
      %4649 = vperm.xlu0 %4648, %v3879
      %v4650 = vpop.permute.xlu0 %4649
      %4653 = vset.pattern.permute.xlu0 0
      %4654 = vperm.xlu0 %4653, %v3880
      %v4655 = vpop.permute.xlu0 %4654
      %4658 = vset.pattern.permute.xlu0 0
      %4659 = vperm.xlu0 %4658, %v3881
      %v4660 = vpop.permute.xlu0 %4659
      %4663 = vset.pattern.permute.xlu0 0
      %4664 = vperm.xlu0 %4663, %v3882
      %v4665 = vpop.permute.xlu0 %4664
      %4668 = vset.pattern.permute.xlu0 0
      %4669 = vperm.xlu0 %4668, %v3883
      %v4670 = vpop.permute.xlu0 %4669
      %4673 = vset.pattern.permute.xlu0 0
      %4674 = vperm.xlu0 %4673, %v3884
      %v4675 = vpop.permute.xlu0 %4674
      %4678 = vset.pattern.permute.xlu0 0
      %4679 = vperm.xlu0 %4678, %v3885
      %v4680 = vpop.permute.xlu0 %4679
      %4683 = vset.pattern.permute.xlu0 0
      %4684 = vperm.xlu0 %4683, %v3886
      %v4685 = vpop.permute.xlu0 %4684
      %4688 = vset.pattern.permute.xlu0 0
      %4689 = vperm.xlu0 %4688, %v3887
      %v4690 = vpop.permute.xlu0 %4689
      %4693 = vset.pattern.permute.xlu0 0
      %4694 = vperm.xlu0 %4693, %v3888
      %v4695 = vpop.permute.xlu0 %4694
      %4698 = vset.pattern.permute.xlu0 0
      %4699 = vperm.xlu0 %4698, %v3889
      %v4700 = vpop.permute.xlu0 %4699
      %4703 = vset.pattern.permute.xlu0 0
      %4704 = vperm.xlu0 %4703, %v3890
      %v4705 = vpop.permute.xlu0 %4704
      %4708 = vset.pattern.permute.xlu0 0
      %4709 = vperm.xlu0 %4708, %v3891
      %v4710 = vpop.permute.xlu0 %4709
      %4713 = vset.pattern.permute.xlu0 0
      %4714 = vperm.xlu0 %4713, %v3892
      %v4715 = vpop.permute.xlu0 %4714
      %4718 = vset.pattern.permute.xlu0 0
      %4719 = vperm.xlu0 %4718, %v3893
      %v4720 = vpop.permute.xlu0 %4719
      %4723 = vset.pattern.permute.xlu0 0
      %4724 = vperm.xlu0 %4723, %v3894
      %v4725 = vpop.permute.xlu0 %4724
      %4728 = vset.pattern.permute.xlu0 0
      %4729 = vperm.xlu0 %4728, %v3895
      %v4730 = vpop.permute.xlu0 %4729
      %v4732 = vadd.f32 %v4276, %v4355
      %v4733 = vadd.f32 %v4277, %v4360
      %v4734 = vadd.f32 %v4278, %v4365
      %v4735 = vadd.f32 %v4279, %v4370
      %v4736 = vadd.f32 %v4280, %v4375
      %v4737 = vadd.f32 %v4281, %v4380
      %v4738 = vadd.f32 %v4282, %v4385
      %v4739 = vadd.f32 %v4283, %v4390
      %v4740 = vadd.f32 %v4284, %v4395
      %v4741 = vadd.f32 %v4285, %v4400
      %v4742 = vadd.f32 %v4286, %v4405
      %v4743 = vadd.f32 %v4287, %v4410
      %v4744 = vadd.f32 %v4288, %v4415
      %v4745 = vadd.f32 %v4289, %v4420
      %v4746 = vadd.f32 %v4290, %v4425
      %v4747 = vadd.f32 %v4291, %v4430
      %v4748 = vadd.f32 %v4292, %v4435
      %v4749 = vadd.f32 %v4293, %v4440
      %v4750 = vadd.f32 %v4294, %v4445
      %v4751 = vadd.f32 %v4295, %v4450
      %v4752 = vadd.f32 %v4296, %v4455
      %v4753 = vadd.f32 %v4297, %v4460
      %v4754 = vadd.f32 %v4298, %v4465
      %v4755 = vadd.f32 %v4299, %v4470
      %v4756 = vadd.f32 %v4300, %v4475
      %v4757 = vadd.f32 %v4301, %v4480
      %v4758 = vadd.f32 %v4302, %v4485
      %v4759 = vadd.f32 %v4303, %v4490
      %v4760 = vadd.f32 %v4304, %v4495
      %v4761 = vadd.f32 %v4305, %v4500
      %v4762 = vadd.f32 %v4306, %v4505
      %v4763 = vadd.f32 %v4307, %v4510
      %v4764 = vadd.f32 %v4308, %v4515
      %v4765 = vadd.f32 %v4309, %v4520
      %v4766 = vadd.f32 %v4310, %v4525
      %v4767 = vadd.f32 %v4311, %v4530
      %v4768 = vadd.f32 %v4312, %v4535
      %v4769 = vadd.f32 %v4313, %v4540
      %v4770 = vadd.f32 %v4314, %v4545
      %v4771 = vadd.f32 %v4315, %v4550
      %v4772 = vadd.f32 %v4316, %v4555
      %v4773 = vadd.f32 %v4317, %v4560
      %v4774 = vadd.f32 %v4318, %v4565
      %v4775 = vadd.f32 %v4319, %v4570
      %v4776 = vadd.f32 %v4320, %v4575
      %v4777 = vadd.f32 %v4321, %v4580
      %v4778 = vadd.f32 %v4322, %v4585
      %v4779 = vadd.f32 %v4323, %v4590
      %v4780 = vadd.f32 %v4324, %v4595
      %v4781 = vadd.f32 %v4325, %v4600
      %v4782 = vadd.f32 %v4326, %v4605
      %v4783 = vadd.f32 %v4327, %v4610
      %v4784 = vadd.f32 %v4328, %v4615
      %v4785 = vadd.f32 %v4329, %v4620
      %v4786 = vadd.f32 %v4330, %v4625
      %v4787 = vadd.f32 %v4331, %v4630
      %v4788 = vadd.f32 %v4332, %v4635
      %v4789 = vadd.f32 %v4333, %v4640
      %v4790 = vadd.f32 %v4334, %v4645
      %v4791 = vadd.f32 %v4335, %v4650
      %v4792 = vadd.f32 %v4336, %v4655
      %v4793 = vadd.f32 %v4337, %v4660
      %v4794 = vadd.f32 %v4338, %v4665
      %v4795 = vadd.f32 %v4339, %v4670
      %v4796 = vadd.f32 %v4340, %v4675
      %v4797 = vadd.f32 %v4341, %v4680
      %v4798 = vadd.f32 %v4342, %v4685
      %v4799 = vadd.f32 %v4343, %v4690
      %v4800 = vadd.f32 %v4344, %v4695
      %v4801 = vadd.f32 %v4345, %v4700
      %v4802 = vadd.f32 %v4346, %v4705
      %v4803 = vadd.f32 %v4347, %v4710
      %v4804 = vadd.f32 %v4348, %v4715
      %v4805 = vadd.f32 %v4349, %v4720
      %v4806 = vadd.f32 %v4350, %v4725
      %v4807 = vadd.f32 %v4351, %v4730
      %4808 = vst.msk [vmem:[%s273] sm:$0xff] %vm1843, %v4732
      %4809 = vst.msk [vmem:[%s273 + $0x8] sm:$0xff] %vm1843, %v4733
      %4810 = vst.msk [vmem:[%s273 + $0x10] sm:$0xff] %vm1843, %v4734
      %4811 = vst.msk [vmem:[%s273 + $0x18] sm:$0xff] %vm1843, %v4735
      %4812 = vst.msk [vmem:[%s273 + $0x20] sm:$0xff] %vm1843, %v4736
      %4813 = vst.msk [vmem:[%s273 + $0x28] sm:$0xff] %vm1843, %v4737
      %4814 = vst.msk [vmem:[%s273 + $0x30] sm:$0xff] %vm1843, %v4738
      %4815 = vst.msk [vmem:[%s273 + $0x38] sm:$0xff] %vm1843, %v4739
      %4816 = vst.msk [vmem:[%s273 + $0x40] sm:$0xff] %vm1843, %v4740
      %4817 = vst.msk [vmem:[%s273 + $0x48] sm:$0xff] %vm1843, %v4741
      %4818 = vst.msk [vmem:[%s273 + $0x50] sm:$0xff] %vm1843, %v4742
      %4819 = vst.msk [vmem:[%s273 + $0x58] sm:$0xff] %vm1843, %v4743
      %4820 = vst.msk [vmem:[%s273 + $0x60] sm:$0xff] %vm1843, %v4744
      %4821 = vst.msk [vmem:[%s273 + $0x68] sm:$0xff] %vm1843, %v4745
      %4822 = vst.msk [vmem:[%s273 + $0x70] sm:$0xff] %vm1843, %v4746
      %4823 = vst.msk [vmem:[%s273 + $0x78] sm:$0xff] %vm1843, %v4747
      %4824 = vst.msk [vmem:[%s273 + $0x80] sm:$0xff] %vm1843, %v4748
      %4825 = vst.msk [vmem:[%s273 + $0x88] sm:$0xff] %vm1843, %v4749
      %4826 = vst.msk [vmem:[%s273 + $0x90] sm:$0xff] %vm1843, %v4750
      %4827 = vst.msk [vmem:[%s273 + $0x98] sm:$0xff] %vm1843, %v4751
      %4828 = vst.msk [vmem:[%s273 + $0xa0] sm:$0xff] %vm1843, %v4752
      %4829 = vst.msk [vmem:[%s273 + $0xa8] sm:$0xff] %vm1843, %v4753
      %4830 = vst.msk [vmem:[%s273 + $0xb0] sm:$0xff] %vm1843, %v4754
      %4831 = vst.msk [vmem:[%s273 + $0xb8] sm:$0xff] %vm1843, %v4755
      %4832 = vst.msk [vmem:[%s273 + $0xc0] sm:$0xff] %vm1843, %v4756
      %4833 = vst.msk [vmem:[%s273 + $0xc8] sm:$0xff] %vm1843, %v4757
      %4834 = vst.msk [vmem:[%s273 + $0xd0] sm:$0xff] %vm1843, %v4758
      %4835 = vst.msk [vmem:[%s273 + $0xd8] sm:$0xff] %vm1843, %v4759
      %4836 = vst.msk [vmem:[%s273 + $0xe0] sm:$0xff] %vm1843, %v4760
      %4837 = vst.msk [vmem:[%s273 + $0xe8] sm:$0xff] %vm1843, %v4761
      %4838 = vst.msk [vmem:[%s273 + $0xf0] sm:$0xff] %vm1843, %v4762
      %4839 = vst.msk [vmem:[%s273 + $0xf8] sm:$0xff] %vm1843, %v4763
      %4840 = vst.msk [vmem:[%s273 + $0x100] sm:$0xff] %vm1843, %v4764
      %4841 = vst.msk [vmem:[%s273 + $0x108] sm:$0xff] %vm1843, %v4765
      %4842 = vst.msk [vmem:[%s273 + $0x110] sm:$0xff] %vm1843, %v4766
      %4843 = vst.msk [vmem:[%s273 + $0x118] sm:$0xff] %vm1843, %v4767
      %4844 = vst.msk [vmem:[%s273 + $0x120] sm:$0xff] %vm1843, %v4768
      %4845 = vst.msk [vmem:[%s273 + $0x128] sm:$0xff] %vm1843, %v4769
      %4846 = vst.msk [vmem:[%s273 + $0x130] sm:$0xff] %vm1843, %v4770
      %4847 = vst.msk [vmem:[%s273 + $0x138] sm:$0xff] %vm1843, %v4771
      %4848 = vst.msk [vmem:[%s273 + $0x140] sm:$0xff] %vm1843, %v4772
      %4849 = vst.msk [vmem:[%s273 + $0x148] sm:$0xff] %vm1843, %v4773
      %4850 = vst.msk [vmem:[%s273 + $0x150] sm:$0xff] %vm1843, %v4774
      %4851 = vst.msk [vmem:[%s273 + $0x158] sm:$0xff] %vm1843, %v4775
      %4852 = vst.msk [vmem:[%s273 + $0x160] sm:$0xff] %vm1843, %v4776
      %4853 = vst.msk [vmem:[%s273 + $0x168] sm:$0xff] %vm1843, %v4777
      %4854 = vst.msk [vmem:[%s273 + $0x170] sm:$0xff] %vm1843, %v4778
      %4855 = vst.msk [vmem:[%s273 + $0x178] sm:$0xff] %vm1843, %v4779
      %4856 = vst.msk [vmem:[%s273 + $0x180] sm:$0xff] %vm1843, %v4780
      %4857 = vst.msk [vmem:[%s273 + $0x188] sm:$0xff] %vm1843, %v4781
      %4858 = vst.msk [vmem:[%s273 + $0x190] sm:$0xff] %vm1843, %v4782
      %4859 = vst.msk [vmem:[%s273 + $0x198] sm:$0xff] %vm1843, %v4783
      %4860 = vst.msk [vmem:[%s273 + $0x1a0] sm:$0xff] %vm1843, %v4784
      %4861 = vst.msk [vmem:[%s273 + $0x1a8] sm:$0xff] %vm1843, %v4785
      %4862 = vst.msk [vmem:[%s273 + $0x1b0] sm:$0xff] %vm1843, %v4786
      %4863 = vst.msk [vmem:[%s273 + $0x1b8] sm:$0xff] %vm1843, %v4787
      %4864 = vst.msk [vmem:[%s273 + $0x1c0] sm:$0xff] %vm1843, %v4788
      %4865 = vst.msk [vmem:[%s273 + $0x1c8] sm:$0xff] %vm1843, %v4789
      %4866 = vst.msk [vmem:[%s273 + $0x1d0] sm:$0xff] %vm1843, %v4790
      %4867 = vst.msk [vmem:[%s273 + $0x1d8] sm:$0xff] %vm1843, %v4791
      %4868 = vst.msk [vmem:[%s273 + $0x1e0] sm:$0xff] %vm1843, %v4792
      %4869 = vst.msk [vmem:[%s273 + $0x1e8] sm:$0xff] %vm1843, %v4793
      %4870 = vst.msk [vmem:[%s273 + $0x1f0] sm:$0xff] %vm1843, %v4794
      %4871 = vst.msk [vmem:[%s273 + $0x1f8] sm:$0xff] %vm1843, %v4795
      %4872 = vst.msk [vmem:[%s273 + $0x200] sm:$0xff] %vm1843, %v4796
      %4873 = vst.msk [vmem:[%s273 + $0x208] sm:$0xff] %vm1843, %v4797
      %4874 = vst.msk [vmem:[%s273 + $0x210] sm:$0xff] %vm1843, %v4798
      %4875 = vst.msk [vmem:[%s273 + $0x218] sm:$0xff] %vm1843, %v4799
      %4876 = vst.msk [vmem:[%s273 + $0x220] sm:$0xff] %vm1843, %v4800
      %4877 = vst.msk [vmem:[%s273 + $0x228] sm:$0xff] %vm1843, %v4801
      %4878 = vst.msk [vmem:[%s273 + $0x230] sm:$0xff] %vm1843, %v4802
      %4879 = vst.msk [vmem:[%s273 + $0x238] sm:$0xff] %vm1843, %v4803
      %4880 = vst.msk [vmem:[%s273 + $0x240] sm:$0xff] %vm1843, %v4804
      %4881 = vst.msk [vmem:[%s273 + $0x248] sm:$0xff] %vm1843, %v4805
      %4882 = vst.msk [vmem:[%s273 + $0x250] sm:$0xff] %vm1843, %v4806
      %4883 = vst.msk [vmem:[%s273 + $0x258] sm:$0xff] %vm1843, %v4807
      %s4884 = smul.u32 76, %s16
      %p4885 = scmp.lt.s32.totalorder %s4884, 227
      %s4886 = scalar_select %p4885, %s4884, 227
      %s4887 = smul.addr %s4886, 8
      %s4888 = scalar_lea.vmem %s5, %s4887
      // Predicated region
      $region41: #{fused_add_conv1x1_bn.1} parent=39 // pred_check
        %p4889 = pneg %p154
      $region42: #{fused_add_conv1x1_bn.1} parent=39 // pred_check_branch
        %4891 = sbr.rel (%p4889) target = $region44
      $region43: #{fused_add_conv1x1_bn.1} parent=39 // pred_region
        %s4892 = smul.u32 76, %s16
      $region44: #{fused_add_conv1x1_bn.1} parent=39 // pred_fallthru
        _
    $region40: #{fused_add_conv1x1_bn.1} parent=5 // pred_fallthru
      _
    %p4893 = scmp.le.s32.totalorder 2, %s11
    // Predicated region
    $region45: #{fused_add_conv1x1_bn.1} parent=5 // pred_check
      %p4894 = pneg %p4893
    $region46: #{fused_add_conv1x1_bn.1} parent=5 // pred_check_branch
      %4896 = sbr.rel (%p4894) target = $region48
    $region47: #{fused_add_conv1x1_bn.1} parent=5 // pred_region
      %s4897 = ssub.s32 %s11, 2
      // Predicated region
      $region49: #{fused_add_conv1x1_bn.1} parent=47 // pred_check
        %p4898 = pneg %p160
      $region50: #{fused_add_conv1x1_bn.1} parent=47 // pred_check_branch
        %4900 = sbr.rel (%p4898) target = $region52
      $region51: #{fused_add_conv1x1_bn.1} parent=47 // pred_region
        %s4901 = smul.u32 76, %s17
        %p4902 = scmp.lt.s32.totalorder %s4901, 227
        %s4903 = scalar_select %p4902, %s4901, 227
        %s4904 = smul.addr %s4903, 8
        %s4905 = scalar_lea.vmem %s5, %s4904
      $region52: #{fused_add_conv1x1_bn.1} parent=47 // pred_fallthru
        _
    $region48: #{fused_add_conv1x1_bn.1} parent=5 // pred_fallthru
      _
  $region6: #{fused_add_conv1x1_bn.1} parent=0 // loop_footer
    %s15 = sadd.s32 1, %s11
  $region7: #{fused_add_conv1x1_bn.1} parent=0 // loop_footer_branch
    %10 = sbr.rel target = $region3
  $region8: #{fused_add_conv1x1_bn.1} parent=0 // loop_exit
    _

</llo_original>
